<compile_context>
chip_gen: v7x
topology: tpu7x:2x2x1
jax: 0.10.0
libtpu: 0.0.40
codegen_flags: <defaults>
</compile_context>

<pallas_src>
import jax
import jax.numpy as jnp
from jax.experimental import pallas as pl
from jax.experimental.pallas import tpu as pltpu

INPUT_DIM = 10
NUM_CLASSES = 2
D_MODEL = 128
NHEAD = 4
HEAD_DIM = D_MODEL // NHEAD
DIM_FF = 2048          # PyTorch TransformerEncoderLayer default dim_feedforward
HIDDEN_CLS = 32
CLS_HID_PAD = 128      # lane-padded classifier hidden width
CLS_OUT_PAD = 128      # lane-padded classifier output width
LN_EPS = 1e-5


def _layernorm(x, g, b):
    mu = jnp.mean(x, axis=-1, keepdims=True)
    xc = x - mu
    var = jnp.mean(xc * xc, axis=-1, keepdims=True)
    return xc * jax.lax.rsqrt(var + LN_EPS) * g + b


def _ft_kernel(x_ref,
               wtok_ref, btok_ref,
               wvo_ref, bvo_ref,
               g1_ref, be1_ref,
               w1_ref, c1_ref, w2_ref, c2_ref,
               g2_ref, be2_ref,
               wc1_ref, bc1_ref, wc2_ref, bc2_ref,
               o_ref):
    f32 = jnp.float32
    bf16 = jnp.bfloat16
    x = x_ref[...]                                                   # (TB, 10)

    # feature_tokenizer: Linear(input_dim -> d_model); dropout1 = identity (eval)
    h = jnp.dot(x, wtok_ref[...], preferred_element_type=f32) + btok_ref[...]

    # ---- TransformerEncoderLayer (post-norm, batch_first), seq_len == 1 ----
    # softmax over a single key position is exactly 1.0 for every head, so MHA
    # reduces to out_proj(v_proj(h)); W_q/W_k/b_q/b_k cancel.  W_vo/b_vo are
    # pre-fused in the wrapper (valid ONLY because seq_len == 1).
    sa = jnp.dot(h, wvo_ref[...], preferred_element_type=f32) + bvo_ref[...]
    h1 = _layernorm(h + sa, g1_ref[...], be1_ref[...])

    # feed-forward: Linear(128 -> 2048) -> ReLU -> Linear(2048 -> 128)
    # bf16 MXU inputs, f32 accumulation; elementwise work stays f32.
    ff = jnp.dot(h1.astype(bf16), w1_ref[...],
                 preferred_element_type=f32) + c1_ref[...]
    ff = jnp.maximum(ff, 0.0)
    ff = jnp.dot(ff.astype(bf16), w2_ref[...],
                 preferred_element_type=f32) + c2_ref[...]
    h2 = _layernorm(h1 + ff, g2_ref[...], be2_ref[...])

    # x.mean(dim=1) over a length-1 sequence is the identity.
    # classifier: Linear(128 -> 32) -> ReLU -> Dropout(identity) -> Linear(32 -> 2)
    # (weights lane-padded to 128 in the wrapper; padded columns are exact zeros)
    z = jnp.maximum(
        jnp.dot(h2, wc1_ref[...], preferred_element_type=f32) + bc1_ref[...], 0.0)
    o_ref[...] = jnp.dot(z, wc2_ref[...], preferred_element_type=f32) + bc2_ref[...]


def _prepare_weights(p):
    """Fuse / pad / cast the PyTorch-shaped parameters for the kernel."""
    f32 = jnp.float32
    bf16 = jnp.bfloat16
    # Fuse V-projection and output-projection (exact for seq_len == 1).
    w_vo = (p["w_v"] @ p["w_o"]).astype(f32)
    b_vo = (p["b_v"] @ p["w_o"] + p["b_o"]).astype(f32)
    # Lane-pad the classifier head to 128-wide tiles (zero padding is exact:
    # relu(0 + 0) = 0 and zero rows of w_c2 contribute nothing).
    w_c1p = jnp.zeros((D_MODEL, CLS_HID_PAD), f32).at[:, :HIDDEN_CLS].set(p["w_c1"])
    b_c1p = jnp.zeros((1, CLS_HID_PAD), f32).at[:, :HIDDEN_CLS].set(p["b_c1"])
    w_c2p = jnp.zeros((CLS_HID_PAD, CLS_OUT_PAD), f32).at[:HIDDEN_CLS, :NUM_CLASSES].set(p["w_c2"])
    b_c2p = jnp.zeros((1, CLS_OUT_PAD), f32).at[:, :NUM_CLASSES].set(p["b_c2"])
    return [
        p["w_tok"].astype(f32), p["b_tok"].astype(f32),
        w_vo, b_vo,
        p["ln1_g"].astype(f32), p["ln1_b"].astype(f32),
        p["w_ff1"].astype(bf16), p["b_ff1"].astype(f32),
        p["w_ff2"].astype(bf16), p["b_ff2"].astype(f32),
        p["ln2_g"].astype(f32), p["ln2_b"].astype(f32),
        w_c1p, b_c1p, w_c2p, b_c2p,
    ]


def ft_transformer_forward(x, params, *, tb=128):
    """Fused forward pass.  `tb` = batch tile (multiple of 8; 256 ideal on v6e/v7x)."""
    assert tb % 8 == 0, "batch tile must be a sublane multiple"
    B = x.shape[0]
    assert x.shape[1] == INPUT_DIM
    # seq_len is always 1 (the module unsqueezes dim=1), which is what makes the
    # q/k cancellation and the W_v @ W_o fusion exact.

    weights = _prepare_weights(params)

    # Pad ragged batches up to a multiple of the tile; slice back at the end.
    b_pad = ((B + tb - 1) // tb) * tb
    if b_pad != B:
        x = jnp.pad(x, ((0, b_pad - B), (0, 0)))

    in_specs = [pl.BlockSpec((tb, INPUT_DIM), lambda i: (i, 0))]
    for w in weights:  # whole (small) weight resident in VMEM for every tile
        in_specs.append(pl.BlockSpec(w.shape, lambda i: (0, 0)))

    weight_bytes = sum(int(w.size) * w.dtype.itemsize for w in weights)
    flops = 2 * b_pad * (INPUT_DIM * D_MODEL + D_MODEL * D_MODEL
                         + 2 * D_MODEL * DIM_FF
                         + D_MODEL * CLS_HID_PAD + CLS_HID_PAD * CLS_OUT_PAD)
    cost = pl.CostEstimate(
        flops=int(flops),
        transcendentals=int(2 * b_pad),  # one rsqrt per row per layernorm
        bytes_accessed=int(b_pad * INPUT_DIM * 4 + b_pad * CLS_OUT_PAD * 4
                           + weight_bytes),
    )

    out = pl.pallas_call(
        _ft_kernel,
        out_shape=jax.ShapeDtypeStruct((b_pad, CLS_OUT_PAD), jnp.float32),
        grid_spec=pltpu.PrefetchScalarGridSpec(
            num_scalar_prefetch=0,
            grid=(b_pad // tb,),
            in_specs=in_specs,
            out_specs=pl.BlockSpec((tb, CLS_OUT_PAD), lambda i: (i, 0)),
        ),
        compiler_params=pltpu.CompilerParams(
            dimension_semantics=("parallel",),   # >=2 tiles shard across v7x TCs
            vmem_limit_bytes=48 * 1024 * 1024),  # headroom on v7x's 64 MiB VMEM
        cost_estimate=cost,
    )(x, *weights)

    return out[:B, :NUM_CLASSES]


def init_params(key):
    """Deterministic synthetic parameters (shapes match the PyTorch module)."""
    ks = jax.random.split(key, 24)

    def w(k, shape, scale=0.05):
        return scale * jax.random.normal(k, shape, jnp.float32)

    return {
        # feature_tokenizer
        "w_tok": w(ks[0], (INPUT_DIM, D_MODEL)), "b_tok": w(ks[1], (1, D_MODEL)),
        # self_attn in-proj (q/k used only by the full-attention reference)
        "w_q": w(ks[2], (D_MODEL, D_MODEL)), "b_q": w(ks[3], (1, D_MODEL)),
        "w_k": w(ks[4], (D_MODEL, D_MODEL)), "b_k": w(ks[5], (1, D_MODEL)),
        "w_v": w(ks[6], (D_MODEL, D_MODEL)), "b_v": w(ks[7], (1, D_MODEL)),
        "w_o": w(ks[8], (D_MODEL, D_MODEL)), "b_o": w(ks[9], (1, D_MODEL)),
        # layer norms
        "ln1_g": 1.0 + w(ks[10], (1, D_MODEL)), "ln1_b": w(ks[11], (1, D_MODEL)),
        "ln2_g": 1.0 + w(ks[12], (1, D_MODEL)), "ln2_b": w(ks[13], (1, D_MODEL)),
        # feed-forward
        "w_ff1": w(ks[14], (D_MODEL, DIM_FF)), "b_ff1": w(ks[15], (1, DIM_FF)),
        "w_ff2": w(ks[16], (DIM_FF, D_MODEL)), "b_ff2": w(ks[17], (1, D_MODEL)),
        # classifier head
        "w_c1": w(ks[18], (D_MODEL, HIDDEN_CLS)), "b_c1": w(ks[19], (1, HIDDEN_CLS)),
        "w_c2": w(ks[20], (HIDDEN_CLS, NUM_CLASSES)), "b_c2": w(ks[21], (1, NUM_CLASSES)),
    }


def reference_forward(x, p):
    """Pure-JAX f32 reference with the FULL multi-head attention math (seq_len=1)."""
    h = x @ p["w_tok"] + p["b_tok"]
    B = h.shape[0]
    q = (h @ p["w_q"] + p["b_q"]).reshape(B, NHEAD, HEAD_DIM)
    k = (h @ p["w_k"] + p["b_k"]).reshape(B, NHEAD, HEAD_DIM)
    v = (h @ p["w_v"] + p["b_v"]).reshape(B, NHEAD, HEAD_DIM)
    scores = jnp.sum(q * k, axis=-1, keepdims=True) / jnp.sqrt(float(HEAD_DIM))
    attn_w = jax.nn.softmax(scores[..., None], axis=-1)[..., 0]       # == 1.0 (seq=1)
    attn = (attn_w * v).reshape(B, D_MODEL)
    sa = attn @ p["w_o"] + p["b_o"]
    h1 = _layernorm(h + sa, p["ln1_g"], p["ln1_b"])
    ff = jnp.maximum(h1 @ p["w_ff1"] + p["b_ff1"], 0.0) @ p["w_ff2"] + p["b_ff2"]
    h2 = _layernorm(h1 + ff, p["ln2_g"], p["ln2_b"])
    z = jnp.maximum(h2 @ p["w_c1"] + p["b_c1"], 0.0)
    return z @ p["w_c2"] + p["b_c2"]


if __name__ == "__main__":
    key = jax.random.PRNGKey(0)
    k_x, k_p = jax.random.split(key)
    B = 8
    x = jax.random.normal(k_x, (B, INPUT_DIM), jnp.float32)
    params = init_params(k_p)

    out = jax.block_until_ready(ft_transformer_forward(x, params, tb=128))
    ref = jax.block_until_ready(reference_forward(x, params))

    assert out.shape == (B, NUM_CLASSES), out.shape
    # Tolerance loosened vs the pure-f32 version because the two FF matmuls use
    # bf16 inputs (f32 accumulation); observed error is ~1e-3 absolute.
    if not jnp.allclose(out, ref, atol=2e-2, rtol=2e-2):
        raise AssertionError(
            f"mismatch: max abs err={float(jnp.max(jnp.abs(out - ref)))}")
    print("KERNEL_OK")
</pallas_src>

<mosaic_0001>
module attributes {stable_mosaic.version = 11 : i64} {
  func.func @_ft_kernel(%arg0: i32, %arg1: memref<128x10xf32, #tpu.memory_space<vmem>>, %arg2: memref<10x128xf32, #tpu.memory_space<vmem>>, %arg3: memref<1x128xf32, #tpu.memory_space<vmem>>, %arg4: memref<128x128xf32, #tpu.memory_space<vmem>>, %arg5: memref<1x128xf32, #tpu.memory_space<vmem>>, %arg6: memref<1x128xf32, #tpu.memory_space<vmem>>, %arg7: memref<1x128xf32, #tpu.memory_space<vmem>>, %arg8: memref<128x2048xbf16, #tpu.memory_space<vmem>>, %arg9: memref<1x2048xf32, #tpu.memory_space<vmem>>, %arg10: memref<2048x128xbf16, #tpu.memory_space<vmem>>, %arg11: memref<1x128xf32, #tpu.memory_space<vmem>>, %arg12: memref<1x128xf32, #tpu.memory_space<vmem>>, %arg13: memref<1x128xf32, #tpu.memory_space<vmem>>, %arg14: memref<128x128xf32, #tpu.memory_space<vmem>>, %arg15: memref<1x128xf32, #tpu.memory_space<vmem>>, %arg16: memref<128x128xf32, #tpu.memory_space<vmem>>, %arg17: memref<1x128xf32, #tpu.memory_space<vmem>>, %arg18: memref<128x128xf32, #tpu.memory_space<vmem>>) attributes {dimension_semantics = [#tpu.dimension_semantics<parallel>], iteration_bounds = array<i64: 1>, scalar_prefetch = 0 : i64, scratch_operands = 0 : i64, tpu.core_type = #tpu.core_type<tc>, window_params = [{transform_indices = @transform_0, window_bounds = array<i64: 128, 10>}, {pipeline_mode = #tpu.pipeline_mode<synchronous>, transform_indices = @transform_1, window_bounds = array<i64: 10, 128>}, {pipeline_mode = #tpu.pipeline_mode<synchronous>, transform_indices = @transform_2, window_bounds = array<i64: 1, 128>}, {pipeline_mode = #tpu.pipeline_mode<synchronous>, transform_indices = @transform_3, window_bounds = array<i64: 128, 128>}, {pipeline_mode = #tpu.pipeline_mode<synchronous>, transform_indices = @transform_4, window_bounds = array<i64: 1, 128>}, {pipeline_mode = #tpu.pipeline_mode<synchronous>, transform_indices = @transform_5, window_bounds = array<i64: 1, 128>}, {pipeline_mode = #tpu.pipeline_mode<synchronous>, transform_indices = @transform_6, window_bounds = array<i64: 1, 128>}, {pipeline_mode = #tpu.pipeline_mode<synchronous>, transform_indices = @transform_7, window_bounds = array<i64: 128, 2048>}, {pipeline_mode = #tpu.pipeline_mode<synchronous>, transform_indices = @transform_8, window_bounds = array<i64: 1, 2048>}, {pipeline_mode = #tpu.pipeline_mode<synchronous>, transform_indices = @transform_9, window_bounds = array<i64: 2048, 128>}, {pipeline_mode = #tpu.pipeline_mode<synchronous>, transform_indices = @transform_10, window_bounds = array<i64: 1, 128>}, {pipeline_mode = #tpu.pipeline_mode<synchronous>, transform_indices = @transform_11, window_bounds = array<i64: 1, 128>}, {pipeline_mode = #tpu.pipeline_mode<synchronous>, transform_indices = @transform_12, window_bounds = array<i64: 1, 128>}, {pipeline_mode = #tpu.pipeline_mode<synchronous>, transform_indices = @transform_13, window_bounds = array<i64: 128, 128>}, {pipeline_mode = #tpu.pipeline_mode<synchronous>, transform_indices = @transform_14, window_bounds = array<i64: 1, 128>}, {pipeline_mode = #tpu.pipeline_mode<synchronous>, transform_indices = @transform_15, window_bounds = array<i64: 128, 128>}, {pipeline_mode = #tpu.pipeline_mode<synchronous>, transform_indices = @transform_16, window_bounds = array<i64: 1, 128>}, {transform_indices = @transform_17, window_bounds = array<i64: 128, 128>}]} {
    %c0 = arith.constant 0 : index
    %c0_0 = arith.constant 0 : index
    %0 = vector.load %arg1[%c0, %c0_0] : memref<128x10xf32, #tpu.memory_space<vmem>>, vector<128x10xf32>
    %c0_1 = arith.constant 0 : index
    %c0_2 = arith.constant 0 : index
    %1 = vector.load %arg2[%c0_1, %c0_2] : memref<10x128xf32, #tpu.memory_space<vmem>>, vector<10x128xf32>
    %cst = arith.constant dense<0.000000e+00> : vector<128x128xf32>
    %2 = tpu.matmul %0, %1, %cst {dimension_numbers = #tpu.dot_dimension_numbers<[1], [0], [0], [1], [0, 0, 1, 1], [], []>} : vector<128x10xf32>, vector<10x128xf32>, vector<128x128xf32> -> vector<128x128xf32>
    %c0_3 = arith.constant 0 : index
    %c0_4 = arith.constant 0 : index
    %3 = vector.load %arg3[%c0_3, %c0_4] : memref<1x128xf32, #tpu.memory_space<vmem>>, vector<1x128xf32>
    %4 = vector.broadcast %3 : vector<1x128xf32> to vector<128x128xf32>
    %5 = arith.addf %2, %4 : vector<128x128xf32>
    %c0_5 = arith.constant 0 : index
    %c0_6 = arith.constant 0 : index
    %6 = vector.load %arg4[%c0_5, %c0_6] : memref<128x128xf32, #tpu.memory_space<vmem>>, vector<128x128xf32>
    %cst_7 = arith.constant dense<0.000000e+00> : vector<128x128xf32>
    %7 = tpu.matmul %5, %6, %cst_7 {dimension_numbers = #tpu.dot_dimension_numbers<[1], [0], [0], [1], [0, 0, 1, 1], [], []>} : vector<128x128xf32>, vector<128x128xf32>, vector<128x128xf32> -> vector<128x128xf32>
    %c0_8 = arith.constant 0 : index
    %c0_9 = arith.constant 0 : index
    %8 = vector.load %arg5[%c0_8, %c0_9] : memref<1x128xf32, #tpu.memory_space<vmem>>, vector<1x128xf32>
    %9 = vector.broadcast %8 : vector<1x128xf32> to vector<128x128xf32>
    %10 = arith.addf %7, %9 : vector<128x128xf32>
    %11 = arith.addf %5, %10 : vector<128x128xf32>
    %c0_10 = arith.constant 0 : index
    %c0_11 = arith.constant 0 : index
    %12 = vector.load %arg6[%c0_10, %c0_11] : memref<1x128xf32, #tpu.memory_space<vmem>>, vector<1x128xf32>
    %c0_12 = arith.constant 0 : index
    %c0_13 = arith.constant 0 : index
    %13 = vector.load %arg7[%c0_12, %c0_13] : memref<1x128xf32, #tpu.memory_space<vmem>>, vector<1x128xf32>
    %cst_14 = arith.constant dense<0.000000e+00> : vector<128xf32>
    %14 = vector.multi_reduction <add>, %11, %cst_14 [1] : vector<128x128xf32> to vector<128xf32>
    %15 = vector.shape_cast %14 : vector<128xf32> to vector<128x1xf32>
    %cst_15 = arith.constant 1.280000e+02 : f32
    %16 = vector.broadcast %cst_15 : f32 to vector<128x1xf32>
    %17 = arith.divf %15, %16 : vector<128x1xf32>
    %18 = vector.broadcast %17 : vector<128x1xf32> to vector<128x128xf32>
    %19 = arith.subf %11, %18 : vector<128x128xf32>
    %20 = arith.mulf %19, %19 : vector<128x128xf32>
    %cst_16 = arith.constant dense<0.000000e+00> : vector<128xf32>
    %21 = vector.multi_reduction <add>, %20, %cst_16 [1] : vector<128x128xf32> to vector<128xf32>
    %22 = vector.shape_cast %21 : vector<128xf32> to vector<128x1xf32>
    %cst_17 = arith.constant 1.280000e+02 : f32
    %23 = vector.broadcast %cst_17 : f32 to vector<128x1xf32>
    %24 = arith.divf %22, %23 : vector<128x1xf32>
    %cst_18 = arith.constant 9.99999974E-6 : f32
    %25 = vector.broadcast %cst_18 : f32 to vector<128x1xf32>
    %26 = arith.addf %24, %25 : vector<128x1xf32>
    %27 = math.rsqrt %26 : vector<128x1xf32>
    %28 = vector.broadcast %27 : vector<128x1xf32> to vector<128x128xf32>
    %29 = arith.mulf %19, %28 : vector<128x128xf32>
    %30 = vector.broadcast %12 : vector<1x128xf32> to vector<128x128xf32>
    %31 = arith.mulf %29, %30 : vector<128x128xf32>
    %32 = vector.broadcast %13 : vector<1x128xf32> to vector<128x128xf32>
    %33 = arith.addf %31, %32 : vector<128x128xf32>
    %34 = arith.truncf %33 : vector<128x128xf32> to vector<128x128xbf16>
    %c0_19 = arith.constant 0 : index
    %c0_20 = arith.constant 0 : index
    %35 = vector.load %arg8[%c0_19, %c0_20] : memref<128x2048xbf16, #tpu.memory_space<vmem>>, vector<128x2048xbf16>
    %cst_21 = arith.constant dense<0.000000e+00> : vector<128x2048xf32>
    %36 = tpu.matmul %34, %35, %cst_21 {dimension_numbers = #tpu.dot_dimension_numbers<[1], [0], [0], [1], [0, 0, 1, 1], [], []>} : vector<128x128xbf16>, vector<128x2048xbf16>, vector<128x2048xf32> -> vector<128x2048xf32>
    %c0_22 = arith.constant 0 : index
    %c0_23 = arith.constant 0 : index
    %37 = vector.load %arg9[%c0_22, %c0_23] : memref<1x2048xf32, #tpu.memory_space<vmem>>, vector<1x2048xf32>
    %38 = vector.broadcast %37 : vector<1x2048xf32> to vector<128x2048xf32>
    %39 = arith.addf %36, %38 : vector<128x2048xf32>
    %cst_24 = arith.constant 0.000000e+00 : f32
    %40 = vector.broadcast %cst_24 : f32 to vector<128x2048xf32>
    %41 = arith.maximumf %39, %40 : vector<128x2048xf32>
    %42 = arith.truncf %41 : vector<128x2048xf32> to vector<128x2048xbf16>
    %c0_25 = arith.constant 0 : index
    %c0_26 = arith.constant 0 : index
    %43 = vector.load %arg10[%c0_25, %c0_26] : memref<2048x128xbf16, #tpu.memory_space<vmem>>, vector<2048x128xbf16>
    %cst_27 = arith.constant dense<0.000000e+00> : vector<128x128xf32>
    %44 = tpu.matmul %42, %43, %cst_27 {dimension_numbers = #tpu.dot_dimension_numbers<[1], [0], [0], [1], [0, 0, 1, 1], [], []>} : vector<128x2048xbf16>, vector<2048x128xbf16>, vector<128x128xf32> -> vector<128x128xf32>
    %c0_28 = arith.constant 0 : index
    %c0_29 = arith.constant 0 : index
    %45 = vector.load %arg11[%c0_28, %c0_29] : memref<1x128xf32, #tpu.memory_space<vmem>>, vector<1x128xf32>
    %46 = vector.broadcast %45 : vector<1x128xf32> to vector<128x128xf32>
    %47 = arith.addf %44, %46 : vector<128x128xf32>
    %48 = arith.addf %33, %47 : vector<128x128xf32>
    %c0_30 = arith.constant 0 : index
    %c0_31 = arith.constant 0 : index
    %49 = vector.load %arg12[%c0_30, %c0_31] : memref<1x128xf32, #tpu.memory_space<vmem>>, vector<1x128xf32>
    %c0_32 = arith.constant 0 : index
    %c0_33 = arith.constant 0 : index
    %50 = vector.load %arg13[%c0_32, %c0_33] : memref<1x128xf32, #tpu.memory_space<vmem>>, vector<1x128xf32>
    %cst_34 = arith.constant dense<0.000000e+00> : vector<128xf32>
    %51 = vector.multi_reduction <add>, %48, %cst_34 [1] : vector<128x128xf32> to vector<128xf32>
    %52 = vector.shape_cast %51 : vector<128xf32> to vector<128x1xf32>
    %cst_35 = arith.constant 1.280000e+02 : f32
    %53 = vector.broadcast %cst_35 : f32 to vector<128x1xf32>
    %54 = arith.divf %52, %53 : vector<128x1xf32>
    %55 = vector.broadcast %54 : vector<128x1xf32> to vector<128x128xf32>
    %56 = arith.subf %48, %55 : vector<128x128xf32>
    %57 = arith.mulf %56, %56 : vector<128x128xf32>
    %cst_36 = arith.constant dense<0.000000e+00> : vector<128xf32>
    %58 = vector.multi_reduction <add>, %57, %cst_36 [1] : vector<128x128xf32> to vector<128xf32>
    %59 = vector.shape_cast %58 : vector<128xf32> to vector<128x1xf32>
    %cst_37 = arith.constant 1.280000e+02 : f32
    %60 = vector.broadcast %cst_37 : f32 to vector<128x1xf32>
    %61 = arith.divf %59, %60 : vector<128x1xf32>
    %cst_38 = arith.constant 9.99999974E-6 : f32
    %62 = vector.broadcast %cst_38 : f32 to vector<128x1xf32>
    %63 = arith.addf %61, %62 : vector<128x1xf32>
    %64 = math.rsqrt %63 : vector<128x1xf32>
    %65 = vector.broadcast %64 : vector<128x1xf32> to vector<128x128xf32>
    %66 = arith.mulf %56, %65 : vector<128x128xf32>
    %67 = vector.broadcast %49 : vector<1x128xf32> to vector<128x128xf32>
    %68 = arith.mulf %66, %67 : vector<128x128xf32>
    %69 = vector.broadcast %50 : vector<1x128xf32> to vector<128x128xf32>
    %70 = arith.addf %68, %69 : vector<128x128xf32>
    %c0_39 = arith.constant 0 : index
    %c0_40 = arith.constant 0 : index
    %71 = vector.load %arg14[%c0_39, %c0_40] : memref<128x128xf32, #tpu.memory_space<vmem>>, vector<128x128xf32>
    %cst_41 = arith.constant dense<0.000000e+00> : vector<128x128xf32>
    %72 = tpu.matmul %70, %71, %cst_41 {dimension_numbers = #tpu.dot_dimension_numbers<[1], [0], [0], [1], [0, 0, 1, 1], [], []>} : vector<128x128xf32>, vector<128x128xf32>, vector<128x128xf32> -> vector<128x128xf32>
    %c0_42 = arith.constant 0 : index
    %c0_43 = arith.constant 0 : index
    %73 = vector.load %arg15[%c0_42, %c0_43] : memref<1x128xf32, #tpu.memory_space<vmem>>, vector<1x128xf32>
    %74 = vector.broadcast %73 : vector<1x128xf32> to vector<128x128xf32>
    %75 = arith.addf %72, %74 : vector<128x128xf32>
    %cst_44 = arith.constant 0.000000e+00 : f32
    %76 = vector.broadcast %cst_44 : f32 to vector<128x128xf32>
    %77 = arith.maximumf %75, %76 : vector<128x128xf32>
    %c0_45 = arith.constant 0 : index
    %c0_46 = arith.constant 0 : index
    %78 = vector.load %arg16[%c0_45, %c0_46] : memref<128x128xf32, #tpu.memory_space<vmem>>, vector<128x128xf32>
    %cst_47 = arith.constant dense<0.000000e+00> : vector<128x128xf32>
    %79 = tpu.matmul %77, %78, %cst_47 {dimension_numbers = #tpu.dot_dimension_numbers<[1], [0], [0], [1], [0, 0, 1, 1], [], []>} : vector<128x128xf32>, vector<128x128xf32>, vector<128x128xf32> -> vector<128x128xf32>
    %c0_48 = arith.constant 0 : index
    %c0_49 = arith.constant 0 : index
    %80 = vector.load %arg17[%c0_48, %c0_49] : memref<1x128xf32, #tpu.memory_space<vmem>>, vector<1x128xf32>
    %81 = vector.broadcast %80 : vector<1x128xf32> to vector<128x128xf32>
    %82 = arith.addf %79, %81 : vector<128x128xf32>
    %c0_50 = arith.constant 0 : index
    %c0_51 = arith.constant 0 : index
    %83 = vector.load %arg18[%c0_50, %c0_51] : memref<128x128xf32, #tpu.memory_space<vmem>>, vector<128x128xf32>
    tpu.vector_store %arg18[%c0_50, %c0_51], %82 {strides = array<i32>} : memref<128x128xf32, #tpu.memory_space<vmem>>, vector<128x128xf32>,
    return
  }
  func.func @transform_0(%arg0: i32) -> (i32, i32) {
    %c0_i32 = arith.constant 0 : i32
    %c0_i32_0 = arith.constant 0 : i32
    return %arg0, %c0_i32 : i32, i32
  }
  func.func @transform_1(%arg0: i32) -> (i32, i32) {
    %c0_i32 = arith.constant 0 : i32
    %c0_i32_0 = arith.constant 0 : i32
    %c0_i32_1 = arith.constant 0 : i32
    return %c0_i32, %c0_i32_0 : i32, i32
  }
  func.func @transform_2(%arg0: i32) -> (i32, i32) {
    %c0_i32 = arith.constant 0 : i32
    %c0_i32_0 = arith.constant 0 : i32
    %c0_i32_1 = arith.constant 0 : i32
    return %c0_i32, %c0_i32_0 : i32, i32
  }
  func.func @transform_3(%arg0: i32) -> (i32, i32) {
    %c0_i32 = arith.constant 0 : i32
    %c0_i32_0 = arith.constant 0 : i32
    %c0_i32_1 = arith.constant 0 : i32
    return %c0_i32, %c0_i32_0 : i32, i32
  }
  func.func @transform_4(%arg0: i32) -> (i32, i32) {
    %c0_i32 = arith.constant 0 : i32
    %c0_i32_0 = arith.constant 0 : i32
    %c0_i32_1 = arith.constant 0 : i32
    return %c0_i32, %c0_i32_0 : i32, i32
  }
  func.func @transform_5(%arg0: i32) -> (i32, i32) {
    %c0_i32 = arith.constant 0 : i32
    %c0_i32_0 = arith.constant 0 : i32
    %c0_i32_1 = arith.constant 0 : i32
    return %c0_i32, %c0_i32_0 : i32, i32
  }
  func.func @transform_6(%arg0: i32) -> (i32, i32) {
    %c0_i32 = arith.constant 0 : i32
    %c0_i32_0 = arith.constant 0 : i32
    %c0_i32_1 = arith.constant 0 : i32
    return %c0_i32, %c0_i32_0 : i32, i32
  }
  func.func @transform_7(%arg0: i32) -> (i32, i32) {
    %c0_i32 = arith.constant 0 : i32
    %c0_i32_0 = arith.constant 0 : i32
    %c0_i32_1 = arith.constant 0 : i32
    return %c0_i32, %c0_i32_0 : i32, i32
  }
  func.func @transform_8(%arg0: i32) -> (i32, i32) {
    %c0_i32 = arith.constant 0 : i32
    %c0_i32_0 = arith.constant 0 : i32
    %c0_i32_1 = arith.constant 0 : i32
    return %c0_i32, %c0_i32_0 : i32, i32
  }
  func.func @transform_9(%arg0: i32) -> (i32, i32) {
    %c0_i32 = arith.constant 0 : i32
    %c0_i32_0 = arith.constant 0 : i32
    %c0_i32_1 = arith.constant 0 : i32
    return %c0_i32, %c0_i32_0 : i32, i32
  }
  func.func @transform_10(%arg0: i32) -> (i32, i32) {
    %c0_i32 = arith.constant 0 : i32
    %c0_i32_0 = arith.constant 0 : i32
    %c0_i32_1 = arith.constant 0 : i32
    return %c0_i32, %c0_i32_0 : i32, i32
  }
  func.func @transform_11(%arg0: i32) -> (i32, i32) {
    %c0_i32 = arith.constant 0 : i32
    %c0_i32_0 = arith.constant 0 : i32
    %c0_i32_1 = arith.constant 0 : i32
    return %c0_i32, %c0_i32_0 : i32, i32
  }
  func.func @transform_12(%arg0: i32) -> (i32, i32) {
    %c0_i32 = arith.constant 0 : i32
    %c0_i32_0 = arith.constant 0 : i32
    %c0_i32_1 = arith.constant 0 : i32
    return %c0_i32, %c0_i32_0 : i32, i32
  }
  func.func @transform_13(%arg0: i32) -> (i32, i32) {
    %c0_i32 = arith.constant 0 : i32
    %c0_i32_0 = arith.constant 0 : i32
    %c0_i32_1 = arith.constant 0 : i32
    return %c0_i32, %c0_i32_0 : i32, i32
  }
  func.func @transform_14(%arg0: i32) -> (i32, i32) {
    %c0_i32 = arith.constant 0 : i32
    %c0_i32_0 = arith.constant 0 : i32
    %c0_i32_1 = arith.constant 0 : i32
    return %c0_i32, %c0_i32_0 : i32, i32
  }
  func.func @transform_15(%arg0: i32) -> (i32, i32) {
    %c0_i32 = arith.constant 0 : i32
    %c0_i32_0 = arith.constant 0 : i32
    %c0_i32_1 = arith.constant 0 : i32
    return %c0_i32, %c0_i32_0 : i32, i32
  }
  func.func @transform_16(%arg0: i32) -> (i32, i32) {
    %c0_i32 = arith.constant 0 : i32
    %c0_i32_0 = arith.constant 0 : i32
    %c0_i32_1 = arith.constant 0 : i32
    return %c0_i32, %c0_i32_0 : i32, i32
  }
  func.func @transform_17(%arg0: i32) -> (i32, i32) {
    %c0_i32 = arith.constant 0 : i32
    %c0_i32_0 = arith.constant 0 : i32
    return %arg0, %c0_i32 : i32, i32
  }
}

</mosaic_0001>

<llo_original>
// kernel: tpu_custom_call.1
$region0: #{tpu_custom_call.1}
  #allocation0 [shape = 'u32[]', space=smem, size = 0x4, offset = 0x4, fixed_abs, tag = 'smem constant byte address 0x4 - core index']
  #allocation1 [shape = 'u32[144,128]{1,0:T(1,128)}', space=vmem, size = 0x12000, scoped, tag = 'internal scratch']
  %s0 = inlined_call_operand.vmem [shape: f32[128,10], index: 0, kind: input, shape index: {}]
  %s1 = inlined_call_operand.vmem [shape: f32[10,128], index: 1, kind: input, shape index: {}]
  %s2 = inlined_call_operand.vmem [shape: f32[1,128], index: 2, kind: input, shape index: {}]
  %s3 = inlined_call_operand.vmem [shape: f32[128,128], index: 3, kind: input, shape index: {}]
  %s4 = inlined_call_operand.vmem [shape: f32[1,128], index: 4, kind: input, shape index: {}]
  %s5 = inlined_call_operand.hbm [shape: f32[1,128], index: 5, kind: input, shape index: {}]
  %s6 = inlined_call_operand.vmem [shape: f32[1,128], index: 6, kind: input, shape index: {}]
  %s7 = inlined_call_operand.hbm [shape: bf16[128,2048], index: 7, kind: input, shape index: {}]
  %s8 = inlined_call_operand.vmem [shape: f32[1,2048], index: 8, kind: input, shape index: {}]
  %s9 = inlined_call_operand.hbm [shape: bf16[2048,128], index: 9, kind: input, shape index: {}]
  %s10 = inlined_call_operand.vmem [shape: f32[1,128], index: 10, kind: input, shape index: {}]
  %s11 = inlined_call_operand.vmem [shape: f32[1,128], index: 11, kind: input, shape index: {}]
  %s12 = inlined_call_operand.vmem [shape: f32[1,128], index: 12, kind: input, shape index: {}]
  %s13 = inlined_call_operand.hbm [shape: f32[128,128], index: 13, kind: input, shape index: {}]
  %s14 = inlined_call_operand.vmem [shape: f32[1,128], index: 14, kind: input, shape index: {}]
  %s15 = inlined_call_operand.hbm [shape: f32[128,128], index: 15, kind: input, shape index: {}]
  %s16 = inlined_call_operand.vmem [shape: f32[1,128], index: 16, kind: input, shape index: {}]
  %s17 = inlined_call_operand.hbm [shape: f32[128,128], index: 17, kind: output, shape index: {}]
  %s18 = sld [smem:[#allocation0]]
  $region98: #{tpu_custom_call.1} parent=0
    _
  %s20 = ssub.s32 1, %s18
  %s21 = scalar_select 0, %s20, %s18
  $region1: #{tpu_custom_call.1} parent=0
    #allocation2 [shape = 'u8[512]{0}', space=vmem, size = 0x400, scoped, tag = 'input window, operand 5, single buffered']
    #allocation3 [shape = 's32[1]{0}', space=sflag, size = 0x4, scoped, tag = 'scoped memory for tpu_custom_call.1']
    #allocation4 [shape = 's32[1]{0}', space=sflag, size = 0x4, scoped, tag = 'scoped memory for tpu_custom_call.1']
    #allocation5 [shape = 'u8[524288]{0}', space=vmem, size = 0x80000, scoped, tag = 'input window, operand 7, single buffered']
    #allocation6 [shape = 's32[1]{0}', space=sflag, size = 0x4, scoped, tag = 'scoped memory for tpu_custom_call.1']
    #allocation7 [shape = 'u8[524288]{0}', space=vmem, size = 0x80000, scoped, tag = 'input window, operand 9, single buffered']
    #allocation8 [shape = 'u8[65536]{0}', space=vmem, size = 0x10000, scoped, tag = 'input window, operand 13, single buffered']
    #allocation9 [shape = 's32[1]{0}', space=sflag, size = 0x4, scoped, tag = 'scoped memory for tpu_custom_call.1']
    #allocation10 [shape = 'u8[65536]{0}', space=vmem, size = 0x10000, scoped, tag = 'input window, operand 15, single buffered']
    #allocation11 [shape = 'u8[65536]{0}', space=vmem, size = 0x10000, scoped, tag = 'output window, operand 0, single buffered']
    %22 = vsyncpa [#allocation3], 0
    %23 = vsyncpa [#allocation6], 0
    %24 = vsyncpa [#allocation9], 0
    %25 = vsyncpa [#allocation4], 0
    // Predicated region
    $region2: #{tpu_custom_call.1} parent=1 // pred_check
      _
    $region3: #{tpu_custom_call.1} parent=1 // pred_check_branch
      %27 = sbr.rel (0) target = $region5
    $region4: #{tpu_custom_call.1} parent=1 // pred_region
      _
    $region5: #{tpu_custom_call.1} parent=1 // pred_fallthru
      _
    // Predicated region
    $region6: #{tpu_custom_call.1} parent=1 // pred_check
      _
    $region7: #{tpu_custom_call.1} parent=1 // pred_check_branch
      %29 = sbr.rel (0) target = $region9
    $region8: #{tpu_custom_call.1} parent=1 // pred_region
      _
    $region9: #{tpu_custom_call.1} parent=1 // pred_fallthru
      _
    // Predicated region
    $region10: #{tpu_custom_call.1} parent=1 // pred_check
      _
    $region11: #{tpu_custom_call.1} parent=1 // pred_check_branch
      %31 = sbr.rel (0) target = $region13
    $region12: #{tpu_custom_call.1} parent=1 // pred_region
      _
    $region13: #{tpu_custom_call.1} parent=1 // pred_fallthru
      _
    // Predicated region
    $region14: #{tpu_custom_call.1} parent=1 // pred_check
      _
    $region15: #{tpu_custom_call.1} parent=1 // pred_check_branch
      %33 = sbr.rel (0) target = $region17
    $region16: #{tpu_custom_call.1} parent=1 // pred_region
      _
    $region17: #{tpu_custom_call.1} parent=1 // pred_fallthru
      _
    // Predicated region
    $region18: #{tpu_custom_call.1} parent=1 // pred_check
      _
    $region19: #{tpu_custom_call.1} parent=1 // pred_check_branch
      %35 = sbr.rel (0) target = $region21
    $region20: #{tpu_custom_call.1} parent=1 // pred_region
      _
    $region21: #{tpu_custom_call.1} parent=1 // pred_fallthru
      _
    // Predicated region
    $region22: #{tpu_custom_call.1} parent=1 // pred_check
      _
    $region23: #{tpu_custom_call.1} parent=1 // pred_check_branch
      %37 = sbr.rel (0) target = $region25
    $region24: #{tpu_custom_call.1} parent=1 // pred_region
      %s39 = ssub.s32 16, 16
      %40 = vsyncadd [#allocation3], %s39
      %s42 = sshll.u32 [#allocation2], 4
      %s43 = int_to_ptr.vmem [resolvable:$true] %s42
      %45 = dma.hbm_to_vmem [thread:$0]  %s5, 16, %s43, [#allocation3]
    $region25: #{tpu_custom_call.1} parent=1 // pred_fallthru
      _
    // Predicated region
    $region26: #{tpu_custom_call.1} parent=1 // pred_check
      _
    $region27: #{tpu_custom_call.1} parent=1 // pred_check_branch
      %47 = sbr.rel (0) target = $region29
    $region28: #{tpu_custom_call.1} parent=1 // pred_region
      _
    $region29: #{tpu_custom_call.1} parent=1 // pred_fallthru
      _
    // Predicated region
    $region30: #{tpu_custom_call.1} parent=1 // pred_check
      _
    $region31: #{tpu_custom_call.1} parent=1 // pred_check_branch
      %49 = sbr.rel (0) target = $region33
    $region32: #{tpu_custom_call.1} parent=1 // pred_region
      %s51 = ssub.s32 16384, 16384
      %52 = vsyncadd [#allocation6], %s51
      %s53 = sshll.u32 [#allocation5], 4
      %s54 = int_to_ptr.vmem [resolvable:$true] %s53
      %59 = dma.hbm_to_vmem [thread:$0]  %s7, 16384, %s54, [#allocation6], 1024, 1024, 64
    $region33: #{tpu_custom_call.1} parent=1 // pred_fallthru
      _
    // Predicated region
    $region34: #{tpu_custom_call.1} parent=1 // pred_check
      _
    $region35: #{tpu_custom_call.1} parent=1 // pred_check_branch
      %61 = sbr.rel (0) target = $region37
    $region36: #{tpu_custom_call.1} parent=1 // pred_region
      _
    $region37: #{tpu_custom_call.1} parent=1 // pred_fallthru
      _
    // Predicated region
    $region38: #{tpu_custom_call.1} parent=1 // pred_check
      _
    $region39: #{tpu_custom_call.1} parent=1 // pred_check_branch
      %63 = sbr.rel (0) target = $region41
    $region40: #{tpu_custom_call.1} parent=1 // pred_region
      %s65 = ssub.s32 16384, 16384
      %66 = vsyncadd [#allocation6], %s65
      %s67 = sshll.u32 [#allocation7], 4
      %s68 = int_to_ptr.vmem [resolvable:$true] %s67
      %73 = dma.hbm_to_vmem [thread:$0]  %s9, 16384, %s68, [#allocation6], 64, 64, 4
    $region41: #{tpu_custom_call.1} parent=1 // pred_fallthru
      _
    // Predicated region
    $region42: #{tpu_custom_call.1} parent=1 // pred_check
      _
    $region43: #{tpu_custom_call.1} parent=1 // pred_check_branch
      %75 = sbr.rel (0) target = $region45
    $region44: #{tpu_custom_call.1} parent=1 // pred_region
      _
    $region45: #{tpu_custom_call.1} parent=1 // pred_fallthru
      _
    // Predicated region
    $region46: #{tpu_custom_call.1} parent=1 // pred_check
      _
    $region47: #{tpu_custom_call.1} parent=1 // pred_check_branch
      %77 = sbr.rel (0) target = $region49
    $region48: #{tpu_custom_call.1} parent=1 // pred_region
      _
    $region49: #{tpu_custom_call.1} parent=1 // pred_fallthru
      _
    // Predicated region
    $region50: #{tpu_custom_call.1} parent=1 // pred_check
      _
    $region51: #{tpu_custom_call.1} parent=1 // pred_check_branch
      %79 = sbr.rel (0) target = $region53
    $region52: #{tpu_custom_call.1} parent=1 // pred_region
      _
    $region53: #{tpu_custom_call.1} parent=1 // pred_fallthru
      _
    // Predicated region
    $region54: #{tpu_custom_call.1} parent=1 // pred_check
      _
    $region55: #{tpu_custom_call.1} parent=1 // pred_check_branch
      %81 = sbr.rel (0) target = $region57
    $region56: #{tpu_custom_call.1} parent=1 // pred_region
      %s83 = ssub.s32 2048, 2048
      %84 = vsyncadd [#allocation9], %s83
      %s85 = sshll.u32 [#allocation8], 4
      %s86 = int_to_ptr.vmem [resolvable:$true] %s85
      %91 = dma.hbm_to_vmem [thread:$0]  %s13, 2048, %s86, [#allocation9], 128, 128, 8
    $region57: #{tpu_custom_call.1} parent=1 // pred_fallthru
      _
    // Predicated region
    $region58: #{tpu_custom_call.1} parent=1 // pred_check
      _
    $region59: #{tpu_custom_call.1} parent=1 // pred_check_branch
      %93 = sbr.rel (0) target = $region61
    $region60: #{tpu_custom_call.1} parent=1 // pred_region
      _
    $region61: #{tpu_custom_call.1} parent=1 // pred_fallthru
      _
    // Predicated region
    $region62: #{tpu_custom_call.1} parent=1 // pred_check
      _
    $region63: #{tpu_custom_call.1} parent=1 // pred_check_branch
      %95 = sbr.rel (0) target = $region65
    $region64: #{tpu_custom_call.1} parent=1 // pred_region
      %s97 = ssub.s32 2048, 2048
      %98 = vsyncadd [#allocation9], %s97
      %s99 = sshll.u32 [#allocation10], 4
      %s100 = int_to_ptr.vmem [resolvable:$true] %s99
      %105 = dma.hbm_to_vmem [thread:$0]  %s15, 2048, %s100, [#allocation9], 128, 128, 8
    $region65: #{tpu_custom_call.1} parent=1 // pred_fallthru
      _
    // Predicated region
    $region66: #{tpu_custom_call.1} parent=1 // pred_check
      _
    $region67: #{tpu_custom_call.1} parent=1 // pred_check_branch
      %107 = sbr.rel (0) target = $region69
    $region68: #{tpu_custom_call.1} parent=1 // pred_region
      _
    $region69: #{tpu_custom_call.1} parent=1 // pred_fallthru
      _
    // Predicated region
    $region70: #{tpu_custom_call.1} parent=1 // pred_check
      _
    $region71: #{tpu_custom_call.1} parent=1 // pred_check_branch
      %109 = sbr.rel (0) target = $region73
    $region72: #{tpu_custom_call.1} parent=1 // pred_region
      %110 = dma.done [#allocation3], 16
    $region73: #{tpu_custom_call.1} parent=1 // pred_fallthru
      _
    // Predicated region
    $region74: #{tpu_custom_call.1} parent=1 // pred_check
      _
    $region75: #{tpu_custom_call.1} parent=1 // pred_check_branch
      %112 = sbr.rel (0) target = $region77
    $region76: #{tpu_custom_call.1} parent=1 // pred_region
      %113 = dma.done [#allocation6], 16384
    $region77: #{tpu_custom_call.1} parent=1 // pred_fallthru
      _
    // Predicated region
    $region78: #{tpu_custom_call.1} parent=1 // pred_check
      _
    $region79: #{tpu_custom_call.1} parent=1 // pred_check_branch
      %115 = sbr.rel (0) target = $region81
    $region80: #{tpu_custom_call.1} parent=1 // pred_region
      %116 = dma.done [#allocation6], 16384
    $region81: #{tpu_custom_call.1} parent=1 // pred_fallthru
      _
    // Predicated region
    $region82: #{tpu_custom_call.1} parent=1 // pred_check
      _
    $region83: #{tpu_custom_call.1} parent=1 // pred_check_branch
      %118 = sbr.rel (0) target = $region85
    $region84: #{tpu_custom_call.1} parent=1 // pred_region
      %119 = dma.done [#allocation9], 2048
    $region85: #{tpu_custom_call.1} parent=1 // pred_fallthru
      _
    // Predicated region
    $region86: #{tpu_custom_call.1} parent=1 // pred_check
      _
    $region87: #{tpu_custom_call.1} parent=1 // pred_check_branch
      %121 = sbr.rel (0) target = $region89
    $region88: #{tpu_custom_call.1} parent=1 // pred_region
      %122 = dma.done [#allocation9], 2048
    $region89: #{tpu_custom_call.1} parent=1 // pred_fallthru
      _
    %v124 = vld [vmem:[%s0] sm:$0xff]
    %v125 = vld [vmem:[%s0 + $0x8] sm:$0xff]
    %v126 = vld [vmem:[%s0 + $0x10] sm:$0xff]
    %v127 = vld [vmem:[%s0 + $0x18] sm:$0xff]
    %v128 = vld [vmem:[%s0 + $0x20] sm:$0xff]
    %v129 = vld [vmem:[%s0 + $0x28] sm:$0xff]
    %v130 = vld [vmem:[%s0 + $0x30] sm:$0xff]
    %v131 = vld [vmem:[%s0 + $0x38] sm:$0xff]
    %v132 = vld [vmem:[%s0 + $0x40] sm:$0xff]
    %v133 = vld [vmem:[%s0 + $0x48] sm:$0xff]
    %v134 = vld [vmem:[%s0 + $0x50] sm:$0xff]
    %v135 = vld [vmem:[%s0 + $0x58] sm:$0xff]
    %v136 = vld [vmem:[%s0 + $0x60] sm:$0xff]
    %v137 = vld [vmem:[%s0 + $0x68] sm:$0xff]
    %v138 = vld [vmem:[%s0 + $0x70] sm:$0xff]
    %v139 = vld [vmem:[%s0 + $0x78] sm:$0xff]
    %v140 = vld [vmem:[%s1] sm:$0xff]
    %v141 = vld [vmem:[%s1 + $0x8] sm:$0x3]
    %v142 = vld [vmem:[%s2] sm:$0x1]
    %v144 = vlaneseq
    %v145 = vshrl.u32 %v144, 7
    %v146 = vsub.s32 0, %v145
    %v147 = vrot.slane %v142, %v146
    %vm149 = vcmask 80896
    %v151 = vsel %vm149, %v124, 0
    %v154 = vsel %vm149, %v125, 0
    %v157 = vsel %vm149, %v126, 0
    %v160 = vsel %vm149, %v127, 0
    %v163 = vsel %vm149, %v128, 0
    %v166 = vsel %vm149, %v129, 0
    %v169 = vsel %vm149, %v130, 0
    %v172 = vsel %vm149, %v131, 0
    %v175 = vsel %vm149, %v132, 0
    %v178 = vsel %vm149, %v133, 0
    %v181 = vsel %vm149, %v134, 0
    %v184 = vsel %vm149, %v135, 0
    %v187 = vsel %vm149, %v136, 0
    %v190 = vsel %vm149, %v137, 0
    %v193 = vsel %vm149, %v138, 0
    %v196 = vsel %vm149, %v139, 0
    %vm198 = vcmask 1041408
    %v200 = vsel %vm198, %v141, 0
    %202 = vmatprep.subr.mxu0 0.0
    %203 = vmatpush1.msra.mxu0 %v140
    %204 = vmatprep.subr.mxu0 0.0
    %205 = vmatpush1.msra.mxu0 %v200
    %206 = vmatprep.subr.mxu0 0.0
    %207 = vmatpush1.msra.mxu0 0.0
    %208 = vmatprep.subr.mxu0 0.0
    %209 = vmatpush1.msra.mxu0 0.0
    %210 = vmatprep.subr.mxu0 0.0
    %211 = vmatpush1.msra.mxu0 0.0
    %212 = vmatprep.subr.mxu0 0.0
    %213 = vmatpush1.msra.mxu0 0.0
    %214 = vmatprep.subr.mxu0 0.0
    %215 = vmatpush1.msra.mxu0 0.0
    %216 = vmatprep.subr.mxu0 0.0
    %217 = vmatpush1.msra.mxu0 0.0
    %218 = vmatprep.subr.mxu0 0.0
    %219 = vmatpush1.msra.mxu0 0.0
    %220 = vmatprep.subr.mxu0 0.0
    %221 = vmatpush1.msra.mxu0 0.0
    %222 = vmatprep.subr.mxu0 0.0
    %223 = vmatpush1.msra.mxu0 0.0
    %224 = vmatprep.subr.mxu0 0.0
    %225 = vmatpush1.msra.mxu0 0.0
    %226 = vmatprep.subr.mxu0 0.0
    %227 = vmatpush1.msra.mxu0 0.0
    %228 = vmatprep.subr.mxu0 0.0
    %229 = vmatpush1.msra.mxu0 0.0
    %230 = vmatprep.subr.mxu0 0.0
    %231 = vmatpush1.msra.mxu0 0.0
    %232 = vmatprep.subr.mxu0 0.0
    %233 = vmatpush1.msra.mxu0 0.0
    %234 = vmatprep.subr.mxu0 0.0
    %235 = vmatpush1.msra.mxu0 0.0
    %236 = vmatprep.subr.mxu0 0.0
    %237 = vmatpush1.msra.mxu0 0.0
    %238 = vmatprep.subr.mxu0 0.0
    %239 = vmatpush1.msra.mxu0 0.0
    %240 = vmatprep.subr.mxu0 0.0
    %241 = vmatpush1.msra.mxu0 0.0
    %242 = vmatprep.subr.mxu0 0.0
    %243 = vmatpush1.msra.mxu0 0.0
    %244 = vmatprep.subr.mxu0 0.0
    %245 = vmatpush1.msra.mxu0 0.0
    %246 = vmatprep.subr.mxu0 0.0
    %247 = vmatpush1.msra.mxu0 0.0
    %248 = vmatprep.subr.mxu0 0.0
    %249 = vmatpush1.msra.mxu0 0.0
    %250 = vmatprep.subr.mxu0 0.0
    %251 = vmatpush1.msra.mxu0 0.0
    %252 = vmatprep.subr.mxu0 0.0
    %253 = vmatpush1.msra.mxu0 0.0
    %254 = vmatprep.subr.mxu0 0.0
    %255 = vmatpush1.msra.mxu0 0.0
    %256 = vmatprep.subr.mxu0 0.0
    %257 = vmatpush1.msra.mxu0 0.0
    %258 = vmatprep.subr.mxu0 0.0
    %259 = vmatpush1.msra.mxu0 0.0
    %260 = vmatprep.subr.mxu0 0.0
    %261 = vmatpush1.msra.mxu0 0.0
    %262 = vmatprep.subr.mxu0 0.0
    %263 = vmatpush1.msra.mxu0 0.0
    %264 = vmatprep.subr.mxu0 0.0
    %265 = vmatpush1.msra.mxu0 0.0
    %266 = vmatprep.mubr.f32.mxu0 0.0
    %267 = vmatmul.mubr.f32.gmra.mrb[0].mxu0 %v151
    %v268 = vpop.f32.mrb[0].mxu0
    %v269 = vadd.f32 %v147, %v268
    %v270 = vpop.f32.mrb[0].mxu0
    %271 = vmatprep.mubr.f32.mxu0 0.0
    %272 = vmatmul.mubr.f32.gmra.mrb[0].mxu0 %v154
    %v273 = vpop.f32.mrb[0].mxu0
    %v274 = vadd.f32 %v147, %v273
    %v275 = vpop.f32.mrb[0].mxu0
    %276 = vmatprep.mubr.f32.mxu0 0.0
    %277 = vmatmul.mubr.f32.gmra.mrb[0].mxu0 %v157
    %v278 = vpop.f32.mrb[0].mxu0
    %v279 = vadd.f32 %v147, %v278
    %v280 = vpop.f32.mrb[0].mxu0
    %281 = vmatprep.mubr.f32.mxu0 0.0
    %282 = vmatmul.mubr.f32.gmra.mrb[0].mxu0 %v160
    %v283 = vpop.f32.mrb[0].mxu0
    %v284 = vadd.f32 %v147, %v283
    %v285 = vpop.f32.mrb[0].mxu0
    %286 = vmatprep.mubr.f32.mxu0 0.0
    %287 = vmatmul.mubr.f32.gmra.mrb[0].mxu0 %v163
    %v288 = vpop.f32.mrb[0].mxu0
    %v289 = vadd.f32 %v147, %v288
    %v290 = vpop.f32.mrb[0].mxu0
    %291 = vmatprep.mubr.f32.mxu0 0.0
    %292 = vmatmul.mubr.f32.gmra.mrb[0].mxu0 %v166
    %v293 = vpop.f32.mrb[0].mxu0
    %v294 = vadd.f32 %v147, %v293
    %v295 = vpop.f32.mrb[0].mxu0
    %296 = vmatprep.mubr.f32.mxu0 0.0
    %297 = vmatmul.mubr.f32.gmra.mrb[0].mxu0 %v169
    %v298 = vpop.f32.mrb[0].mxu0
    %v299 = vadd.f32 %v147, %v298
    %v300 = vpop.f32.mrb[0].mxu0
    %301 = vmatprep.mubr.f32.mxu0 0.0
    %302 = vmatmul.mubr.f32.gmra.mrb[0].mxu0 %v172
    %v303 = vpop.f32.mrb[0].mxu0
    %v304 = vadd.f32 %v147, %v303
    %v305 = vpop.f32.mrb[0].mxu0
    %306 = vmatprep.mubr.f32.mxu0 0.0
    %307 = vmatmul.mubr.f32.gmra.mrb[0].mxu0 %v175
    %v308 = vpop.f32.mrb[0].mxu0
    %v309 = vadd.f32 %v147, %v308
    %v310 = vpop.f32.mrb[0].mxu0
    %311 = vmatprep.mubr.f32.mxu0 0.0
    %312 = vmatmul.mubr.f32.gmra.mrb[0].mxu0 %v178
    %v313 = vpop.f32.mrb[0].mxu0
    %v314 = vadd.f32 %v147, %v313
    %v315 = vpop.f32.mrb[0].mxu0
    %316 = vmatprep.mubr.f32.mxu0 0.0
    %317 = vmatmul.mubr.f32.gmra.mrb[0].mxu0 %v181
    %v318 = vpop.f32.mrb[0].mxu0
    %v319 = vadd.f32 %v147, %v318
    %v320 = vpop.f32.mrb[0].mxu0
    %321 = vmatprep.mubr.f32.mxu0 0.0
    %322 = vmatmul.mubr.f32.gmra.mrb[0].mxu0 %v184
    %v323 = vpop.f32.mrb[0].mxu0
    %v324 = vadd.f32 %v147, %v323
    %v325 = vpop.f32.mrb[0].mxu0
    %326 = vmatprep.mubr.f32.mxu0 0.0
    %327 = vmatmul.mubr.f32.gmra.mrb[0].mxu0 %v187
    %v328 = vpop.f32.mrb[0].mxu0
    %v329 = vadd.f32 %v147, %v328
    %v330 = vpop.f32.mrb[0].mxu0
    %331 = vmatprep.mubr.f32.mxu0 0.0
    %332 = vmatmul.mubr.f32.gmra.mrb[0].mxu0 %v190
    %v333 = vpop.f32.mrb[0].mxu0
    %v334 = vadd.f32 %v147, %v333
    %v335 = vpop.f32.mrb[0].mxu0
    %336 = vmatprep.mubr.f32.mxu0 0.0
    %337 = vmatmul.mubr.f32.gmra.mrb[0].mxu0 %v193
    %v338 = vpop.f32.mrb[0].mxu0
    %v339 = vadd.f32 %v147, %v338
    %v340 = vpop.f32.mrb[0].mxu0
    %341 = vmatprep.mubr.f32.mxu0 0.0
    %342 = vmatmul.mubr.f32.gmra.mrb[0].mxu0 %v196
    %v343 = vpop.f32.mrb[0].mxu0
    %v344 = vadd.f32 %v147, %v343
    %v345 = vpop.f32.mrb[0].mxu0
    %346 = vdwg.mxu0
    %v347 = vld [vmem:[%s3] sm:$0xff]
    %v348 = vld [vmem:[%s3 + $0x8] sm:$0xff]
    %v349 = vld [vmem:[%s3 + $0x10] sm:$0xff]
    %v350 = vld [vmem:[%s3 + $0x18] sm:$0xff]
    %v351 = vld [vmem:[%s3 + $0x20] sm:$0xff]
    %v352 = vld [vmem:[%s3 + $0x28] sm:$0xff]
    %v353 = vld [vmem:[%s3 + $0x30] sm:$0xff]
    %v354 = vld [vmem:[%s3 + $0x38] sm:$0xff]
    %v355 = vld [vmem:[%s3 + $0x40] sm:$0xff]
    %v356 = vld [vmem:[%s3 + $0x48] sm:$0xff]
    %v357 = vld [vmem:[%s3 + $0x50] sm:$0xff]
    %v358 = vld [vmem:[%s3 + $0x58] sm:$0xff]
    %v359 = vld [vmem:[%s3 + $0x60] sm:$0xff]
    %v360 = vld [vmem:[%s3 + $0x68] sm:$0xff]
    %v361 = vld [vmem:[%s3 + $0x70] sm:$0xff]
    %v362 = vld [vmem:[%s3 + $0x78] sm:$0xff]
    %v363 = vld [vmem:[%s4] sm:$0x1]
    %v365 = vlaneseq
    %v366 = vshrl.u32 %v365, 7
    %v367 = vsub.s32 0, %v366
    %v368 = vrot.slane %v363, %v367
    %370 = vmatprep.subr.mxu0 0.0
    %371 = vmatpush1.msra.mxu0 %v347
    %372 = vmatprep.subr.mxu0 0.0
    %373 = vmatpush1.msra.mxu0 %v348
    %374 = vmatprep.subr.mxu0 0.0
    %375 = vmatpush1.msra.mxu0 %v349
    %376 = vmatprep.subr.mxu0 0.0
    %377 = vmatpush1.msra.mxu0 %v350
    %378 = vmatprep.subr.mxu0 0.0
    %379 = vmatpush1.msra.mxu0 %v351
    %380 = vmatprep.subr.mxu0 0.0
    %381 = vmatpush1.msra.mxu0 %v352
    %382 = vmatprep.subr.mxu0 0.0
    %383 = vmatpush1.msra.mxu0 %v353
    %384 = vmatprep.subr.mxu0 0.0
    %385 = vmatpush1.msra.mxu0 %v354
    %386 = vmatprep.subr.mxu0 0.0
    %387 = vmatpush1.msra.mxu0 %v355
    %388 = vmatprep.subr.mxu0 0.0
    %389 = vmatpush1.msra.mxu0 %v356
    %390 = vmatprep.subr.mxu0 0.0
    %391 = vmatpush1.msra.mxu0 %v357
    %392 = vmatprep.subr.mxu0 0.0
    %393 = vmatpush1.msra.mxu0 %v358
    %394 = vmatprep.subr.mxu0 0.0
    %395 = vmatpush1.msra.mxu0 %v359
    %396 = vmatprep.subr.mxu0 0.0
    %397 = vmatpush1.msra.mxu0 %v360
    %398 = vmatprep.subr.mxu0 0.0
    %399 = vmatpush1.msra.mxu0 %v361
    %400 = vmatprep.subr.mxu0 0.0
    %401 = vmatpush1.msra.mxu0 %v362
    %402 = vmatprep.subr.mxu0 0.0
    %403 = vmatpush1.msra.mxu0 0.0
    %404 = vmatprep.subr.mxu0 0.0
    %405 = vmatpush1.msra.mxu0 0.0
    %406 = vmatprep.subr.mxu0 0.0
    %407 = vmatpush1.msra.mxu0 0.0
    %408 = vmatprep.subr.mxu0 0.0
    %409 = vmatpush1.msra.mxu0 0.0
    %410 = vmatprep.subr.mxu0 0.0
    %411 = vmatpush1.msra.mxu0 0.0
    %412 = vmatprep.subr.mxu0 0.0
    %413 = vmatpush1.msra.mxu0 0.0
    %414 = vmatprep.subr.mxu0 0.0
    %415 = vmatpush1.msra.mxu0 0.0
    %416 = vmatprep.subr.mxu0 0.0
    %417 = vmatpush1.msra.mxu0 0.0
    %418 = vmatprep.subr.mxu0 0.0
    %419 = vmatpush1.msra.mxu0 0.0
    %420 = vmatprep.subr.mxu0 0.0
    %421 = vmatpush1.msra.mxu0 0.0
    %422 = vmatprep.subr.mxu0 0.0
    %423 = vmatpush1.msra.mxu0 0.0
    %424 = vmatprep.subr.mxu0 0.0
    %425 = vmatpush1.msra.mxu0 0.0
    %426 = vmatprep.subr.mxu0 0.0
    %427 = vmatpush1.msra.mxu0 0.0
    %428 = vmatprep.subr.mxu0 0.0
    %429 = vmatpush1.msra.mxu0 0.0
    %430 = vmatprep.subr.mxu0 0.0
    %431 = vmatpush1.msra.mxu0 0.0
    %432 = vmatprep.subr.mxu0 0.0
    %433 = vmatpush1.msra.mxu0 0.0
    %434 = vmatprep.mubr.f32.mxu0 0.0
    %435 = vmatmul.mubr.f32.gmra.mrb[0].mxu0 %v269
    %v436 = vpop.f32.mrb[0].mxu0
    %v437 = vadd.f32 %v368, %v436
    %v438 = vpop.f32.mrb[0].mxu0
    %439 = vmatprep.mubr.f32.mxu0 0.0
    %440 = vmatmul.mubr.f32.gmra.mrb[0].mxu0 %v274
    %v441 = vpop.f32.mrb[0].mxu0
    %v442 = vadd.f32 %v368, %v441
    %v443 = vpop.f32.mrb[0].mxu0
    %444 = vmatprep.mubr.f32.mxu0 0.0
    %445 = vmatmul.mubr.f32.gmra.mrb[0].mxu0 %v279
    %v446 = vpop.f32.mrb[0].mxu0
    %v447 = vadd.f32 %v368, %v446
    %v448 = vpop.f32.mrb[0].mxu0
    %449 = vmatprep.mubr.f32.mxu0 0.0
    %450 = vmatmul.mubr.f32.gmra.mrb[0].mxu0 %v284
    %v451 = vpop.f32.mrb[0].mxu0
    %v452 = vadd.f32 %v368, %v451
    %v453 = vpop.f32.mrb[0].mxu0
    %454 = vmatprep.mubr.f32.mxu0 0.0
    %455 = vmatmul.mubr.f32.gmra.mrb[0].mxu0 %v289
    %v456 = vpop.f32.mrb[0].mxu0
    %v457 = vadd.f32 %v368, %v456
    %v458 = vpop.f32.mrb[0].mxu0
    %459 = vmatprep.mubr.f32.mxu0 0.0
    %460 = vmatmul.mubr.f32.gmra.mrb[0].mxu0 %v294
    %v461 = vpop.f32.mrb[0].mxu0
    %v462 = vadd.f32 %v368, %v461
    %v463 = vpop.f32.mrb[0].mxu0
    %464 = vmatprep.mubr.f32.mxu0 0.0
    %465 = vmatmul.mubr.f32.gmra.mrb[0].mxu0 %v299
    %v466 = vpop.f32.mrb[0].mxu0
    %v467 = vadd.f32 %v368, %v466
    %v468 = vpop.f32.mrb[0].mxu0
    %469 = vmatprep.mubr.f32.mxu0 0.0
    %470 = vmatmul.mubr.f32.gmra.mrb[0].mxu0 %v304
    %v471 = vpop.f32.mrb[0].mxu0
    %v472 = vadd.f32 %v368, %v471
    %v473 = vpop.f32.mrb[0].mxu0
    %474 = vmatprep.mubr.f32.mxu0 0.0
    %475 = vmatmul.mubr.f32.gmra.mrb[0].mxu0 %v309
    %v476 = vpop.f32.mrb[0].mxu0
    %v477 = vadd.f32 %v368, %v476
    %v478 = vpop.f32.mrb[0].mxu0
    %479 = vmatprep.mubr.f32.mxu0 0.0
    %480 = vmatmul.mubr.f32.gmra.mrb[0].mxu0 %v314
    %v481 = vpop.f32.mrb[0].mxu0
    %v482 = vadd.f32 %v368, %v481
    %v483 = vpop.f32.mrb[0].mxu0
    %484 = vmatprep.mubr.f32.mxu0 0.0
    %485 = vmatmul.mubr.f32.gmra.mrb[0].mxu0 %v319
    %v486 = vpop.f32.mrb[0].mxu0
    %v487 = vadd.f32 %v368, %v486
    %v488 = vpop.f32.mrb[0].mxu0
    %489 = vmatprep.mubr.f32.mxu0 0.0
    %490 = vmatmul.mubr.f32.gmra.mrb[0].mxu0 %v324
    %v491 = vpop.f32.mrb[0].mxu0
    %v492 = vadd.f32 %v368, %v491
    %v493 = vpop.f32.mrb[0].mxu0
    %494 = vmatprep.mubr.f32.mxu0 0.0
    %495 = vmatmul.mubr.f32.gmra.mrb[0].mxu0 %v329
    %v496 = vpop.f32.mrb[0].mxu0
    %v497 = vadd.f32 %v368, %v496
    %v498 = vpop.f32.mrb[0].mxu0
    %499 = vmatprep.mubr.f32.mxu0 0.0
    %500 = vmatmul.mubr.f32.gmra.mrb[0].mxu0 %v334
    %v501 = vpop.f32.mrb[0].mxu0
    %v502 = vadd.f32 %v368, %v501
    %v503 = vpop.f32.mrb[0].mxu0
    %504 = vmatprep.mubr.f32.mxu0 0.0
    %505 = vmatmul.mubr.f32.gmra.mrb[0].mxu0 %v339
    %v506 = vpop.f32.mrb[0].mxu0
    %v507 = vadd.f32 %v368, %v506
    %v508 = vpop.f32.mrb[0].mxu0
    %509 = vmatprep.mubr.f32.mxu0 0.0
    %510 = vmatmul.mubr.f32.gmra.mrb[0].mxu0 %v344
    %v511 = vpop.f32.mrb[0].mxu0
    %v512 = vadd.f32 %v368, %v511
    %v513 = vpop.f32.mrb[0].mxu0
    %514 = vdwg.mxu0
    %v515 = vadd.f32 %v269, %v437
    %v516 = vadd.f32 %v274, %v442
    %v517 = vadd.f32 %v279, %v447
    %v518 = vadd.f32 %v284, %v452
    %v519 = vadd.f32 %v289, %v457
    %v520 = vadd.f32 %v294, %v462
    %v521 = vadd.f32 %v299, %v467
    %v522 = vadd.f32 %v304, %v472
    %v523 = vadd.f32 %v309, %v477
    %v524 = vadd.f32 %v314, %v482
    %v525 = vadd.f32 %v319, %v487
    %v526 = vadd.f32 %v324, %v492
    %v527 = vadd.f32 %v329, %v497
    %v528 = vadd.f32 %v334, %v502
    %v529 = vadd.f32 %v339, %v507
    %v530 = vadd.f32 %v344, %v512
    %v531 = vld [vmem:[#allocation2] sm:$0x1]
    %v532 = vld [vmem:[%s6] sm:$0x1]
    %533 = vadd.xlane.f32.xlu0 %v515
    %v534 = vpop.xlane.xlu0 %533
    %535 = vadd.xlane.f32.xlu0 %v516
    %v536 = vpop.xlane.xlu0 %535
    %537 = vadd.xlane.f32.xlu0 %v517
    %v538 = vpop.xlane.xlu0 %537
    %539 = vadd.xlane.f32.xlu0 %v518
    %v540 = vpop.xlane.xlu0 %539
    %541 = vadd.xlane.f32.xlu0 %v519
    %v542 = vpop.xlane.xlu0 %541
    %543 = vadd.xlane.f32.xlu0 %v520
    %v544 = vpop.xlane.xlu0 %543
    %545 = vadd.xlane.f32.xlu0 %v521
    %v546 = vpop.xlane.xlu0 %545
    %547 = vadd.xlane.f32.xlu0 %v522
    %v548 = vpop.xlane.xlu0 %547
    %549 = vadd.xlane.f32.xlu0 %v523
    %v550 = vpop.xlane.xlu0 %549
    %551 = vadd.xlane.f32.xlu0 %v524
    %v552 = vpop.xlane.xlu0 %551
    %553 = vadd.xlane.f32.xlu0 %v525
    %v554 = vpop.xlane.xlu0 %553
    %555 = vadd.xlane.f32.xlu0 %v526
    %v556 = vpop.xlane.xlu0 %555
    %557 = vadd.xlane.f32.xlu0 %v527
    %v558 = vpop.xlane.xlu0 %557
    %559 = vadd.xlane.f32.xlu0 %v528
    %v560 = vpop.xlane.xlu0 %559
    %561 = vadd.xlane.f32.xlu0 %v529
    %v562 = vpop.xlane.xlu0 %561
    %563 = vadd.xlane.f32.xlu0 %v530
    %v564 = vpop.xlane.xlu0 %563
    %v565 = vrcp.pop 128.0
    %v566 = vmul.f32 %v534, %v565
    %v567 = vmul.f32 %v536, %v565
    %v568 = vmul.f32 %v538, %v565
    %v569 = vmul.f32 %v540, %v565
    %v570 = vmul.f32 %v542, %v565
    %v571 = vmul.f32 %v544, %v565
    %v572 = vmul.f32 %v546, %v565
    %v573 = vmul.f32 %v548, %v565
    %v574 = vmul.f32 %v550, %v565
    %v575 = vmul.f32 %v552, %v565
    %v576 = vmul.f32 %v554, %v565
    %v577 = vmul.f32 %v556, %v565
    %v578 = vmul.f32 %v558, %v565
    %v579 = vmul.f32 %v560, %v565
    %v580 = vmul.f32 %v562, %v565
    %v581 = vmul.f32 %v564, %v565
    %v582 = vsub.f32 %v515, %v566
    %v583 = vsub.f32 %v516, %v567
    %v584 = vsub.f32 %v517, %v568
    %v585 = vsub.f32 %v518, %v569
    %v586 = vsub.f32 %v519, %v570
    %v587 = vsub.f32 %v520, %v571
    %v588 = vsub.f32 %v521, %v572
    %v589 = vsub.f32 %v522, %v573
    %v590 = vsub.f32 %v523, %v574
    %v591 = vsub.f32 %v524, %v575
    %v592 = vsub.f32 %v525, %v576
    %v593 = vsub.f32 %v526, %v577
    %v594 = vsub.f32 %v527, %v578
    %v595 = vsub.f32 %v528, %v579
    %v596 = vsub.f32 %v529, %v580
    %v597 = vsub.f32 %v530, %v581
    %v598 = vmul.f32 %v582, %v582
    %v599 = vmul.f32 %v583, %v583
    %v600 = vmul.f32 %v584, %v584
    %v601 = vmul.f32 %v585, %v585
    %v602 = vmul.f32 %v586, %v586
    %v603 = vmul.f32 %v587, %v587
    %v604 = vmul.f32 %v588, %v588
    %v605 = vmul.f32 %v589, %v589
    %v606 = vmul.f32 %v590, %v590
    %v607 = vmul.f32 %v591, %v591
    %v608 = vmul.f32 %v592, %v592
    %v609 = vmul.f32 %v593, %v593
    %v610 = vmul.f32 %v594, %v594
    %v611 = vmul.f32 %v595, %v595
    %v612 = vmul.f32 %v596, %v596
    %v613 = vmul.f32 %v597, %v597
    %614 = vadd.xlane.f32.xlu0 %v598
    %v615 = vpop.xlane.xlu0 %614
    %616 = vadd.xlane.f32.xlu0 %v599
    %v617 = vpop.xlane.xlu0 %616
    %618 = vadd.xlane.f32.xlu0 %v600
    %v619 = vpop.xlane.xlu0 %618
    %620 = vadd.xlane.f32.xlu0 %v601
    %v621 = vpop.xlane.xlu0 %620
    %622 = vadd.xlane.f32.xlu0 %v602
    %v623 = vpop.xlane.xlu0 %622
    %624 = vadd.xlane.f32.xlu0 %v603
    %v625 = vpop.xlane.xlu0 %624
    %626 = vadd.xlane.f32.xlu0 %v604
    %v627 = vpop.xlane.xlu0 %626
    %628 = vadd.xlane.f32.xlu0 %v605
    %v629 = vpop.xlane.xlu0 %628
    %630 = vadd.xlane.f32.xlu0 %v606
    %v631 = vpop.xlane.xlu0 %630
    %632 = vadd.xlane.f32.xlu0 %v607
    %v633 = vpop.xlane.xlu0 %632
    %634 = vadd.xlane.f32.xlu0 %v608
    %v635 = vpop.xlane.xlu0 %634
    %636 = vadd.xlane.f32.xlu0 %v609
    %v637 = vpop.xlane.xlu0 %636
    %638 = vadd.xlane.f32.xlu0 %v610
    %v639 = vpop.xlane.xlu0 %638
    %640 = vadd.xlane.f32.xlu0 %v611
    %v641 = vpop.xlane.xlu0 %640
    %642 = vadd.xlane.f32.xlu0 %v612
    %v643 = vpop.xlane.xlu0 %642
    %644 = vadd.xlane.f32.xlu0 %v613
    %v645 = vpop.xlane.xlu0 %644
    %v646 = vmul.f32 %v615, %v565
    %v647 = vmul.f32 %v617, %v565
    %v648 = vmul.f32 %v619, %v565
    %v649 = vmul.f32 %v621, %v565
    %v650 = vmul.f32 %v623, %v565
    %v651 = vmul.f32 %v625, %v565
    %v652 = vmul.f32 %v627, %v565
    %v653 = vmul.f32 %v629, %v565
    %v654 = vmul.f32 %v631, %v565
    %v655 = vmul.f32 %v633, %v565
    %v656 = vmul.f32 %v635, %v565
    %v657 = vmul.f32 %v637, %v565
    %v658 = vmul.f32 %v639, %v565
    %v659 = vmul.f32 %v641, %v565
    %v660 = vmul.f32 %v643, %v565
    %v661 = vmul.f32 %v645, %v565
    %v662 = vadd.f32 %v646, 1e-05
    %v663 = vadd.f32 %v647, 1e-05
    %v664 = vadd.f32 %v648, 1e-05
    %v665 = vadd.f32 %v649, 1e-05
    %v666 = vadd.f32 %v650, 1e-05
    %v667 = vadd.f32 %v651, 1e-05
    %v668 = vadd.f32 %v652, 1e-05
    %v669 = vadd.f32 %v653, 1e-05
    %v670 = vadd.f32 %v654, 1e-05
    %v671 = vadd.f32 %v655, 1e-05
    %v672 = vadd.f32 %v656, 1e-05
    %v673 = vadd.f32 %v657, 1e-05
    %v674 = vadd.f32 %v658, 1e-05
    %v675 = vadd.f32 %v659, 1e-05
    %v676 = vadd.f32 %v660, 1e-05
    %v677 = vadd.f32 %v661, 1e-05
    %v678 = vrsqrt.pop %v662
    %v679 = vrsqrt.pop %v663
    %v680 = vrsqrt.pop %v664
    %v681 = vrsqrt.pop %v665
    %v682 = vrsqrt.pop %v666
    %v683 = vrsqrt.pop %v667
    %v684 = vrsqrt.pop %v668
    %v685 = vrsqrt.pop %v669
    %v686 = vrsqrt.pop %v670
    %v687 = vrsqrt.pop %v671
    %v688 = vrsqrt.pop %v672
    %v689 = vrsqrt.pop %v673
    %v690 = vrsqrt.pop %v674
    %v691 = vrsqrt.pop %v675
    %v692 = vrsqrt.pop %v676
    %v693 = vrsqrt.pop %v677
    %v694 = vmul.f32 %v582, %v678
    %v695 = vmul.f32 %v583, %v679
    %v696 = vmul.f32 %v584, %v680
    %v697 = vmul.f32 %v585, %v681
    %v698 = vmul.f32 %v586, %v682
    %v699 = vmul.f32 %v587, %v683
    %v700 = vmul.f32 %v588, %v684
    %v701 = vmul.f32 %v589, %v685
    %v702 = vmul.f32 %v590, %v686
    %v703 = vmul.f32 %v591, %v687
    %v704 = vmul.f32 %v592, %v688
    %v705 = vmul.f32 %v593, %v689
    %v706 = vmul.f32 %v594, %v690
    %v707 = vmul.f32 %v595, %v691
    %v708 = vmul.f32 %v596, %v692
    %v709 = vmul.f32 %v597, %v693
    %v711 = vlaneseq
    %v712 = vshrl.u32 %v711, 7
    %v713 = vsub.s32 0, %v712
    %v714 = vrot.slane %v531, %v713
    %v716 = vmul.f32 %v694, %v714
    %v717 = vmul.f32 %v695, %v714
    %v718 = vmul.f32 %v696, %v714
    %v719 = vmul.f32 %v697, %v714
    %v720 = vmul.f32 %v698, %v714
    %v721 = vmul.f32 %v699, %v714
    %v722 = vmul.f32 %v700, %v714
    %v723 = vmul.f32 %v701, %v714
    %v724 = vmul.f32 %v702, %v714
    %v725 = vmul.f32 %v703, %v714
    %v726 = vmul.f32 %v704, %v714
    %v727 = vmul.f32 %v705, %v714
    %v728 = vmul.f32 %v706, %v714
    %v729 = vmul.f32 %v707, %v714
    %v730 = vmul.f32 %v708, %v714
    %v731 = vmul.f32 %v709, %v714
    %v733 = vlaneseq
    %v734 = vshrl.u32 %v733, 7
    %v735 = vsub.s32 0, %v734
    %v736 = vrot.slane %v532, %v735
    %v738 = vadd.f32 %v716, %v736
    %v739 = vadd.f32 %v717, %v736
    %v740 = vadd.f32 %v718, %v736
    %v741 = vadd.f32 %v719, %v736
    %v742 = vadd.f32 %v720, %v736
    %v743 = vadd.f32 %v721, %v736
    %v744 = vadd.f32 %v722, %v736
    %v745 = vadd.f32 %v723, %v736
    %v746 = vadd.f32 %v724, %v736
    %v747 = vadd.f32 %v725, %v736
    %v748 = vadd.f32 %v726, %v736
    %v749 = vadd.f32 %v727, %v736
    %v750 = vadd.f32 %v728, %v736
    %v751 = vadd.f32 %v729, %v736
    %v752 = vadd.f32 %v730, %v736
    %v753 = vadd.f32 %v731, %v736
    %v754 = vpack.c.bf16 %v739, %v738
    %v755 = vpack.c.bf16 %v741, %v740
    %v756 = vpack.c.bf16 %v743, %v742
    %v757 = vpack.c.bf16 %v745, %v744
    %v758 = vpack.c.bf16 %v747, %v746
    %v759 = vpack.c.bf16 %v749, %v748
    %v760 = vpack.c.bf16 %v751, %v750
    %v761 = vpack.c.bf16 %v753, %v752
    %v762 = vld [vmem:[#allocation5] sm:$0xff]
    %v763 = vld [vmem:[#allocation5 + $0x8] sm:$0xff]
    %v764 = vld [vmem:[#allocation5 + $0x10] sm:$0xff]
    %v765 = vld [vmem:[#allocation5 + $0x18] sm:$0xff]
    %v766 = vld [vmem:[#allocation5 + $0x20] sm:$0xff]
    %v767 = vld [vmem:[#allocation5 + $0x28] sm:$0xff]
    %v768 = vld [vmem:[#allocation5 + $0x30] sm:$0xff]
    %v769 = vld [vmem:[#allocation5 + $0x38] sm:$0xff]
    %v770 = vld [vmem:[#allocation5 + $0x40] sm:$0xff]
    %v771 = vld [vmem:[#allocation5 + $0x48] sm:$0xff]
    %v772 = vld [vmem:[#allocation5 + $0x50] sm:$0xff]
    %v773 = vld [vmem:[#allocation5 + $0x58] sm:$0xff]
    %v774 = vld [vmem:[#allocation5 + $0x60] sm:$0xff]
    %v775 = vld [vmem:[#allocation5 + $0x68] sm:$0xff]
    %v776 = vld [vmem:[#allocation5 + $0x70] sm:$0xff]
    %v777 = vld [vmem:[#allocation5 + $0x78] sm:$0xff]
    %v778 = vld [vmem:[#allocation5 + $0x80] sm:$0xff]
    %v779 = vld [vmem:[#allocation5 + $0x88] sm:$0xff]
    %v780 = vld [vmem:[#allocation5 + $0x90] sm:$0xff]
    %v781 = vld [vmem:[#allocation5 + $0x98] sm:$0xff]
    %v782 = vld [vmem:[#allocation5 + $0xa0] sm:$0xff]
    %v783 = vld [vmem:[#allocation5 + $0xa8] sm:$0xff]
    %v784 = vld [vmem:[#allocation5 + $0xb0] sm:$0xff]
    %v785 = vld [vmem:[#allocation5 + $0xb8] sm:$0xff]
    %v786 = vld [vmem:[#allocation5 + $0xc0] sm:$0xff]
    %v787 = vld [vmem:[#allocation5 + $0xc8] sm:$0xff]
    %v788 = vld [vmem:[#allocation5 + $0xd0] sm:$0xff]
    %v789 = vld [vmem:[#allocation5 + $0xd8] sm:$0xff]
    %v790 = vld [vmem:[#allocation5 + $0xe0] sm:$0xff]
    %v791 = vld [vmem:[#allocation5 + $0xe8] sm:$0xff]
    %v792 = vld [vmem:[#allocation5 + $0xf0] sm:$0xff]
    %v793 = vld [vmem:[#allocation5 + $0xf8] sm:$0xff]
    %v794 = vld [vmem:[#allocation5 + $0x100] sm:$0xff]
    %v795 = vld [vmem:[#allocation5 + $0x108] sm:$0xff]
    %v796 = vld [vmem:[#allocation5 + $0x110] sm:$0xff]
    %v797 = vld [vmem:[#allocation5 + $0x118] sm:$0xff]
    %v798 = vld [vmem:[#allocation5 + $0x120] sm:$0xff]
    %v799 = vld [vmem:[#allocation5 + $0x128] sm:$0xff]
    %v800 = vld [vmem:[#allocation5 + $0x130] sm:$0xff]
    %v801 = vld [vmem:[#allocation5 + $0x138] sm:$0xff]
    %v802 = vld [vmem:[#allocation5 + $0x140] sm:$0xff]
    %v803 = vld [vmem:[#allocation5 + $0x148] sm:$0xff]
    %v804 = vld [vmem:[#allocation5 + $0x150] sm:$0xff]
    %v805 = vld [vmem:[#allocation5 + $0x158] sm:$0xff]
    %v806 = vld [vmem:[#allocation5 + $0x160] sm:$0xff]
    %v807 = vld [vmem:[#allocation5 + $0x168] sm:$0xff]
    %v808 = vld [vmem:[#allocation5 + $0x170] sm:$0xff]
    %v809 = vld [vmem:[#allocation5 + $0x178] sm:$0xff]
    %v810 = vld [vmem:[#allocation5 + $0x180] sm:$0xff]
    %v811 = vld [vmem:[#allocation5 + $0x188] sm:$0xff]
    %v812 = vld [vmem:[#allocation5 + $0x190] sm:$0xff]
    %v813 = vld [vmem:[#allocation5 + $0x198] sm:$0xff]
    %v814 = vld [vmem:[#allocation5 + $0x1a0] sm:$0xff]
    %v815 = vld [vmem:[#allocation5 + $0x1a8] sm:$0xff]
    %v816 = vld [vmem:[#allocation5 + $0x1b0] sm:$0xff]
    %v817 = vld [vmem:[#allocation5 + $0x1b8] sm:$0xff]
    %v818 = vld [vmem:[#allocation5 + $0x1c0] sm:$0xff]
    %v819 = vld [vmem:[#allocation5 + $0x1c8] sm:$0xff]
    %v820 = vld [vmem:[#allocation5 + $0x1d0] sm:$0xff]
    %v821 = vld [vmem:[#allocation5 + $0x1d8] sm:$0xff]
    %v822 = vld [vmem:[#allocation5 + $0x1e0] sm:$0xff]
    %v823 = vld [vmem:[#allocation5 + $0x1e8] sm:$0xff]
    %v824 = vld [vmem:[#allocation5 + $0x1f0] sm:$0xff]
    %v825 = vld [vmem:[#allocation5 + $0x1f8] sm:$0xff]
    %v826 = vld [vmem:[#allocation5 + $0x200] sm:$0xff]
    %v827 = vld [vmem:[#allocation5 + $0x208] sm:$0xff]
    %v828 = vld [vmem:[#allocation5 + $0x210] sm:$0xff]
    %v829 = vld [vmem:[#allocation5 + $0x218] sm:$0xff]
    %v830 = vld [vmem:[#allocation5 + $0x220] sm:$0xff]
    %v831 = vld [vmem:[#allocation5 + $0x228] sm:$0xff]
    %v832 = vld [vmem:[#allocation5 + $0x230] sm:$0xff]
    %v833 = vld [vmem:[#allocation5 + $0x238] sm:$0xff]
    %v834 = vld [vmem:[#allocation5 + $0x240] sm:$0xff]
    %v835 = vld [vmem:[#allocation5 + $0x248] sm:$0xff]
    %v836 = vld [vmem:[#allocation5 + $0x250] sm:$0xff]
    %v837 = vld [vmem:[#allocation5 + $0x258] sm:$0xff]
    %v838 = vld [vmem:[#allocation5 + $0x260] sm:$0xff]
    %v839 = vld [vmem:[#allocation5 + $0x268] sm:$0xff]
    %v840 = vld [vmem:[#allocation5 + $0x270] sm:$0xff]
    %v841 = vld [vmem:[#allocation5 + $0x278] sm:$0xff]
    %v842 = vld [vmem:[#allocation5 + $0x280] sm:$0xff]
    %v843 = vld [vmem:[#allocation5 + $0x288] sm:$0xff]
    %v844 = vld [vmem:[#allocation5 + $0x290] sm:$0xff]
    %v845 = vld [vmem:[#allocation5 + $0x298] sm:$0xff]
    %v846 = vld [vmem:[#allocation5 + $0x2a0] sm:$0xff]
    %v847 = vld [vmem:[#allocation5 + $0x2a8] sm:$0xff]
    %v848 = vld [vmem:[#allocation5 + $0x2b0] sm:$0xff]
    %v849 = vld [vmem:[#allocation5 + $0x2b8] sm:$0xff]
    %v850 = vld [vmem:[#allocation5 + $0x2c0] sm:$0xff]
    %v851 = vld [vmem:[#allocation5 + $0x2c8] sm:$0xff]
    %v852 = vld [vmem:[#allocation5 + $0x2d0] sm:$0xff]
    %v853 = vld [vmem:[#allocation5 + $0x2d8] sm:$0xff]
    %v854 = vld [vmem:[#allocation5 + $0x2e0] sm:$0xff]
    %v855 = vld [vmem:[#allocation5 + $0x2e8] sm:$0xff]
    %v856 = vld [vmem:[#allocation5 + $0x2f0] sm:$0xff]
    %v857 = vld [vmem:[#allocation5 + $0x2f8] sm:$0xff]
    %v858 = vld [vmem:[#allocation5 + $0x300] sm:$0xff]
    %v859 = vld [vmem:[#allocation5 + $0x308] sm:$0xff]
    %v860 = vld [vmem:[#allocation5 + $0x310] sm:$0xff]
    %v861 = vld [vmem:[#allocation5 + $0x318] sm:$0xff]
    %v862 = vld [vmem:[#allocation5 + $0x320] sm:$0xff]
    %v863 = vld [vmem:[#allocation5 + $0x328] sm:$0xff]
    %v864 = vld [vmem:[#allocation5 + $0x330] sm:$0xff]
    %v865 = vld [vmem:[#allocation5 + $0x338] sm:$0xff]
    %v866 = vld [vmem:[#allocation5 + $0x340] sm:$0xff]
    %v867 = vld [vmem:[#allocation5 + $0x348] sm:$0xff]
    %v868 = vld [vmem:[#allocation5 + $0x350] sm:$0xff]
    %v869 = vld [vmem:[#allocation5 + $0x358] sm:$0xff]
    %v870 = vld [vmem:[#allocation5 + $0x360] sm:$0xff]
    %v871 = vld [vmem:[#allocation5 + $0x368] sm:$0xff]
    %v872 = vld [vmem:[#allocation5 + $0x370] sm:$0xff]
    %v873 = vld [vmem:[#allocation5 + $0x378] sm:$0xff]
    %v874 = vld [vmem:[#allocation5 + $0x380] sm:$0xff]
    %v875 = vld [vmem:[#allocation5 + $0x388] sm:$0xff]
    %v876 = vld [vmem:[#allocation5 + $0x390] sm:$0xff]
    %v877 = vld [vmem:[#allocation5 + $0x398] sm:$0xff]
    %v878 = vld [vmem:[#allocation5 + $0x3a0] sm:$0xff]
    %v879 = vld [vmem:[#allocation5 + $0x3a8] sm:$0xff]
    %v880 = vld [vmem:[#allocation5 + $0x3b0] sm:$0xff]
    %v881 = vld [vmem:[#allocation5 + $0x3b8] sm:$0xff]
    %v882 = vld [vmem:[#allocation5 + $0x3c0] sm:$0xff]
    %v883 = vld [vmem:[#allocation5 + $0x3c8] sm:$0xff]
    %v884 = vld [vmem:[#allocation5 + $0x3d0] sm:$0xff]
    %v885 = vld [vmem:[#allocation5 + $0x3d8] sm:$0xff]
    %v886 = vld [vmem:[#allocation5 + $0x3e0] sm:$0xff]
    %v887 = vld [vmem:[#allocation5 + $0x3e8] sm:$0xff]
    %v888 = vld [vmem:[#allocation5 + $0x3f0] sm:$0xff]
    %v889 = vld [vmem:[#allocation5 + $0x3f8] sm:$0xff]
    %v890 = vld [vmem:[%s8] sm:$0xff]
    %v891 = vld [vmem:[%s8 + $0x8] sm:$0xff]
    %v894 = vlaneseq
    %v895 = vshrl.u32 %v894, 7
    %v896 = vsub.s32 0, %v895
    %v897 = vrot.slane %v890, %v896
    %v898 = vlaneseq
    %v899 = vshrl.u32 %v898, 7
    %v900 = vsub.s32 1, %v899
    %v901 = vrot.slane %v890, %v900
    %v902 = vlaneseq
    %v903 = vshrl.u32 %v902, 7
    %v904 = vsub.s32 2, %v903
    %v905 = vrot.slane %v890, %v904
    %v906 = vlaneseq
    %v907 = vshrl.u32 %v906, 7
    %v908 = vsub.s32 3, %v907
    %v909 = vrot.slane %v890, %v908
    %v910 = vlaneseq
    %v911 = vshrl.u32 %v910, 7
    %v912 = vsub.s32 4, %v911
    %v913 = vrot.slane %v890, %v912
    %v914 = vlaneseq
    %v915 = vshrl.u32 %v914, 7
    %v916 = vsub.s32 5, %v915
    %v917 = vrot.slane %v890, %v916
    %v918 = vlaneseq
    %v919 = vshrl.u32 %v918, 7
    %v920 = vsub.s32 6, %v919
    %v921 = vrot.slane %v890, %v920
    %v922 = vlaneseq
    %v923 = vshrl.u32 %v922, 7
    %v924 = vsub.s32 7, %v923
    %v925 = vrot.slane %v890, %v924
    %v926 = vlaneseq
    %v927 = vshrl.u32 %v926, 7
    %v928 = vsub.s32 0, %v927
    %v929 = vrot.slane %v891, %v928
    %v930 = vlaneseq
    %v931 = vshrl.u32 %v930, 7
    %v932 = vsub.s32 1, %v931
    %v933 = vrot.slane %v891, %v932
    %v934 = vlaneseq
    %v935 = vshrl.u32 %v934, 7
    %v936 = vsub.s32 2, %v935
    %v937 = vrot.slane %v891, %v936
    %v938 = vlaneseq
    %v939 = vshrl.u32 %v938, 7
    %v940 = vsub.s32 3, %v939
    %v941 = vrot.slane %v891, %v940
    %v942 = vlaneseq
    %v943 = vshrl.u32 %v942, 7
    %v944 = vsub.s32 4, %v943
    %v945 = vrot.slane %v891, %v944
    %v946 = vlaneseq
    %v947 = vshrl.u32 %v946, 7
    %v948 = vsub.s32 5, %v947
    %v949 = vrot.slane %v891, %v948
    %v950 = vlaneseq
    %v951 = vshrl.u32 %v950, 7
    %v952 = vsub.s32 6, %v951
    %v953 = vrot.slane %v891, %v952
    %v954 = vlaneseq
    %v955 = vshrl.u32 %v954, 7
    %v956 = vsub.s32 7, %v955
    %v957 = vrot.slane %v891, %v956
    %v1102 = vunpack.c.l.b16 %v762
    %v1103 = vunpack.c.h.b16 %v762
    %v1104 = vunpack.c.l.b16 %v763
    %v1105 = vunpack.c.h.b16 %v763
    %v1106 = vunpack.c.l.b16 %v764
    %v1107 = vunpack.c.h.b16 %v764
    %v1108 = vunpack.c.l.b16 %v765
    %v1109 = vunpack.c.h.b16 %v765
    %v1110 = vunpack.c.l.b16 %v766
    %v1111 = vunpack.c.h.b16 %v766
    %v1112 = vunpack.c.l.b16 %v767
    %v1113 = vunpack.c.h.b16 %v767
    %v1114 = vunpack.c.l.b16 %v768
    %v1115 = vunpack.c.h.b16 %v768
    %v1116 = vunpack.c.l.b16 %v769
    %v1117 = vunpack.c.h.b16 %v769
    %v1118 = vunpack.c.l.b16 %v770
    %v1119 = vunpack.c.h.b16 %v770
    %v1120 = vunpack.c.l.b16 %v771
    %v1121 = vunpack.c.h.b16 %v771
    %v1122 = vunpack.c.l.b16 %v772
    %v1123 = vunpack.c.h.b16 %v772
    %v1124 = vunpack.c.l.b16 %v773
    %v1125 = vunpack.c.h.b16 %v773
    %v1126 = vunpack.c.l.b16 %v774
    %v1127 = vunpack.c.h.b16 %v774
    %v1128 = vunpack.c.l.b16 %v775
    %v1129 = vunpack.c.h.b16 %v775
    %v1130 = vunpack.c.l.b16 %v776
    %v1131 = vunpack.c.h.b16 %v776
    %v1132 = vunpack.c.l.b16 %v777
    %v1133 = vunpack.c.h.b16 %v777
    %v1134 = vunpack.c.l.b16 %v778
    %v1135 = vunpack.c.h.b16 %v778
    %v1136 = vunpack.c.l.b16 %v779
    %v1137 = vunpack.c.h.b16 %v779
    %v1138 = vunpack.c.l.b16 %v780
    %v1139 = vunpack.c.h.b16 %v780
    %v1140 = vunpack.c.l.b16 %v781
    %v1141 = vunpack.c.h.b16 %v781
    %v1142 = vunpack.c.l.b16 %v782
    %v1143 = vunpack.c.h.b16 %v782
    %v1144 = vunpack.c.l.b16 %v783
    %v1145 = vunpack.c.h.b16 %v783
    %v1146 = vunpack.c.l.b16 %v784
    %v1147 = vunpack.c.h.b16 %v784
    %v1148 = vunpack.c.l.b16 %v785
    %v1149 = vunpack.c.h.b16 %v785
    %v1150 = vunpack.c.l.b16 %v786
    %v1151 = vunpack.c.h.b16 %v786
    %v1152 = vunpack.c.l.b16 %v787
    %v1153 = vunpack.c.h.b16 %v787
    %v1154 = vunpack.c.l.b16 %v788
    %v1155 = vunpack.c.h.b16 %v788
    %v1156 = vunpack.c.l.b16 %v789
    %v1157 = vunpack.c.h.b16 %v789
    %v1158 = vunpack.c.l.b16 %v790
    %v1159 = vunpack.c.h.b16 %v790
    %v1160 = vunpack.c.l.b16 %v791
    %v1161 = vunpack.c.h.b16 %v791
    %v1162 = vunpack.c.l.b16 %v792
    %v1163 = vunpack.c.h.b16 %v792
    %v1164 = vunpack.c.l.b16 %v793
    %v1165 = vunpack.c.h.b16 %v793
    %v1166 = vunpack.c.l.b16 %v794
    %v1167 = vunpack.c.h.b16 %v794
    %v1168 = vunpack.c.l.b16 %v795
    %v1169 = vunpack.c.h.b16 %v795
    %v1170 = vunpack.c.l.b16 %v796
    %v1171 = vunpack.c.h.b16 %v796
    %v1172 = vunpack.c.l.b16 %v797
    %v1173 = vunpack.c.h.b16 %v797
    %v1174 = vunpack.c.l.b16 %v798
    %v1175 = vunpack.c.h.b16 %v798
    %v1176 = vunpack.c.l.b16 %v799
    %v1177 = vunpack.c.h.b16 %v799
    %v1178 = vunpack.c.l.b16 %v800
    %v1179 = vunpack.c.h.b16 %v800
    %v1180 = vunpack.c.l.b16 %v801
    %v1181 = vunpack.c.h.b16 %v801
    %v1182 = vunpack.c.l.b16 %v802
    %v1183 = vunpack.c.h.b16 %v802
    %v1184 = vunpack.c.l.b16 %v803
    %v1185 = vunpack.c.h.b16 %v803
    %v1186 = vunpack.c.l.b16 %v804
    %v1187 = vunpack.c.h.b16 %v804
    %v1188 = vunpack.c.l.b16 %v805
    %v1189 = vunpack.c.h.b16 %v805
    %v1190 = vunpack.c.l.b16 %v806
    %v1191 = vunpack.c.h.b16 %v806
    %v1192 = vunpack.c.l.b16 %v807
    %v1193 = vunpack.c.h.b16 %v807
    %v1194 = vunpack.c.l.b16 %v808
    %v1195 = vunpack.c.h.b16 %v808
    %v1196 = vunpack.c.l.b16 %v809
    %v1197 = vunpack.c.h.b16 %v809
    %v1198 = vunpack.c.l.b16 %v810
    %v1199 = vunpack.c.h.b16 %v810
    %v1200 = vunpack.c.l.b16 %v811
    %v1201 = vunpack.c.h.b16 %v811
    %v1202 = vunpack.c.l.b16 %v812
    %v1203 = vunpack.c.h.b16 %v812
    %v1204 = vunpack.c.l.b16 %v813
    %v1205 = vunpack.c.h.b16 %v813
    %v1206 = vunpack.c.l.b16 %v814
    %v1207 = vunpack.c.h.b16 %v814
    %v1208 = vunpack.c.l.b16 %v815
    %v1209 = vunpack.c.h.b16 %v815
    %v1210 = vunpack.c.l.b16 %v816
    %v1211 = vunpack.c.h.b16 %v816
    %v1212 = vunpack.c.l.b16 %v817
    %v1213 = vunpack.c.h.b16 %v817
    %v1214 = vunpack.c.l.b16 %v818
    %v1215 = vunpack.c.h.b16 %v818
    %v1216 = vunpack.c.l.b16 %v819
    %v1217 = vunpack.c.h.b16 %v819
    %v1218 = vunpack.c.l.b16 %v820
    %v1219 = vunpack.c.h.b16 %v820
    %v1220 = vunpack.c.l.b16 %v821
    %v1221 = vunpack.c.h.b16 %v821
    %v1222 = vunpack.c.l.b16 %v822
    %v1223 = vunpack.c.h.b16 %v822
    %v1224 = vunpack.c.l.b16 %v823
    %v1225 = vunpack.c.h.b16 %v823
    %v1226 = vunpack.c.l.b16 %v824
    %v1227 = vunpack.c.h.b16 %v824
    %v1228 = vunpack.c.l.b16 %v825
    %v1229 = vunpack.c.h.b16 %v825
    %v1230 = vunpack.c.l.b16 %v826
    %v1231 = vunpack.c.h.b16 %v826
    %v1232 = vunpack.c.l.b16 %v827
    %v1233 = vunpack.c.h.b16 %v827
    %v1234 = vunpack.c.l.b16 %v828
    %v1235 = vunpack.c.h.b16 %v828
    %v1236 = vunpack.c.l.b16 %v829
    %v1237 = vunpack.c.h.b16 %v829
    %v1238 = vunpack.c.l.b16 %v830
    %v1239 = vunpack.c.h.b16 %v830
    %v1240 = vunpack.c.l.b16 %v831
    %v1241 = vunpack.c.h.b16 %v831
    %v1242 = vunpack.c.l.b16 %v832
    %v1243 = vunpack.c.h.b16 %v832
    %v1244 = vunpack.c.l.b16 %v833
    %v1245 = vunpack.c.h.b16 %v833
    %v1246 = vunpack.c.l.b16 %v834
    %v1247 = vunpack.c.h.b16 %v834
    %v1248 = vunpack.c.l.b16 %v835
    %v1249 = vunpack.c.h.b16 %v835
    %v1250 = vunpack.c.l.b16 %v836
    %v1251 = vunpack.c.h.b16 %v836
    %v1252 = vunpack.c.l.b16 %v837
    %v1253 = vunpack.c.h.b16 %v837
    %v1254 = vunpack.c.l.b16 %v838
    %v1255 = vunpack.c.h.b16 %v838
    %v1256 = vunpack.c.l.b16 %v839
    %v1257 = vunpack.c.h.b16 %v839
    %v1258 = vunpack.c.l.b16 %v840
    %v1259 = vunpack.c.h.b16 %v840
    %v1260 = vunpack.c.l.b16 %v841
    %v1261 = vunpack.c.h.b16 %v841
    %v1262 = vunpack.c.l.b16 %v842
    %v1263 = vunpack.c.h.b16 %v842
    %v1264 = vunpack.c.l.b16 %v843
    %v1265 = vunpack.c.h.b16 %v843
    %v1266 = vunpack.c.l.b16 %v844
    %v1267 = vunpack.c.h.b16 %v844
    %v1268 = vunpack.c.l.b16 %v845
    %v1269 = vunpack.c.h.b16 %v845
    %v1270 = vunpack.c.l.b16 %v846
    %v1271 = vunpack.c.h.b16 %v846
    %v1272 = vunpack.c.l.b16 %v847
    %v1273 = vunpack.c.h.b16 %v847
    %v1274 = vunpack.c.l.b16 %v848
    %v1275 = vunpack.c.h.b16 %v848
    %v1276 = vunpack.c.l.b16 %v849
    %v1277 = vunpack.c.h.b16 %v849
    %v1278 = vunpack.c.l.b16 %v850
    %v1279 = vunpack.c.h.b16 %v850
    %v1280 = vunpack.c.l.b16 %v851
    %v1281 = vunpack.c.h.b16 %v851
    %v1282 = vunpack.c.l.b16 %v852
    %v1283 = vunpack.c.h.b16 %v852
    %v1284 = vunpack.c.l.b16 %v853
    %v1285 = vunpack.c.h.b16 %v853
    %v1286 = vunpack.c.l.b16 %v854
    %v1287 = vunpack.c.h.b16 %v854
    %v1288 = vunpack.c.l.b16 %v855
    %v1289 = vunpack.c.h.b16 %v855
    %v1290 = vunpack.c.l.b16 %v856
    %v1291 = vunpack.c.h.b16 %v856
    %v1292 = vunpack.c.l.b16 %v857
    %v1293 = vunpack.c.h.b16 %v857
    %v1294 = vunpack.c.l.b16 %v858
    %v1295 = vunpack.c.h.b16 %v858
    %v1296 = vunpack.c.l.b16 %v859
    %v1297 = vunpack.c.h.b16 %v859
    %v1298 = vunpack.c.l.b16 %v860
    %v1299 = vunpack.c.h.b16 %v860
    %v1300 = vunpack.c.l.b16 %v861
    %v1301 = vunpack.c.h.b16 %v861
    %v1302 = vunpack.c.l.b16 %v862
    %v1303 = vunpack.c.h.b16 %v862
    %v1304 = vunpack.c.l.b16 %v863
    %v1305 = vunpack.c.h.b16 %v863
    %v1306 = vunpack.c.l.b16 %v864
    %v1307 = vunpack.c.h.b16 %v864
    %v1308 = vunpack.c.l.b16 %v865
    %v1309 = vunpack.c.h.b16 %v865
    %v1310 = vunpack.c.l.b16 %v866
    %v1311 = vunpack.c.h.b16 %v866
    %v1312 = vunpack.c.l.b16 %v867
    %v1313 = vunpack.c.h.b16 %v867
    %v1314 = vunpack.c.l.b16 %v868
    %v1315 = vunpack.c.h.b16 %v868
    %v1316 = vunpack.c.l.b16 %v869
    %v1317 = vunpack.c.h.b16 %v869
    %v1318 = vunpack.c.l.b16 %v870
    %v1319 = vunpack.c.h.b16 %v870
    %v1320 = vunpack.c.l.b16 %v871
    %v1321 = vunpack.c.h.b16 %v871
    %v1322 = vunpack.c.l.b16 %v872
    %v1323 = vunpack.c.h.b16 %v872
    %v1324 = vunpack.c.l.b16 %v873
    %v1325 = vunpack.c.h.b16 %v873
    %v1326 = vunpack.c.l.b16 %v874
    %v1327 = vunpack.c.h.b16 %v874
    %v1328 = vunpack.c.l.b16 %v875
    %v1329 = vunpack.c.h.b16 %v875
    %v1330 = vunpack.c.l.b16 %v876
    %v1331 = vunpack.c.h.b16 %v876
    %v1332 = vunpack.c.l.b16 %v877
    %v1333 = vunpack.c.h.b16 %v877
    %v1334 = vunpack.c.l.b16 %v878
    %v1335 = vunpack.c.h.b16 %v878
    %v1336 = vunpack.c.l.b16 %v879
    %v1337 = vunpack.c.h.b16 %v879
    %v1338 = vunpack.c.l.b16 %v880
    %v1339 = vunpack.c.h.b16 %v880
    %v1340 = vunpack.c.l.b16 %v881
    %v1341 = vunpack.c.h.b16 %v881
    %v1342 = vunpack.c.l.b16 %v882
    %v1343 = vunpack.c.h.b16 %v882
    %v1344 = vunpack.c.l.b16 %v883
    %v1345 = vunpack.c.h.b16 %v883
    %v1346 = vunpack.c.l.b16 %v884
    %v1347 = vunpack.c.h.b16 %v884
    %v1348 = vunpack.c.l.b16 %v885
    %v1349 = vunpack.c.h.b16 %v885
    %v1350 = vunpack.c.l.b16 %v886
    %v1351 = vunpack.c.h.b16 %v886
    %v1352 = vunpack.c.l.b16 %v887
    %v1353 = vunpack.c.h.b16 %v887
    %v1354 = vunpack.c.l.b16 %v888
    %v1355 = vunpack.c.h.b16 %v888
    %v1356 = vunpack.c.l.b16 %v889
    %v1357 = vunpack.c.h.b16 %v889
    %v1358 = vpack.c.b16 %v1118, %v1102
    %v1359 = vpack.c.b16 %v1119, %v1103
    %v1360 = vpack.c.b16 %v1120, %v1104
    %v1361 = vpack.c.b16 %v1121, %v1105
    %v1362 = vpack.c.b16 %v1122, %v1106
    %v1363 = vpack.c.b16 %v1123, %v1107
    %v1364 = vpack.c.b16 %v1124, %v1108
    %v1365 = vpack.c.b16 %v1125, %v1109
    %v1366 = vpack.c.b16 %v1126, %v1110
    %v1367 = vpack.c.b16 %v1127, %v1111
    %v1368 = vpack.c.b16 %v1128, %v1112
    %v1369 = vpack.c.b16 %v1129, %v1113
    %v1370 = vpack.c.b16 %v1130, %v1114
    %v1371 = vpack.c.b16 %v1131, %v1115
    %v1372 = vpack.c.b16 %v1132, %v1116
    %v1373 = vpack.c.b16 %v1133, %v1117
    %v1374 = vpack.c.b16 %v1150, %v1134
    %v1375 = vpack.c.b16 %v1151, %v1135
    %v1376 = vpack.c.b16 %v1152, %v1136
    %v1377 = vpack.c.b16 %v1153, %v1137
    %v1378 = vpack.c.b16 %v1154, %v1138
    %v1379 = vpack.c.b16 %v1155, %v1139
    %v1380 = vpack.c.b16 %v1156, %v1140
    %v1381 = vpack.c.b16 %v1157, %v1141
    %v1382 = vpack.c.b16 %v1158, %v1142
    %v1383 = vpack.c.b16 %v1159, %v1143
    %v1384 = vpack.c.b16 %v1160, %v1144
    %v1385 = vpack.c.b16 %v1161, %v1145
    %v1386 = vpack.c.b16 %v1162, %v1146
    %v1387 = vpack.c.b16 %v1163, %v1147
    %v1388 = vpack.c.b16 %v1164, %v1148
    %v1389 = vpack.c.b16 %v1165, %v1149
    %v1390 = vpack.c.b16 %v1182, %v1166
    %v1391 = vpack.c.b16 %v1183, %v1167
    %v1392 = vpack.c.b16 %v1184, %v1168
    %v1393 = vpack.c.b16 %v1185, %v1169
    %v1394 = vpack.c.b16 %v1186, %v1170
    %v1395 = vpack.c.b16 %v1187, %v1171
    %v1396 = vpack.c.b16 %v1188, %v1172
    %v1397 = vpack.c.b16 %v1189, %v1173
    %v1398 = vpack.c.b16 %v1190, %v1174
    %v1399 = vpack.c.b16 %v1191, %v1175
    %v1400 = vpack.c.b16 %v1192, %v1176
    %v1401 = vpack.c.b16 %v1193, %v1177
    %v1402 = vpack.c.b16 %v1194, %v1178
    %v1403 = vpack.c.b16 %v1195, %v1179
    %v1404 = vpack.c.b16 %v1196, %v1180
    %v1405 = vpack.c.b16 %v1197, %v1181
    %v1406 = vpack.c.b16 %v1214, %v1198
    %v1407 = vpack.c.b16 %v1215, %v1199
    %v1408 = vpack.c.b16 %v1216, %v1200
    %v1409 = vpack.c.b16 %v1217, %v1201
    %v1410 = vpack.c.b16 %v1218, %v1202
    %v1411 = vpack.c.b16 %v1219, %v1203
    %v1412 = vpack.c.b16 %v1220, %v1204
    %v1413 = vpack.c.b16 %v1221, %v1205
    %v1414 = vpack.c.b16 %v1222, %v1206
    %v1415 = vpack.c.b16 %v1223, %v1207
    %v1416 = vpack.c.b16 %v1224, %v1208
    %v1417 = vpack.c.b16 %v1225, %v1209
    %v1418 = vpack.c.b16 %v1226, %v1210
    %v1419 = vpack.c.b16 %v1227, %v1211
    %v1420 = vpack.c.b16 %v1228, %v1212
    %v1421 = vpack.c.b16 %v1229, %v1213
    %v1422 = vpack.c.b16 %v1246, %v1230
    %v1423 = vpack.c.b16 %v1247, %v1231
    %v1424 = vpack.c.b16 %v1248, %v1232
    %v1425 = vpack.c.b16 %v1249, %v1233
    %v1426 = vpack.c.b16 %v1250, %v1234
    %v1427 = vpack.c.b16 %v1251, %v1235
    %v1428 = vpack.c.b16 %v1252, %v1236
    %v1429 = vpack.c.b16 %v1253, %v1237
    %v1430 = vpack.c.b16 %v1254, %v1238
    %v1431 = vpack.c.b16 %v1255, %v1239
    %v1432 = vpack.c.b16 %v1256, %v1240
    %v1433 = vpack.c.b16 %v1257, %v1241
    %v1434 = vpack.c.b16 %v1258, %v1242
    %v1435 = vpack.c.b16 %v1259, %v1243
    %v1436 = vpack.c.b16 %v1260, %v1244
    %v1437 = vpack.c.b16 %v1261, %v1245
    %v1438 = vpack.c.b16 %v1278, %v1262
    %v1439 = vpack.c.b16 %v1279, %v1263
    %v1440 = vpack.c.b16 %v1280, %v1264
    %v1441 = vpack.c.b16 %v1281, %v1265
    %v1442 = vpack.c.b16 %v1282, %v1266
    %v1443 = vpack.c.b16 %v1283, %v1267
    %v1444 = vpack.c.b16 %v1284, %v1268
    %v1445 = vpack.c.b16 %v1285, %v1269
    %v1446 = vpack.c.b16 %v1286, %v1270
    %v1447 = vpack.c.b16 %v1287, %v1271
    %v1448 = vpack.c.b16 %v1288, %v1272
    %v1449 = vpack.c.b16 %v1289, %v1273
    %v1450 = vpack.c.b16 %v1290, %v1274
    %v1451 = vpack.c.b16 %v1291, %v1275
    %v1452 = vpack.c.b16 %v1292, %v1276
    %v1453 = vpack.c.b16 %v1293, %v1277
    %v1454 = vpack.c.b16 %v1310, %v1294
    %v1455 = vpack.c.b16 %v1311, %v1295
    %v1456 = vpack.c.b16 %v1312, %v1296
    %v1457 = vpack.c.b16 %v1313, %v1297
    %v1458 = vpack.c.b16 %v1314, %v1298
    %v1459 = vpack.c.b16 %v1315, %v1299
    %v1460 = vpack.c.b16 %v1316, %v1300
    %v1461 = vpack.c.b16 %v1317, %v1301
    %v1462 = vpack.c.b16 %v1318, %v1302
    %v1463 = vpack.c.b16 %v1319, %v1303
    %v1464 = vpack.c.b16 %v1320, %v1304
    %v1465 = vpack.c.b16 %v1321, %v1305
    %v1466 = vpack.c.b16 %v1322, %v1306
    %v1467 = vpack.c.b16 %v1323, %v1307
    %v1468 = vpack.c.b16 %v1324, %v1308
    %v1469 = vpack.c.b16 %v1325, %v1309
    %v1470 = vpack.c.b16 %v1342, %v1326
    %v1471 = vpack.c.b16 %v1343, %v1327
    %v1472 = vpack.c.b16 %v1344, %v1328
    %v1473 = vpack.c.b16 %v1345, %v1329
    %v1474 = vpack.c.b16 %v1346, %v1330
    %v1475 = vpack.c.b16 %v1347, %v1331
    %v1476 = vpack.c.b16 %v1348, %v1332
    %v1477 = vpack.c.b16 %v1349, %v1333
    %v1478 = vpack.c.b16 %v1350, %v1334
    %v1479 = vpack.c.b16 %v1351, %v1335
    %v1480 = vpack.c.b16 %v1352, %v1336
    %v1481 = vpack.c.b16 %v1353, %v1337
    %v1482 = vpack.c.b16 %v1354, %v1338
    %v1483 = vpack.c.b16 %v1355, %v1339
    %v1484 = vpack.c.b16 %v1356, %v1340
    %v1485 = vpack.c.b16 %v1357, %v1341
    %1614 = vmatprep.subr.bf16.mxu0 %v1359
    %1615 = vmatpush1.bf16.msra.mxu0 %v1358
    %1616 = vmatprep.subr.bf16.mxu0 %v1375
    %1617 = vmatpush1.bf16.msra.mxu0 %v1374
    %1618 = vmatprep.subr.bf16.mxu0 %v1391
    %1619 = vmatpush1.bf16.msra.mxu0 %v1390
    %1620 = vmatprep.subr.bf16.mxu0 %v1407
    %1621 = vmatpush1.bf16.msra.mxu0 %v1406
    %1622 = vmatprep.subr.bf16.mxu0 %v1423
    %1623 = vmatpush1.bf16.msra.mxu0 %v1422
    %1624 = vmatprep.subr.bf16.mxu0 %v1439
    %1625 = vmatpush1.bf16.msra.mxu0 %v1438
    %1626 = vmatprep.subr.bf16.mxu0 %v1455
    %1627 = vmatpush1.bf16.msra.mxu0 %v1454
    %1628 = vmatprep.subr.bf16.mxu0 %v1471
    %1629 = vmatpush1.bf16.msra.mxu0 %v1470
    %1630 = vmatprep.subr.bf16.mxu0 0
    %1631 = vmatpush1.bf16.msra.mxu0 0
    %1632 = vmatprep.subr.bf16.mxu0 0
    %1633 = vmatpush1.bf16.msra.mxu0 0
    %1634 = vmatprep.subr.bf16.mxu0 0
    %1635 = vmatpush1.bf16.msra.mxu0 0
    %1636 = vmatprep.subr.bf16.mxu0 0
    %1637 = vmatpush1.bf16.msra.mxu0 0
    %1638 = vmatprep.subr.bf16.mxu0 0
    %1639 = vmatpush1.bf16.msra.mxu0 0
    %1640 = vmatprep.subr.bf16.mxu0 0
    %1641 = vmatpush1.bf16.msra.mxu0 0
    %1642 = vmatprep.subr.bf16.mxu0 0
    %1643 = vmatpush1.bf16.msra.mxu0 0
    %1644 = vmatprep.subr.bf16.mxu0 0
    %1645 = vmatpush1.bf16.msra.mxu0 0
    %1646 = vmatprep.mubr.bf16.mxu0 0
    %1647 = vmatmul.mubr.bf16.gmra.mrb[0].mxu0 %v754
    %v1648 = vpop.f32.mrb[0].mxu0
    %v1649 = vadd.f32 %v897, %v1648
    %v1650 = vpop.f32.mrb[0].mxu0
    %v1651 = vadd.f32 %v901, %v1650
    %v1652 = vpop.f32.mrb[0].mxu0
    %v1653 = vadd.f32 %v897, %v1652
    %v1654 = vpop.f32.mrb[0].mxu0
    %v1655 = vadd.f32 %v901, %v1654
    %1656 = vmatprep.mubr.bf16.mxu0 0
    %1657 = vmatmul.mubr.bf16.gmra.mrb[0].mxu0 %v755
    %v1658 = vpop.f32.mrb[0].mxu0
    %v1659 = vadd.f32 %v897, %v1658
    %v1660 = vpop.f32.mrb[0].mxu0
    %v1661 = vadd.f32 %v901, %v1660
    %v1662 = vpop.f32.mrb[0].mxu0
    %v1663 = vadd.f32 %v897, %v1662
    %v1664 = vpop.f32.mrb[0].mxu0
    %v1665 = vadd.f32 %v901, %v1664
    %1666 = vmatprep.mubr.bf16.mxu0 0
    %1667 = vmatmul.mubr.bf16.gmra.mrb[0].mxu0 %v756
    %v1668 = vpop.f32.mrb[0].mxu0
    %v1669 = vadd.f32 %v897, %v1668
    %v1670 = vpop.f32.mrb[0].mxu0
    %v1671 = vadd.f32 %v901, %v1670
    %v1672 = vpop.f32.mrb[0].mxu0
    %v1673 = vadd.f32 %v897, %v1672
    %v1674 = vpop.f32.mrb[0].mxu0
    %v1675 = vadd.f32 %v901, %v1674
    %1676 = vmatprep.mubr.bf16.mxu0 0
    %1677 = vmatmul.mubr.bf16.gmra.mrb[0].mxu0 %v757
    %v1678 = vpop.f32.mrb[0].mxu0
    %v1679 = vadd.f32 %v897, %v1678
    %v1680 = vpop.f32.mrb[0].mxu0
    %v1681 = vadd.f32 %v901, %v1680
    %v1682 = vpop.f32.mrb[0].mxu0
    %v1683 = vadd.f32 %v897, %v1682
    %v1684 = vpop.f32.mrb[0].mxu0
    %v1685 = vadd.f32 %v901, %v1684
    %1686 = vmatprep.mubr.bf16.mxu0 0
    %1687 = vmatmul.mubr.bf16.gmra.mrb[0].mxu0 %v758
    %v1688 = vpop.f32.mrb[0].mxu0
    %v1689 = vadd.f32 %v897, %v1688
    %v1690 = vpop.f32.mrb[0].mxu0
    %v1691 = vadd.f32 %v901, %v1690
    %v1692 = vpop.f32.mrb[0].mxu0
    %v1693 = vadd.f32 %v897, %v1692
    %v1694 = vpop.f32.mrb[0].mxu0
    %v1695 = vadd.f32 %v901, %v1694
    %1696 = vmatprep.mubr.bf16.mxu0 0
    %1697 = vmatmul.mubr.bf16.gmra.mrb[0].mxu0 %v759
    %v1698 = vpop.f32.mrb[0].mxu0
    %v1699 = vadd.f32 %v897, %v1698
    %v1700 = vpop.f32.mrb[0].mxu0
    %v1701 = vadd.f32 %v901, %v1700
    %v1702 = vpop.f32.mrb[0].mxu0
    %v1703 = vadd.f32 %v897, %v1702
    %v1704 = vpop.f32.mrb[0].mxu0
    %v1705 = vadd.f32 %v901, %v1704
    %1706 = vmatprep.mubr.bf16.mxu0 0
    %1707 = vmatmul.mubr.bf16.gmra.mrb[0].mxu0 %v760
    %v1708 = vpop.f32.mrb[0].mxu0
    %v1709 = vadd.f32 %v897, %v1708
    %v1710 = vpop.f32.mrb[0].mxu0
    %v1711 = vadd.f32 %v901, %v1710
    %v1712 = vpop.f32.mrb[0].mxu0
    %v1713 = vadd.f32 %v897, %v1712
    %v1714 = vpop.f32.mrb[0].mxu0
    %v1715 = vadd.f32 %v901, %v1714
    %1716 = vmatprep.mubr.bf16.mxu0 0
    %1717 = vmatmul.mubr.bf16.gmra.mrb[0].mxu0 %v761
    %v1718 = vpop.f32.mrb[0].mxu0
    %v1719 = vadd.f32 %v897, %v1718
    %v1720 = vpop.f32.mrb[0].mxu0
    %v1721 = vadd.f32 %v901, %v1720
    %v1722 = vpop.f32.mrb[0].mxu0
    %v1723 = vadd.f32 %v897, %v1722
    %v1724 = vpop.f32.mrb[0].mxu0
    %v1725 = vadd.f32 %v901, %v1724
    %1726 = vdwg.mxu0
    %1727 = vmatprep.subr.bf16.mxu0 %v1361
    %1728 = vmatpush1.bf16.msra.mxu0 %v1360
    %1729 = vmatprep.subr.bf16.mxu0 %v1377
    %1730 = vmatpush1.bf16.msra.mxu0 %v1376
    %1731 = vmatprep.subr.bf16.mxu0 %v1393
    %1732 = vmatpush1.bf16.msra.mxu0 %v1392
    %1733 = vmatprep.subr.bf16.mxu0 %v1409
    %1734 = vmatpush1.bf16.msra.mxu0 %v1408
    %1735 = vmatprep.subr.bf16.mxu0 %v1425
    %1736 = vmatpush1.bf16.msra.mxu0 %v1424
    %1737 = vmatprep.subr.bf16.mxu0 %v1441
    %1738 = vmatpush1.bf16.msra.mxu0 %v1440
    %1739 = vmatprep.subr.bf16.mxu0 %v1457
    %1740 = vmatpush1.bf16.msra.mxu0 %v1456
    %1741 = vmatprep.subr.bf16.mxu0 %v1473
    %1742 = vmatpush1.bf16.msra.mxu0 %v1472
    %1743 = vmatprep.subr.bf16.mxu0 0
    %1744 = vmatpush1.bf16.msra.mxu0 0
    %1745 = vmatprep.subr.bf16.mxu0 0
    %1746 = vmatpush1.bf16.msra.mxu0 0
    %1747 = vmatprep.subr.bf16.mxu0 0
    %1748 = vmatpush1.bf16.msra.mxu0 0
    %1749 = vmatprep.subr.bf16.mxu0 0
    %1750 = vmatpush1.bf16.msra.mxu0 0
    %1751 = vmatprep.subr.bf16.mxu0 0
    %1752 = vmatpush1.bf16.msra.mxu0 0
    %1753 = vmatprep.subr.bf16.mxu0 0
    %1754 = vmatpush1.bf16.msra.mxu0 0
    %1755 = vmatprep.subr.bf16.mxu0 0
    %1756 = vmatpush1.bf16.msra.mxu0 0
    %1757 = vmatprep.subr.bf16.mxu0 0
    %1758 = vmatpush1.bf16.msra.mxu0 0
    %1759 = vmatprep.mubr.bf16.mxu0 0
    %1760 = vmatmul.mubr.bf16.gmra.mrb[0].mxu0 %v754
    %v1761 = vpop.f32.mrb[0].mxu0
    %v1762 = vadd.f32 %v905, %v1761
    %v1763 = vpop.f32.mrb[0].mxu0
    %v1764 = vadd.f32 %v909, %v1763
    %v1765 = vpop.f32.mrb[0].mxu0
    %v1766 = vadd.f32 %v905, %v1765
    %v1767 = vpop.f32.mrb[0].mxu0
    %v1768 = vadd.f32 %v909, %v1767
    %1769 = vmatprep.mubr.bf16.mxu0 0
    %1770 = vmatmul.mubr.bf16.gmra.mrb[0].mxu0 %v755
    %v1771 = vpop.f32.mrb[0].mxu0
    %v1772 = vadd.f32 %v905, %v1771
    %v1773 = vpop.f32.mrb[0].mxu0
    %v1774 = vadd.f32 %v909, %v1773
    %v1775 = vpop.f32.mrb[0].mxu0
    %v1776 = vadd.f32 %v905, %v1775
    %v1777 = vpop.f32.mrb[0].mxu0
    %v1778 = vadd.f32 %v909, %v1777
    %1779 = vmatprep.mubr.bf16.mxu0 0
    %1780 = vmatmul.mubr.bf16.gmra.mrb[0].mxu0 %v756
    %v1781 = vpop.f32.mrb[0].mxu0
    %v1782 = vadd.f32 %v905, %v1781
    %v1783 = vpop.f32.mrb[0].mxu0
    %v1784 = vadd.f32 %v909, %v1783
    %v1785 = vpop.f32.mrb[0].mxu0
    %v1786 = vadd.f32 %v905, %v1785
    %v1787 = vpop.f32.mrb[0].mxu0
    %v1788 = vadd.f32 %v909, %v1787
    %1789 = vmatprep.mubr.bf16.mxu0 0
    %1790 = vmatmul.mubr.bf16.gmra.mrb[0].mxu0 %v757
    %v1791 = vpop.f32.mrb[0].mxu0
    %v1792 = vadd.f32 %v905, %v1791
    %v1793 = vpop.f32.mrb[0].mxu0
    %v1794 = vadd.f32 %v909, %v1793
    %v1795 = vpop.f32.mrb[0].mxu0
    %v1796 = vadd.f32 %v905, %v1795
    %v1797 = vpop.f32.mrb[0].mxu0
    %v1798 = vadd.f32 %v909, %v1797
    %1799 = vmatprep.mubr.bf16.mxu0 0
    %1800 = vmatmul.mubr.bf16.gmra.mrb[0].mxu0 %v758
    %v1801 = vpop.f32.mrb[0].mxu0
    %v1802 = vadd.f32 %v905, %v1801
    %v1803 = vpop.f32.mrb[0].mxu0
    %v1804 = vadd.f32 %v909, %v1803
    %v1805 = vpop.f32.mrb[0].mxu0
    %v1806 = vadd.f32 %v905, %v1805
    %v1807 = vpop.f32.mrb[0].mxu0
    %v1808 = vadd.f32 %v909, %v1807
    %1809 = vmatprep.mubr.bf16.mxu0 0
    %1810 = vmatmul.mubr.bf16.gmra.mrb[0].mxu0 %v759
    %v1811 = vpop.f32.mrb[0].mxu0
    %v1812 = vadd.f32 %v905, %v1811
    %v1813 = vpop.f32.mrb[0].mxu0
    %v1814 = vadd.f32 %v909, %v1813
    %v1815 = vpop.f32.mrb[0].mxu0
    %v1816 = vadd.f32 %v905, %v1815
    %v1817 = vpop.f32.mrb[0].mxu0
    %v1818 = vadd.f32 %v909, %v1817
    %1819 = vmatprep.mubr.bf16.mxu0 0
    %1820 = vmatmul.mubr.bf16.gmra.mrb[0].mxu0 %v760
    %v1821 = vpop.f32.mrb[0].mxu0
    %v1822 = vadd.f32 %v905, %v1821
    %v1823 = vpop.f32.mrb[0].mxu0
    %v1824 = vadd.f32 %v909, %v1823
    %v1825 = vpop.f32.mrb[0].mxu0
    %v1826 = vadd.f32 %v905, %v1825
    %v1827 = vpop.f32.mrb[0].mxu0
    %v1828 = vadd.f32 %v909, %v1827
    %1829 = vmatprep.mubr.bf16.mxu0 0
    %1830 = vmatmul.mubr.bf16.gmra.mrb[0].mxu0 %v761
    %v1831 = vpop.f32.mrb[0].mxu0
    %v1832 = vadd.f32 %v905, %v1831
    %v1833 = vpop.f32.mrb[0].mxu0
    %v1834 = vadd.f32 %v909, %v1833
    %v1835 = vpop.f32.mrb[0].mxu0
    %v1836 = vadd.f32 %v905, %v1835
    %v1837 = vpop.f32.mrb[0].mxu0
    %v1838 = vadd.f32 %v909, %v1837
    %1839 = vdwg.mxu0
    %1840 = vmatprep.subr.bf16.mxu0 %v1363
    %1841 = vmatpush1.bf16.msra.mxu0 %v1362
    %1842 = vmatprep.subr.bf16.mxu0 %v1379
    %1843 = vmatpush1.bf16.msra.mxu0 %v1378
    %1844 = vmatprep.subr.bf16.mxu0 %v1395
    %1845 = vmatpush1.bf16.msra.mxu0 %v1394
    %1846 = vmatprep.subr.bf16.mxu0 %v1411
    %1847 = vmatpush1.bf16.msra.mxu0 %v1410
    %1848 = vmatprep.subr.bf16.mxu0 %v1427
    %1849 = vmatpush1.bf16.msra.mxu0 %v1426
    %1850 = vmatprep.subr.bf16.mxu0 %v1443
    %1851 = vmatpush1.bf16.msra.mxu0 %v1442
    %1852 = vmatprep.subr.bf16.mxu0 %v1459
    %1853 = vmatpush1.bf16.msra.mxu0 %v1458
    %1854 = vmatprep.subr.bf16.mxu0 %v1475
    %1855 = vmatpush1.bf16.msra.mxu0 %v1474
    %1856 = vmatprep.subr.bf16.mxu0 0
    %1857 = vmatpush1.bf16.msra.mxu0 0
    %1858 = vmatprep.subr.bf16.mxu0 0
    %1859 = vmatpush1.bf16.msra.mxu0 0
    %1860 = vmatprep.subr.bf16.mxu0 0
    %1861 = vmatpush1.bf16.msra.mxu0 0
    %1862 = vmatprep.subr.bf16.mxu0 0
    %1863 = vmatpush1.bf16.msra.mxu0 0
    %1864 = vmatprep.subr.bf16.mxu0 0
    %1865 = vmatpush1.bf16.msra.mxu0 0
    %1866 = vmatprep.subr.bf16.mxu0 0
    %1867 = vmatpush1.bf16.msra.mxu0 0
    %1868 = vmatprep.subr.bf16.mxu0 0
    %1869 = vmatpush1.bf16.msra.mxu0 0
    %1870 = vmatprep.subr.bf16.mxu0 0
    %1871 = vmatpush1.bf16.msra.mxu0 0
    %1872 = vmatprep.mubr.bf16.mxu0 0
    %1873 = vmatmul.mubr.bf16.gmra.mrb[0].mxu0 %v754
    %v1874 = vpop.f32.mrb[0].mxu0
    %v1875 = vadd.f32 %v913, %v1874
    %v1876 = vpop.f32.mrb[0].mxu0
    %v1877 = vadd.f32 %v917, %v1876
    %v1878 = vpop.f32.mrb[0].mxu0
    %v1879 = vadd.f32 %v913, %v1878
    %v1880 = vpop.f32.mrb[0].mxu0
    %v1881 = vadd.f32 %v917, %v1880
    %1882 = vmatprep.mubr.bf16.mxu0 0
    %1883 = vmatmul.mubr.bf16.gmra.mrb[0].mxu0 %v755
    %v1884 = vpop.f32.mrb[0].mxu0
    %v1885 = vadd.f32 %v913, %v1884
    %v1886 = vpop.f32.mrb[0].mxu0
    %v1887 = vadd.f32 %v917, %v1886
    %v1888 = vpop.f32.mrb[0].mxu0
    %v1889 = vadd.f32 %v913, %v1888
    %v1890 = vpop.f32.mrb[0].mxu0
    %v1891 = vadd.f32 %v917, %v1890
    %1892 = vmatprep.mubr.bf16.mxu0 0
    %1893 = vmatmul.mubr.bf16.gmra.mrb[0].mxu0 %v756
    %v1894 = vpop.f32.mrb[0].mxu0
    %v1895 = vadd.f32 %v913, %v1894
    %v1896 = vpop.f32.mrb[0].mxu0
    %v1897 = vadd.f32 %v917, %v1896
    %v1898 = vpop.f32.mrb[0].mxu0
    %v1899 = vadd.f32 %v913, %v1898
    %v1900 = vpop.f32.mrb[0].mxu0
    %v1901 = vadd.f32 %v917, %v1900
    %1902 = vmatprep.mubr.bf16.mxu0 0
    %1903 = vmatmul.mubr.bf16.gmra.mrb[0].mxu0 %v757
    %v1904 = vpop.f32.mrb[0].mxu0
    %v1905 = vadd.f32 %v913, %v1904
    %v1906 = vpop.f32.mrb[0].mxu0
    %v1907 = vadd.f32 %v917, %v1906
    %v1908 = vpop.f32.mrb[0].mxu0
    %v1909 = vadd.f32 %v913, %v1908
    %v1910 = vpop.f32.mrb[0].mxu0
    %v1911 = vadd.f32 %v917, %v1910
    %1912 = vmatprep.mubr.bf16.mxu0 0
    %1913 = vmatmul.mubr.bf16.gmra.mrb[0].mxu0 %v758
    %v1914 = vpop.f32.mrb[0].mxu0
    %v1915 = vadd.f32 %v913, %v1914
    %v1916 = vpop.f32.mrb[0].mxu0
    %v1917 = vadd.f32 %v917, %v1916
    %v1918 = vpop.f32.mrb[0].mxu0
    %v1919 = vadd.f32 %v913, %v1918
    %v1920 = vpop.f32.mrb[0].mxu0
    %v1921 = vadd.f32 %v917, %v1920
    %1922 = vmatprep.mubr.bf16.mxu0 0
    %1923 = vmatmul.mubr.bf16.gmra.mrb[0].mxu0 %v759
    %v1924 = vpop.f32.mrb[0].mxu0
    %v1925 = vadd.f32 %v913, %v1924
    %v1926 = vpop.f32.mrb[0].mxu0
    %v1927 = vadd.f32 %v917, %v1926
    %v1928 = vpop.f32.mrb[0].mxu0
    %v1929 = vadd.f32 %v913, %v1928
    %v1930 = vpop.f32.mrb[0].mxu0
    %v1931 = vadd.f32 %v917, %v1930
    %1932 = vmatprep.mubr.bf16.mxu0 0
    %1933 = vmatmul.mubr.bf16.gmra.mrb[0].mxu0 %v760
    %v1934 = vpop.f32.mrb[0].mxu0
    %v1935 = vadd.f32 %v913, %v1934
    %v1936 = vpop.f32.mrb[0].mxu0
    %v1937 = vadd.f32 %v917, %v1936
    %v1938 = vpop.f32.mrb[0].mxu0
    %v1939 = vadd.f32 %v913, %v1938
    %v1940 = vpop.f32.mrb[0].mxu0
    %v1941 = vadd.f32 %v917, %v1940
    %1942 = vmatprep.mubr.bf16.mxu0 0
    %1943 = vmatmul.mubr.bf16.gmra.mrb[0].mxu0 %v761
    %v1944 = vpop.f32.mrb[0].mxu0
    %v1945 = vadd.f32 %v913, %v1944
    %v1946 = vpop.f32.mrb[0].mxu0
    %v1947 = vadd.f32 %v917, %v1946
    %v1948 = vpop.f32.mrb[0].mxu0
    %v1949 = vadd.f32 %v913, %v1948
    %v1950 = vpop.f32.mrb[0].mxu0
    %v1951 = vadd.f32 %v917, %v1950
    %1952 = vdwg.mxu0
    %1953 = vmatprep.subr.bf16.mxu0 %v1365
    %1954 = vmatpush1.bf16.msra.mxu0 %v1364
    %1955 = vmatprep.subr.bf16.mxu0 %v1381
    %1956 = vmatpush1.bf16.msra.mxu0 %v1380
    %1957 = vmatprep.subr.bf16.mxu0 %v1397
    %1958 = vmatpush1.bf16.msra.mxu0 %v1396
    %1959 = vmatprep.subr.bf16.mxu0 %v1413
    %1960 = vmatpush1.bf16.msra.mxu0 %v1412
    %1961 = vmatprep.subr.bf16.mxu0 %v1429
    %1962 = vmatpush1.bf16.msra.mxu0 %v1428
    %1963 = vmatprep.subr.bf16.mxu0 %v1445
    %1964 = vmatpush1.bf16.msra.mxu0 %v1444
    %1965 = vmatprep.subr.bf16.mxu0 %v1461
    %1966 = vmatpush1.bf16.msra.mxu0 %v1460
    %1967 = vmatprep.subr.bf16.mxu0 %v1477
    %1968 = vmatpush1.bf16.msra.mxu0 %v1476
    %1969 = vmatprep.subr.bf16.mxu0 0
    %1970 = vmatpush1.bf16.msra.mxu0 0
    %1971 = vmatprep.subr.bf16.mxu0 0
    %1972 = vmatpush1.bf16.msra.mxu0 0
    %1973 = vmatprep.subr.bf16.mxu0 0
    %1974 = vmatpush1.bf16.msra.mxu0 0
    %1975 = vmatprep.subr.bf16.mxu0 0
    %1976 = vmatpush1.bf16.msra.mxu0 0
    %1977 = vmatprep.subr.bf16.mxu0 0
    %1978 = vmatpush1.bf16.msra.mxu0 0
    %1979 = vmatprep.subr.bf16.mxu0 0
    %1980 = vmatpush1.bf16.msra.mxu0 0
    %1981 = vmatprep.subr.bf16.mxu0 0
    %1982 = vmatpush1.bf16.msra.mxu0 0
    %1983 = vmatprep.subr.bf16.mxu0 0
    %1984 = vmatpush1.bf16.msra.mxu0 0
    %1985 = vmatprep.mubr.bf16.mxu0 0
    %1986 = vmatmul.mubr.bf16.gmra.mrb[0].mxu0 %v754
    %v1987 = vpop.f32.mrb[0].mxu0
    %v1988 = vadd.f32 %v921, %v1987
    %v1989 = vpop.f32.mrb[0].mxu0
    %v1990 = vadd.f32 %v925, %v1989
    %v1991 = vpop.f32.mrb[0].mxu0
    %v1992 = vadd.f32 %v921, %v1991
    %v1993 = vpop.f32.mrb[0].mxu0
    %v1994 = vadd.f32 %v925, %v1993
    %1995 = vmatprep.mubr.bf16.mxu0 0
    %1996 = vmatmul.mubr.bf16.gmra.mrb[0].mxu0 %v755
    %v1997 = vpop.f32.mrb[0].mxu0
    %v1998 = vadd.f32 %v921, %v1997
    %v1999 = vpop.f32.mrb[0].mxu0
    %v2000 = vadd.f32 %v925, %v1999
    %v2001 = vpop.f32.mrb[0].mxu0
    %v2002 = vadd.f32 %v921, %v2001
    %v2003 = vpop.f32.mrb[0].mxu0
    %v2004 = vadd.f32 %v925, %v2003
    %2005 = vmatprep.mubr.bf16.mxu0 0
    %2006 = vmatmul.mubr.bf16.gmra.mrb[0].mxu0 %v756
    %v2007 = vpop.f32.mrb[0].mxu0
    %v2008 = vadd.f32 %v921, %v2007
    %v2009 = vpop.f32.mrb[0].mxu0
    %v2010 = vadd.f32 %v925, %v2009
    %v2011 = vpop.f32.mrb[0].mxu0
    %v2012 = vadd.f32 %v921, %v2011
    %v2013 = vpop.f32.mrb[0].mxu0
    %v2014 = vadd.f32 %v925, %v2013
    %2015 = vmatprep.mubr.bf16.mxu0 0
    %2016 = vmatmul.mubr.bf16.gmra.mrb[0].mxu0 %v757
    %v2017 = vpop.f32.mrb[0].mxu0
    %v2018 = vadd.f32 %v921, %v2017
    %v2019 = vpop.f32.mrb[0].mxu0
    %v2020 = vadd.f32 %v925, %v2019
    %v2021 = vpop.f32.mrb[0].mxu0
    %v2022 = vadd.f32 %v921, %v2021
    %v2023 = vpop.f32.mrb[0].mxu0
    %v2024 = vadd.f32 %v925, %v2023
    %2025 = vmatprep.mubr.bf16.mxu0 0
    %2026 = vmatmul.mubr.bf16.gmra.mrb[0].mxu0 %v758
    %v2027 = vpop.f32.mrb[0].mxu0
    %v2028 = vadd.f32 %v921, %v2027
    %v2029 = vpop.f32.mrb[0].mxu0
    %v2030 = vadd.f32 %v925, %v2029
    %v2031 = vpop.f32.mrb[0].mxu0
    %v2032 = vadd.f32 %v921, %v2031
    %v2033 = vpop.f32.mrb[0].mxu0
    %v2034 = vadd.f32 %v925, %v2033
    %2035 = vmatprep.mubr.bf16.mxu0 0
    %2036 = vmatmul.mubr.bf16.gmra.mrb[0].mxu0 %v759
    %v2037 = vpop.f32.mrb[0].mxu0
    %v2038 = vadd.f32 %v921, %v2037
    %v2039 = vpop.f32.mrb[0].mxu0
    %v2040 = vadd.f32 %v925, %v2039
    %v2041 = vpop.f32.mrb[0].mxu0
    %v2042 = vadd.f32 %v921, %v2041
    %v2043 = vpop.f32.mrb[0].mxu0
    %v2044 = vadd.f32 %v925, %v2043
    %2045 = vmatprep.mubr.bf16.mxu0 0
    %2046 = vmatmul.mubr.bf16.gmra.mrb[0].mxu0 %v760
    %v2047 = vpop.f32.mrb[0].mxu0
    %v2048 = vadd.f32 %v921, %v2047
    %v2049 = vpop.f32.mrb[0].mxu0
    %v2050 = vadd.f32 %v925, %v2049
    %v2051 = vpop.f32.mrb[0].mxu0
    %v2052 = vadd.f32 %v921, %v2051
    %v2053 = vpop.f32.mrb[0].mxu0
    %v2054 = vadd.f32 %v925, %v2053
    %2055 = vmatprep.mubr.bf16.mxu0 0
    %2056 = vmatmul.mubr.bf16.gmra.mrb[0].mxu0 %v761
    %v2057 = vpop.f32.mrb[0].mxu0
    %v2058 = vadd.f32 %v921, %v2057
    %v2059 = vpop.f32.mrb[0].mxu0
    %v2060 = vadd.f32 %v925, %v2059
    %v2061 = vpop.f32.mrb[0].mxu0
    %v2062 = vadd.f32 %v921, %v2061
    %v2063 = vpop.f32.mrb[0].mxu0
    %v2064 = vadd.f32 %v925, %v2063
    %2065 = vdwg.mxu0
    %2066 = vmatprep.subr.bf16.mxu0 %v1367
    %2067 = vmatpush1.bf16.msra.mxu0 %v1366
    %2068 = vmatprep.subr.bf16.mxu0 %v1383
    %2069 = vmatpush1.bf16.msra.mxu0 %v1382
    %2070 = vmatprep.subr.bf16.mxu0 %v1399
    %2071 = vmatpush1.bf16.msra.mxu0 %v1398
    %2072 = vmatprep.subr.bf16.mxu0 %v1415
    %2073 = vmatpush1.bf16.msra.mxu0 %v1414
    %2074 = vmatprep.subr.bf16.mxu0 %v1431
    %2075 = vmatpush1.bf16.msra.mxu0 %v1430
    %2076 = vmatprep.subr.bf16.mxu0 %v1447
    %2077 = vmatpush1.bf16.msra.mxu0 %v1446
    %2078 = vmatprep.subr.bf16.mxu0 %v1463
    %2079 = vmatpush1.bf16.msra.mxu0 %v1462
    %2080 = vmatprep.subr.bf16.mxu0 %v1479
    %2081 = vmatpush1.bf16.msra.mxu0 %v1478
    %2082 = vmatprep.subr.bf16.mxu0 0
    %2083 = vmatpush1.bf16.msra.mxu0 0
    %2084 = vmatprep.subr.bf16.mxu0 0
    %2085 = vmatpush1.bf16.msra.mxu0 0
    %2086 = vmatprep.subr.bf16.mxu0 0
    %2087 = vmatpush1.bf16.msra.mxu0 0
    %2088 = vmatprep.subr.bf16.mxu0 0
    %2089 = vmatpush1.bf16.msra.mxu0 0
    %2090 = vmatprep.subr.bf16.mxu0 0
    %2091 = vmatpush1.bf16.msra.mxu0 0
    %2092 = vmatprep.subr.bf16.mxu0 0
    %2093 = vmatpush1.bf16.msra.mxu0 0
    %2094 = vmatprep.subr.bf16.mxu0 0
    %2095 = vmatpush1.bf16.msra.mxu0 0
    %2096 = vmatprep.subr.bf16.mxu0 0
    %2097 = vmatpush1.bf16.msra.mxu0 0
    %2098 = vmatprep.mubr.bf16.mxu0 0
    %2099 = vmatmul.mubr.bf16.gmra.mrb[0].mxu0 %v754
    %v2100 = vpop.f32.mrb[0].mxu0
    %v2101 = vadd.f32 %v929, %v2100
    %v2102 = vpop.f32.mrb[0].mxu0
    %v2103 = vadd.f32 %v933, %v2102
    %v2104 = vpop.f32.mrb[0].mxu0
    %v2105 = vadd.f32 %v929, %v2104
    %v2106 = vpop.f32.mrb[0].mxu0
    %v2107 = vadd.f32 %v933, %v2106
    %2108 = vmatprep.mubr.bf16.mxu0 0
    %2109 = vmatmul.mubr.bf16.gmra.mrb[0].mxu0 %v755
    %v2110 = vpop.f32.mrb[0].mxu0
    %v2111 = vadd.f32 %v929, %v2110
    %v2112 = vpop.f32.mrb[0].mxu0
    %v2113 = vadd.f32 %v933, %v2112
    %v2114 = vpop.f32.mrb[0].mxu0
    %v2115 = vadd.f32 %v929, %v2114
    %v2116 = vpop.f32.mrb[0].mxu0
    %v2117 = vadd.f32 %v933, %v2116
    %2118 = vmatprep.mubr.bf16.mxu0 0
    %2119 = vmatmul.mubr.bf16.gmra.mrb[0].mxu0 %v756
    %v2120 = vpop.f32.mrb[0].mxu0
    %v2121 = vadd.f32 %v929, %v2120
    %v2122 = vpop.f32.mrb[0].mxu0
    %v2123 = vadd.f32 %v933, %v2122
    %v2124 = vpop.f32.mrb[0].mxu0
    %v2125 = vadd.f32 %v929, %v2124
    %v2126 = vpop.f32.mrb[0].mxu0
    %v2127 = vadd.f32 %v933, %v2126
    %2128 = vmatprep.mubr.bf16.mxu0 0
    %2129 = vmatmul.mubr.bf16.gmra.mrb[0].mxu0 %v757
    %v2130 = vpop.f32.mrb[0].mxu0
    %v2131 = vadd.f32 %v929, %v2130
    %v2132 = vpop.f32.mrb[0].mxu0
    %v2133 = vadd.f32 %v933, %v2132
    %v2134 = vpop.f32.mrb[0].mxu0
    %v2135 = vadd.f32 %v929, %v2134
    %v2136 = vpop.f32.mrb[0].mxu0
    %v2137 = vadd.f32 %v933, %v2136
    %2138 = vmatprep.mubr.bf16.mxu0 0
    %2139 = vmatmul.mubr.bf16.gmra.mrb[0].mxu0 %v758
    %v2140 = vpop.f32.mrb[0].mxu0
    %v2141 = vadd.f32 %v929, %v2140
    %v2142 = vpop.f32.mrb[0].mxu0
    %v2143 = vadd.f32 %v933, %v2142
    %v2144 = vpop.f32.mrb[0].mxu0
    %v2145 = vadd.f32 %v929, %v2144
    %v2146 = vpop.f32.mrb[0].mxu0
    %v2147 = vadd.f32 %v933, %v2146
    %2148 = vmatprep.mubr.bf16.mxu0 0
    %2149 = vmatmul.mubr.bf16.gmra.mrb[0].mxu0 %v759
    %v2150 = vpop.f32.mrb[0].mxu0
    %v2151 = vadd.f32 %v929, %v2150
    %v2152 = vpop.f32.mrb[0].mxu0
    %v2153 = vadd.f32 %v933, %v2152
    %v2154 = vpop.f32.mrb[0].mxu0
    %v2155 = vadd.f32 %v929, %v2154
    %v2156 = vpop.f32.mrb[0].mxu0
    %v2157 = vadd.f32 %v933, %v2156
    %2158 = vmatprep.mubr.bf16.mxu0 0
    %2159 = vmatmul.mubr.bf16.gmra.mrb[0].mxu0 %v760
    %v2160 = vpop.f32.mrb[0].mxu0
    %v2161 = vadd.f32 %v929, %v2160
    %v2162 = vpop.f32.mrb[0].mxu0
    %v2163 = vadd.f32 %v933, %v2162
    %v2164 = vpop.f32.mrb[0].mxu0
    %v2165 = vadd.f32 %v929, %v2164
    %v2166 = vpop.f32.mrb[0].mxu0
    %v2167 = vadd.f32 %v933, %v2166
    %2168 = vmatprep.mubr.bf16.mxu0 0
    %2169 = vmatmul.mubr.bf16.gmra.mrb[0].mxu0 %v761
    %v2170 = vpop.f32.mrb[0].mxu0
    %v2171 = vadd.f32 %v929, %v2170
    %v2172 = vpop.f32.mrb[0].mxu0
    %v2173 = vadd.f32 %v933, %v2172
    %v2174 = vpop.f32.mrb[0].mxu0
    %v2175 = vadd.f32 %v929, %v2174
    %v2176 = vpop.f32.mrb[0].mxu0
    %v2177 = vadd.f32 %v933, %v2176
    %2178 = vdwg.mxu0
    %2179 = vmatprep.subr.bf16.mxu0 %v1369
    %2180 = vmatpush1.bf16.msra.mxu0 %v1368
    %2181 = vmatprep.subr.bf16.mxu0 %v1385
    %2182 = vmatpush1.bf16.msra.mxu0 %v1384
    %2183 = vmatprep.subr.bf16.mxu0 %v1401
    %2184 = vmatpush1.bf16.msra.mxu0 %v1400
    %2185 = vmatprep.subr.bf16.mxu0 %v1417
    %2186 = vmatpush1.bf16.msra.mxu0 %v1416
    %2187 = vmatprep.subr.bf16.mxu0 %v1433
    %2188 = vmatpush1.bf16.msra.mxu0 %v1432
    %2189 = vmatprep.subr.bf16.mxu0 %v1449
    %2190 = vmatpush1.bf16.msra.mxu0 %v1448
    %2191 = vmatprep.subr.bf16.mxu0 %v1465
    %2192 = vmatpush1.bf16.msra.mxu0 %v1464
    %2193 = vmatprep.subr.bf16.mxu0 %v1481
    %2194 = vmatpush1.bf16.msra.mxu0 %v1480
    %2195 = vmatprep.subr.bf16.mxu0 0
    %2196 = vmatpush1.bf16.msra.mxu0 0
    %2197 = vmatprep.subr.bf16.mxu0 0
    %2198 = vmatpush1.bf16.msra.mxu0 0
    %2199 = vmatprep.subr.bf16.mxu0 0
    %2200 = vmatpush1.bf16.msra.mxu0 0
    %2201 = vmatprep.subr.bf16.mxu0 0
    %2202 = vmatpush1.bf16.msra.mxu0 0
    %2203 = vmatprep.subr.bf16.mxu0 0
    %2204 = vmatpush1.bf16.msra.mxu0 0
    %2205 = vmatprep.subr.bf16.mxu0 0
    %2206 = vmatpush1.bf16.msra.mxu0 0
    %2207 = vmatprep.subr.bf16.mxu0 0
    %2208 = vmatpush1.bf16.msra.mxu0 0
    %2209 = vmatprep.subr.bf16.mxu0 0
    %2210 = vmatpush1.bf16.msra.mxu0 0
    %2211 = vmatprep.mubr.bf16.mxu0 0
    %2212 = vmatmul.mubr.bf16.gmra.mrb[0].mxu0 %v754
    %v2213 = vpop.f32.mrb[0].mxu0
    %v2214 = vadd.f32 %v937, %v2213
    %v2215 = vpop.f32.mrb[0].mxu0
    %v2216 = vadd.f32 %v941, %v2215
    %v2217 = vpop.f32.mrb[0].mxu0
    %v2218 = vadd.f32 %v937, %v2217
    %v2219 = vpop.f32.mrb[0].mxu0
    %v2220 = vadd.f32 %v941, %v2219
    %2221 = vmatprep.mubr.bf16.mxu0 0
    %2222 = vmatmul.mubr.bf16.gmra.mrb[0].mxu0 %v755
    %v2223 = vpop.f32.mrb[0].mxu0
    %v2224 = vadd.f32 %v937, %v2223
    %v2225 = vpop.f32.mrb[0].mxu0
    %v2226 = vadd.f32 %v941, %v2225
    %v2227 = vpop.f32.mrb[0].mxu0
    %v2228 = vadd.f32 %v937, %v2227
    %v2229 = vpop.f32.mrb[0].mxu0
    %v2230 = vadd.f32 %v941, %v2229
    %2231 = vmatprep.mubr.bf16.mxu0 0
    %2232 = vmatmul.mubr.bf16.gmra.mrb[0].mxu0 %v756
    %v2233 = vpop.f32.mrb[0].mxu0
    %v2234 = vadd.f32 %v937, %v2233
    %v2235 = vpop.f32.mrb[0].mxu0
    %v2236 = vadd.f32 %v941, %v2235
    %v2237 = vpop.f32.mrb[0].mxu0
    %v2238 = vadd.f32 %v937, %v2237
    %v2239 = vpop.f32.mrb[0].mxu0
    %v2240 = vadd.f32 %v941, %v2239
    %2241 = vmatprep.mubr.bf16.mxu0 0
    %2242 = vmatmul.mubr.bf16.gmra.mrb[0].mxu0 %v757
    %v2243 = vpop.f32.mrb[0].mxu0
    %v2244 = vadd.f32 %v937, %v2243
    %v2245 = vpop.f32.mrb[0].mxu0
    %v2246 = vadd.f32 %v941, %v2245
    %v2247 = vpop.f32.mrb[0].mxu0
    %v2248 = vadd.f32 %v937, %v2247
    %v2249 = vpop.f32.mrb[0].mxu0
    %v2250 = vadd.f32 %v941, %v2249
    %2251 = vmatprep.mubr.bf16.mxu0 0
    %2252 = vmatmul.mubr.bf16.gmra.mrb[0].mxu0 %v758
    %v2253 = vpop.f32.mrb[0].mxu0
    %v2254 = vadd.f32 %v937, %v2253
    %v2255 = vpop.f32.mrb[0].mxu0
    %v2256 = vadd.f32 %v941, %v2255
    %v2257 = vpop.f32.mrb[0].mxu0
    %v2258 = vadd.f32 %v937, %v2257
    %v2259 = vpop.f32.mrb[0].mxu0
    %v2260 = vadd.f32 %v941, %v2259
    %2261 = vmatprep.mubr.bf16.mxu0 0
    %2262 = vmatmul.mubr.bf16.gmra.mrb[0].mxu0 %v759
    %v2263 = vpop.f32.mrb[0].mxu0
    %v2264 = vadd.f32 %v937, %v2263
    %v2265 = vpop.f32.mrb[0].mxu0
    %v2266 = vadd.f32 %v941, %v2265
    %v2267 = vpop.f32.mrb[0].mxu0
    %v2268 = vadd.f32 %v937, %v2267
    %v2269 = vpop.f32.mrb[0].mxu0
    %v2270 = vadd.f32 %v941, %v2269
    %2271 = vmatprep.mubr.bf16.mxu0 0
    %2272 = vmatmul.mubr.bf16.gmra.mrb[0].mxu0 %v760
    %v2273 = vpop.f32.mrb[0].mxu0
    %v2274 = vadd.f32 %v937, %v2273
    %v2275 = vpop.f32.mrb[0].mxu0
    %v2276 = vadd.f32 %v941, %v2275
    %v2277 = vpop.f32.mrb[0].mxu0
    %v2278 = vadd.f32 %v937, %v2277
    %v2279 = vpop.f32.mrb[0].mxu0
    %v2280 = vadd.f32 %v941, %v2279
    %2281 = vmatprep.mubr.bf16.mxu0 0
    %2282 = vmatmul.mubr.bf16.gmra.mrb[0].mxu0 %v761
    %v2283 = vpop.f32.mrb[0].mxu0
    %v2284 = vadd.f32 %v937, %v2283
    %v2285 = vpop.f32.mrb[0].mxu0
    %v2286 = vadd.f32 %v941, %v2285
    %v2287 = vpop.f32.mrb[0].mxu0
    %v2288 = vadd.f32 %v937, %v2287
    %v2289 = vpop.f32.mrb[0].mxu0
    %v2290 = vadd.f32 %v941, %v2289
    %2291 = vdwg.mxu0
    %2292 = vmatprep.subr.bf16.mxu0 %v1371
    %2293 = vmatpush1.bf16.msra.mxu0 %v1370
    %2294 = vmatprep.subr.bf16.mxu0 %v1387
    %2295 = vmatpush1.bf16.msra.mxu0 %v1386
    %2296 = vmatprep.subr.bf16.mxu0 %v1403
    %2297 = vmatpush1.bf16.msra.mxu0 %v1402
    %2298 = vmatprep.subr.bf16.mxu0 %v1419
    %2299 = vmatpush1.bf16.msra.mxu0 %v1418
    %2300 = vmatprep.subr.bf16.mxu0 %v1435
    %2301 = vmatpush1.bf16.msra.mxu0 %v1434
    %2302 = vmatprep.subr.bf16.mxu0 %v1451
    %2303 = vmatpush1.bf16.msra.mxu0 %v1450
    %2304 = vmatprep.subr.bf16.mxu0 %v1467
    %2305 = vmatpush1.bf16.msra.mxu0 %v1466
    %2306 = vmatprep.subr.bf16.mxu0 %v1483
    %2307 = vmatpush1.bf16.msra.mxu0 %v1482
    %2308 = vmatprep.subr.bf16.mxu0 0
    %2309 = vmatpush1.bf16.msra.mxu0 0
    %2310 = vmatprep.subr.bf16.mxu0 0
    %2311 = vmatpush1.bf16.msra.mxu0 0
    %2312 = vmatprep.subr.bf16.mxu0 0
    %2313 = vmatpush1.bf16.msra.mxu0 0
    %2314 = vmatprep.subr.bf16.mxu0 0
    %2315 = vmatpush1.bf16.msra.mxu0 0
    %2316 = vmatprep.subr.bf16.mxu0 0
    %2317 = vmatpush1.bf16.msra.mxu0 0
    %2318 = vmatprep.subr.bf16.mxu0 0
    %2319 = vmatpush1.bf16.msra.mxu0 0
    %2320 = vmatprep.subr.bf16.mxu0 0
    %2321 = vmatpush1.bf16.msra.mxu0 0
    %2322 = vmatprep.subr.bf16.mxu0 0
    %2323 = vmatpush1.bf16.msra.mxu0 0
    %2324 = vmatprep.mubr.bf16.mxu0 0
    %2325 = vmatmul.mubr.bf16.gmra.mrb[0].mxu0 %v754
    %v2326 = vpop.f32.mrb[0].mxu0
    %v2327 = vadd.f32 %v945, %v2326
    %v2328 = vpop.f32.mrb[0].mxu0
    %v2329 = vadd.f32 %v949, %v2328
    %v2330 = vpop.f32.mrb[0].mxu0
    %v2331 = vadd.f32 %v945, %v2330
    %v2332 = vpop.f32.mrb[0].mxu0
    %v2333 = vadd.f32 %v949, %v2332
    %2334 = vmatprep.mubr.bf16.mxu0 0
    %2335 = vmatmul.mubr.bf16.gmra.mrb[0].mxu0 %v755
    %v2336 = vpop.f32.mrb[0].mxu0
    %v2337 = vadd.f32 %v945, %v2336
    %v2338 = vpop.f32.mrb[0].mxu0
    %v2339 = vadd.f32 %v949, %v2338
    %v2340 = vpop.f32.mrb[0].mxu0
    %v2341 = vadd.f32 %v945, %v2340
    %v2342 = vpop.f32.mrb[0].mxu0
    %v2343 = vadd.f32 %v949, %v2342
    %2344 = vmatprep.mubr.bf16.mxu0 0
    %2345 = vmatmul.mubr.bf16.gmra.mrb[0].mxu0 %v756
    %v2346 = vpop.f32.mrb[0].mxu0
    %v2347 = vadd.f32 %v945, %v2346
    %v2348 = vpop.f32.mrb[0].mxu0
    %v2349 = vadd.f32 %v949, %v2348
    %v2350 = vpop.f32.mrb[0].mxu0
    %v2351 = vadd.f32 %v945, %v2350
    %v2352 = vpop.f32.mrb[0].mxu0
    %v2353 = vadd.f32 %v949, %v2352
    %2354 = vmatprep.mubr.bf16.mxu0 0
    %2355 = vmatmul.mubr.bf16.gmra.mrb[0].mxu0 %v757
    %v2356 = vpop.f32.mrb[0].mxu0
    %v2357 = vadd.f32 %v945, %v2356
    %v2358 = vpop.f32.mrb[0].mxu0
    %v2359 = vadd.f32 %v949, %v2358
    %v2360 = vpop.f32.mrb[0].mxu0
    %v2361 = vadd.f32 %v945, %v2360
    %v2362 = vpop.f32.mrb[0].mxu0
    %v2363 = vadd.f32 %v949, %v2362
    %2364 = vmatprep.mubr.bf16.mxu0 0
    %2365 = vmatmul.mubr.bf16.gmra.mrb[0].mxu0 %v758
    %v2366 = vpop.f32.mrb[0].mxu0
    %v2367 = vadd.f32 %v945, %v2366
    %v2368 = vpop.f32.mrb[0].mxu0
    %v2369 = vadd.f32 %v949, %v2368
    %v2370 = vpop.f32.mrb[0].mxu0
    %v2371 = vadd.f32 %v945, %v2370
    %v2372 = vpop.f32.mrb[0].mxu0
    %v2373 = vadd.f32 %v949, %v2372
    %2374 = vmatprep.mubr.bf16.mxu0 0
    %2375 = vmatmul.mubr.bf16.gmra.mrb[0].mxu0 %v759
    %v2376 = vpop.f32.mrb[0].mxu0
    %v2377 = vadd.f32 %v945, %v2376
    %v2378 = vpop.f32.mrb[0].mxu0
    %v2379 = vadd.f32 %v949, %v2378
    %v2380 = vpop.f32.mrb[0].mxu0
    %v2381 = vadd.f32 %v945, %v2380
    %v2382 = vpop.f32.mrb[0].mxu0
    %v2383 = vadd.f32 %v949, %v2382
    %2384 = vmatprep.mubr.bf16.mxu0 0
    %2385 = vmatmul.mubr.bf16.gmra.mrb[0].mxu0 %v760
    %v2386 = vpop.f32.mrb[0].mxu0
    %v2387 = vadd.f32 %v945, %v2386
    %v2388 = vpop.f32.mrb[0].mxu0
    %v2389 = vadd.f32 %v949, %v2388
    %v2390 = vpop.f32.mrb[0].mxu0
    %v2391 = vadd.f32 %v945, %v2390
    %v2392 = vpop.f32.mrb[0].mxu0
    %v2393 = vadd.f32 %v949, %v2392
    %2394 = vmatprep.mubr.bf16.mxu0 0
    %2395 = vmatmul.mubr.bf16.gmra.mrb[0].mxu0 %v761
    %v2396 = vpop.f32.mrb[0].mxu0
    %v2397 = vadd.f32 %v945, %v2396
    %v2398 = vpop.f32.mrb[0].mxu0
    %v2399 = vadd.f32 %v949, %v2398
    %v2400 = vpop.f32.mrb[0].mxu0
    %v2401 = vadd.f32 %v945, %v2400
    %v2402 = vpop.f32.mrb[0].mxu0
    %v2403 = vadd.f32 %v949, %v2402
    %2404 = vdwg.mxu0
    %2405 = vmatprep.subr.bf16.mxu0 %v1373
    %2406 = vmatpush1.bf16.msra.mxu0 %v1372
    %2407 = vmatprep.subr.bf16.mxu0 %v1389
    %2408 = vmatpush1.bf16.msra.mxu0 %v1388
    %2409 = vmatprep.subr.bf16.mxu0 %v1405
    %2410 = vmatpush1.bf16.msra.mxu0 %v1404
    %2411 = vmatprep.subr.bf16.mxu0 %v1421
    %2412 = vmatpush1.bf16.msra.mxu0 %v1420
    %2413 = vmatprep.subr.bf16.mxu0 %v1437
    %2414 = vmatpush1.bf16.msra.mxu0 %v1436
    %2415 = vmatprep.subr.bf16.mxu0 %v1453
    %2416 = vmatpush1.bf16.msra.mxu0 %v1452
    %2417 = vmatprep.subr.bf16.mxu0 %v1469
    %2418 = vmatpush1.bf16.msra.mxu0 %v1468
    %2419 = vmatprep.subr.bf16.mxu0 %v1485
    %2420 = vmatpush1.bf16.msra.mxu0 %v1484
    %2421 = vmatprep.subr.bf16.mxu0 0
    %2422 = vmatpush1.bf16.msra.mxu0 0
    %2423 = vmatprep.subr.bf16.mxu0 0
    %2424 = vmatpush1.bf16.msra.mxu0 0
    %2425 = vmatprep.subr.bf16.mxu0 0
    %2426 = vmatpush1.bf16.msra.mxu0 0
    %2427 = vmatprep.subr.bf16.mxu0 0
    %2428 = vmatpush1.bf16.msra.mxu0 0
    %2429 = vmatprep.subr.bf16.mxu0 0
    %2430 = vmatpush1.bf16.msra.mxu0 0
    %2431 = vmatprep.subr.bf16.mxu0 0
    %2432 = vmatpush1.bf16.msra.mxu0 0
    %2433 = vmatprep.subr.bf16.mxu0 0
    %2434 = vmatpush1.bf16.msra.mxu0 0
    %2435 = vmatprep.subr.bf16.mxu0 0
    %2436 = vmatpush1.bf16.msra.mxu0 0
    %2437 = vmatprep.mubr.bf16.mxu0 0
    %2438 = vmatmul.mubr.bf16.gmra.mrb[0].mxu0 %v754
    %v2439 = vpop.f32.mrb[0].mxu0
    %v2440 = vadd.f32 %v953, %v2439
    %v2441 = vpop.f32.mrb[0].mxu0
    %v2442 = vadd.f32 %v957, %v2441
    %v2443 = vpop.f32.mrb[0].mxu0
    %v2444 = vadd.f32 %v953, %v2443
    %v2445 = vpop.f32.mrb[0].mxu0
    %v2446 = vadd.f32 %v957, %v2445
    %2447 = vmatprep.mubr.bf16.mxu0 0
    %2448 = vmatmul.mubr.bf16.gmra.mrb[0].mxu0 %v755
    %v2449 = vpop.f32.mrb[0].mxu0
    %v2450 = vadd.f32 %v953, %v2449
    %v2451 = vpop.f32.mrb[0].mxu0
    %v2452 = vadd.f32 %v957, %v2451
    %v2453 = vpop.f32.mrb[0].mxu0
    %v2454 = vadd.f32 %v953, %v2453
    %v2455 = vpop.f32.mrb[0].mxu0
    %v2456 = vadd.f32 %v957, %v2455
    %2457 = vmatprep.mubr.bf16.mxu0 0
    %2458 = vmatmul.mubr.bf16.gmra.mrb[0].mxu0 %v756
    %v2459 = vpop.f32.mrb[0].mxu0
    %v2460 = vadd.f32 %v953, %v2459
    %v2461 = vpop.f32.mrb[0].mxu0
    %v2462 = vadd.f32 %v957, %v2461
    %v2463 = vpop.f32.mrb[0].mxu0
    %v2464 = vadd.f32 %v953, %v2463
    %v2465 = vpop.f32.mrb[0].mxu0
    %v2466 = vadd.f32 %v957, %v2465
    %2467 = vmatprep.mubr.bf16.mxu0 0
    %2468 = vmatmul.mubr.bf16.gmra.mrb[0].mxu0 %v757
    %v2469 = vpop.f32.mrb[0].mxu0
    %v2470 = vadd.f32 %v953, %v2469
    %v2471 = vpop.f32.mrb[0].mxu0
    %v2472 = vadd.f32 %v957, %v2471
    %v2473 = vpop.f32.mrb[0].mxu0
    %v2474 = vadd.f32 %v953, %v2473
    %v2475 = vpop.f32.mrb[0].mxu0
    %v2476 = vadd.f32 %v957, %v2475
    %2477 = vmatprep.mubr.bf16.mxu0 0
    %2478 = vmatmul.mubr.bf16.gmra.mrb[0].mxu0 %v758
    %v2479 = vpop.f32.mrb[0].mxu0
    %v2480 = vadd.f32 %v953, %v2479
    %v2481 = vpop.f32.mrb[0].mxu0
    %v2482 = vadd.f32 %v957, %v2481
    %v2483 = vpop.f32.mrb[0].mxu0
    %v2484 = vadd.f32 %v953, %v2483
    %v2485 = vpop.f32.mrb[0].mxu0
    %v2486 = vadd.f32 %v957, %v2485
    %2487 = vmatprep.mubr.bf16.mxu0 0
    %2488 = vmatmul.mubr.bf16.gmra.mrb[0].mxu0 %v759
    %v2489 = vpop.f32.mrb[0].mxu0
    %v2490 = vadd.f32 %v953, %v2489
    %v2491 = vpop.f32.mrb[0].mxu0
    %v2492 = vadd.f32 %v957, %v2491
    %v2493 = vpop.f32.mrb[0].mxu0
    %v2494 = vadd.f32 %v953, %v2493
    %v2495 = vpop.f32.mrb[0].mxu0
    %v2496 = vadd.f32 %v957, %v2495
    %2497 = vmatprep.mubr.bf16.mxu0 0
    %2498 = vmatmul.mubr.bf16.gmra.mrb[0].mxu0 %v760
    %v2499 = vpop.f32.mrb[0].mxu0
    %v2500 = vadd.f32 %v953, %v2499
    %v2501 = vpop.f32.mrb[0].mxu0
    %v2502 = vadd.f32 %v957, %v2501
    %v2503 = vpop.f32.mrb[0].mxu0
    %v2504 = vadd.f32 %v953, %v2503
    %v2505 = vpop.f32.mrb[0].mxu0
    %v2506 = vadd.f32 %v957, %v2505
    %2507 = vmatprep.mubr.bf16.mxu0 0
    %2508 = vmatmul.mubr.bf16.gmra.mrb[0].mxu0 %v761
    %v2509 = vpop.f32.mrb[0].mxu0
    %v2510 = vadd.f32 %v953, %v2509
    %v2511 = vpop.f32.mrb[0].mxu0
    %v2512 = vadd.f32 %v957, %v2511
    %v2513 = vpop.f32.mrb[0].mxu0
    %v2514 = vadd.f32 %v953, %v2513
    %v2515 = vpop.f32.mrb[0].mxu0
    %v2516 = vadd.f32 %v957, %v2515
    %2517 = vdwg.mxu0
    %v2518 = vmax.f32 %v1649, 0.0
    %v2519 = vmax.f32 %v1651, 0.0
    %v2520 = vmax.f32 %v1762, 0.0
    %v2521 = vmax.f32 %v1764, 0.0
    %v2522 = vmax.f32 %v1875, 0.0
    %v2523 = vmax.f32 %v1877, 0.0
    %v2524 = vmax.f32 %v1988, 0.0
    %v2525 = vmax.f32 %v1990, 0.0
    %v2526 = vmax.f32 %v2101, 0.0
    %v2527 = vmax.f32 %v2103, 0.0
    %v2528 = vmax.f32 %v2214, 0.0
    %v2529 = vmax.f32 %v2216, 0.0
    %v2530 = vmax.f32 %v2327, 0.0
    %v2531 = vmax.f32 %v2329, 0.0
    %v2532 = vmax.f32 %v2440, 0.0
    %v2533 = vmax.f32 %v2442, 0.0
    %v2534 = vmax.f32 %v1653, 0.0
    %v2535 = vmax.f32 %v1655, 0.0
    %v2536 = vmax.f32 %v1766, 0.0
    %v2537 = vmax.f32 %v1768, 0.0
    %v2538 = vmax.f32 %v1879, 0.0
    %v2539 = vmax.f32 %v1881, 0.0
    %v2540 = vmax.f32 %v1992, 0.0
    %v2541 = vmax.f32 %v1994, 0.0
    %v2542 = vmax.f32 %v2105, 0.0
    %v2543 = vmax.f32 %v2107, 0.0
    %v2544 = vmax.f32 %v2218, 0.0
    %v2545 = vmax.f32 %v2220, 0.0
    %v2546 = vmax.f32 %v2331, 0.0
    %v2547 = vmax.f32 %v2333, 0.0
    %v2548 = vmax.f32 %v2444, 0.0
    %v2549 = vmax.f32 %v2446, 0.0
    %v2550 = vmax.f32 %v1659, 0.0
    %v2551 = vmax.f32 %v1661, 0.0
    %v2552 = vmax.f32 %v1772, 0.0
    %v2553 = vmax.f32 %v1774, 0.0
    %v2554 = vmax.f32 %v1885, 0.0
    %v2555 = vmax.f32 %v1887, 0.0
    %v2556 = vmax.f32 %v1998, 0.0
    %v2557 = vmax.f32 %v2000, 0.0
    %v2558 = vmax.f32 %v2111, 0.0
    %v2559 = vmax.f32 %v2113, 0.0
    %v2560 = vmax.f32 %v2224, 0.0
    %v2561 = vmax.f32 %v2226, 0.0
    %v2562 = vmax.f32 %v2337, 0.0
    %v2563 = vmax.f32 %v2339, 0.0
    %v2564 = vmax.f32 %v2450, 0.0
    %v2565 = vmax.f32 %v2452, 0.0
    %v2566 = vmax.f32 %v1663, 0.0
    %v2567 = vmax.f32 %v1665, 0.0
    %v2568 = vmax.f32 %v1776, 0.0
    %v2569 = vmax.f32 %v1778, 0.0
    %v2570 = vmax.f32 %v1889, 0.0
    %v2571 = vmax.f32 %v1891, 0.0
    %v2572 = vmax.f32 %v2002, 0.0
    %v2573 = vmax.f32 %v2004, 0.0
    %v2574 = vmax.f32 %v2115, 0.0
    %v2575 = vmax.f32 %v2117, 0.0
    %v2576 = vmax.f32 %v2228, 0.0
    %v2577 = vmax.f32 %v2230, 0.0
    %v2578 = vmax.f32 %v2341, 0.0
    %v2579 = vmax.f32 %v2343, 0.0
    %v2580 = vmax.f32 %v2454, 0.0
    %v2581 = vmax.f32 %v2456, 0.0
    %v2582 = vmax.f32 %v1669, 0.0
    %v2583 = vmax.f32 %v1671, 0.0
    %v2584 = vmax.f32 %v1782, 0.0
    %v2585 = vmax.f32 %v1784, 0.0
    %v2586 = vmax.f32 %v1895, 0.0
    %v2587 = vmax.f32 %v1897, 0.0
    %v2588 = vmax.f32 %v2008, 0.0
    %v2589 = vmax.f32 %v2010, 0.0
    %v2590 = vmax.f32 %v2121, 0.0
    %v2591 = vmax.f32 %v2123, 0.0
    %v2592 = vmax.f32 %v2234, 0.0
    %v2593 = vmax.f32 %v2236, 0.0
    %v2594 = vmax.f32 %v2347, 0.0
    %v2595 = vmax.f32 %v2349, 0.0
    %v2596 = vmax.f32 %v2460, 0.0
    %v2597 = vmax.f32 %v2462, 0.0
    %v2598 = vmax.f32 %v1673, 0.0
    %v2599 = vmax.f32 %v1675, 0.0
    %v2600 = vmax.f32 %v1786, 0.0
    %v2601 = vmax.f32 %v1788, 0.0
    %v2602 = vmax.f32 %v1899, 0.0
    %v2603 = vmax.f32 %v1901, 0.0
    %v2604 = vmax.f32 %v2012, 0.0
    %v2605 = vmax.f32 %v2014, 0.0
    %v2606 = vmax.f32 %v2125, 0.0
    %v2607 = vmax.f32 %v2127, 0.0
    %v2608 = vmax.f32 %v2238, 0.0
    %v2609 = vmax.f32 %v2240, 0.0
    %v2610 = vmax.f32 %v2351, 0.0
    %v2611 = vmax.f32 %v2353, 0.0
    %v2612 = vmax.f32 %v2464, 0.0
    %v2613 = vmax.f32 %v2466, 0.0
    %v2614 = vmax.f32 %v1679, 0.0
    %v2615 = vmax.f32 %v1681, 0.0
    %v2616 = vmax.f32 %v1792, 0.0
    %v2617 = vmax.f32 %v1794, 0.0
    %v2618 = vmax.f32 %v1905, 0.0
    %v2619 = vmax.f32 %v1907, 0.0
    %v2620 = vmax.f32 %v2018, 0.0
    %v2621 = vmax.f32 %v2020, 0.0
    %v2622 = vmax.f32 %v2131, 0.0
    %v2623 = vmax.f32 %v2133, 0.0
    %v2624 = vmax.f32 %v2244, 0.0
    %v2625 = vmax.f32 %v2246, 0.0
    %v2626 = vmax.f32 %v2357, 0.0
    %v2627 = vmax.f32 %v2359, 0.0
    %v2628 = vmax.f32 %v2470, 0.0
    %v2629 = vmax.f32 %v2472, 0.0
    %v2630 = vmax.f32 %v1683, 0.0
    %v2631 = vmax.f32 %v1685, 0.0
    %v2632 = vmax.f32 %v1796, 0.0
    %v2633 = vmax.f32 %v1798, 0.0
    %v2634 = vmax.f32 %v1909, 0.0
    %v2635 = vmax.f32 %v1911, 0.0
    %v2636 = vmax.f32 %v2022, 0.0
    %v2637 = vmax.f32 %v2024, 0.0
    %v2638 = vmax.f32 %v2135, 0.0
    %v2639 = vmax.f32 %v2137, 0.0
    %v2640 = vmax.f32 %v2248, 0.0
    %v2641 = vmax.f32 %v2250, 0.0
    %v2642 = vmax.f32 %v2361, 0.0
    %v2643 = vmax.f32 %v2363, 0.0
    %v2644 = vmax.f32 %v2474, 0.0
    %v2645 = vmax.f32 %v2476, 0.0
    %v2646 = vmax.f32 %v1689, 0.0
    %v2647 = vmax.f32 %v1691, 0.0
    %v2648 = vmax.f32 %v1802, 0.0
    %v2649 = vmax.f32 %v1804, 0.0
    %v2650 = vmax.f32 %v1915, 0.0
    %v2651 = vmax.f32 %v1917, 0.0
    %v2652 = vmax.f32 %v2028, 0.0
    %v2653 = vmax.f32 %v2030, 0.0
    %v2654 = vmax.f32 %v2141, 0.0
    %v2655 = vmax.f32 %v2143, 0.0
    %v2656 = vmax.f32 %v2254, 0.0
    %v2657 = vmax.f32 %v2256, 0.0
    %v2658 = vmax.f32 %v2367, 0.0
    %v2659 = vmax.f32 %v2369, 0.0
    %v2660 = vmax.f32 %v2480, 0.0
    %v2661 = vmax.f32 %v2482, 0.0
    %v2662 = vmax.f32 %v1693, 0.0
    %v2663 = vmax.f32 %v1695, 0.0
    %v2664 = vmax.f32 %v1806, 0.0
    %v2665 = vmax.f32 %v1808, 0.0
    %v2666 = vmax.f32 %v1919, 0.0
    %v2667 = vmax.f32 %v1921, 0.0
    %v2668 = vmax.f32 %v2032, 0.0
    %v2669 = vmax.f32 %v2034, 0.0
    %v2670 = vmax.f32 %v2145, 0.0
    %v2671 = vmax.f32 %v2147, 0.0
    %v2672 = vmax.f32 %v2258, 0.0
    %v2673 = vmax.f32 %v2260, 0.0
    %v2674 = vmax.f32 %v2371, 0.0
    %v2675 = vmax.f32 %v2373, 0.0
    %v2676 = vmax.f32 %v2484, 0.0
    %v2677 = vmax.f32 %v2486, 0.0
    %v2678 = vmax.f32 %v1699, 0.0
    %v2679 = vmax.f32 %v1701, 0.0
    %v2680 = vmax.f32 %v1812, 0.0
    %v2681 = vmax.f32 %v1814, 0.0
    %v2682 = vmax.f32 %v1925, 0.0
    %v2683 = vmax.f32 %v1927, 0.0
    %v2684 = vmax.f32 %v2038, 0.0
    %v2685 = vmax.f32 %v2040, 0.0
    %v2686 = vmax.f32 %v2151, 0.0
    %v2687 = vmax.f32 %v2153, 0.0
    %v2688 = vmax.f32 %v2264, 0.0
    %v2689 = vmax.f32 %v2266, 0.0
    %v2690 = vmax.f32 %v2377, 0.0
    %v2691 = vmax.f32 %v2379, 0.0
    %v2692 = vmax.f32 %v2490, 0.0
    %v2693 = vmax.f32 %v2492, 0.0
    %v2694 = vmax.f32 %v1703, 0.0
    %v2695 = vmax.f32 %v1705, 0.0
    %v2696 = vmax.f32 %v1816, 0.0
    %v2697 = vmax.f32 %v1818, 0.0
    %v2698 = vmax.f32 %v1929, 0.0
    %v2699 = vmax.f32 %v1931, 0.0
    %v2700 = vmax.f32 %v2042, 0.0
    %v2701 = vmax.f32 %v2044, 0.0
    %v2702 = vmax.f32 %v2155, 0.0
    %v2703 = vmax.f32 %v2157, 0.0
    %v2704 = vmax.f32 %v2268, 0.0
    %v2705 = vmax.f32 %v2270, 0.0
    %v2706 = vmax.f32 %v2381, 0.0
    %v2707 = vmax.f32 %v2383, 0.0
    %v2708 = vmax.f32 %v2494, 0.0
    %v2709 = vmax.f32 %v2496, 0.0
    %v2710 = vmax.f32 %v1709, 0.0
    %v2711 = vmax.f32 %v1711, 0.0
    %v2712 = vmax.f32 %v1822, 0.0
    %v2713 = vmax.f32 %v1824, 0.0
    %v2714 = vmax.f32 %v1935, 0.0
    %v2715 = vmax.f32 %v1937, 0.0
    %v2716 = vmax.f32 %v2048, 0.0
    %v2717 = vmax.f32 %v2050, 0.0
    %v2718 = vmax.f32 %v2161, 0.0
    %v2719 = vmax.f32 %v2163, 0.0
    %v2720 = vmax.f32 %v2274, 0.0
    %v2721 = vmax.f32 %v2276, 0.0
    %v2722 = vmax.f32 %v2387, 0.0
    %v2723 = vmax.f32 %v2389, 0.0
    %v2724 = vmax.f32 %v2500, 0.0
    %v2725 = vmax.f32 %v2502, 0.0
    %v2726 = vmax.f32 %v1713, 0.0
    %v2727 = vmax.f32 %v1715, 0.0
    %v2728 = vmax.f32 %v1826, 0.0
    %v2729 = vmax.f32 %v1828, 0.0
    %v2730 = vmax.f32 %v1939, 0.0
    %v2731 = vmax.f32 %v1941, 0.0
    %v2732 = vmax.f32 %v2052, 0.0
    %v2733 = vmax.f32 %v2054, 0.0
    %v2734 = vmax.f32 %v2165, 0.0
    %v2735 = vmax.f32 %v2167, 0.0
    %v2736 = vmax.f32 %v2278, 0.0
    %v2737 = vmax.f32 %v2280, 0.0
    %v2738 = vmax.f32 %v2391, 0.0
    %v2739 = vmax.f32 %v2393, 0.0
    %v2740 = vmax.f32 %v2504, 0.0
    %v2741 = vmax.f32 %v2506, 0.0
    %v2742 = vmax.f32 %v1719, 0.0
    %v2743 = vmax.f32 %v1721, 0.0
    %v2744 = vmax.f32 %v1832, 0.0
    %v2745 = vmax.f32 %v1834, 0.0
    %v2746 = vmax.f32 %v1945, 0.0
    %v2747 = vmax.f32 %v1947, 0.0
    %v2748 = vmax.f32 %v2058, 0.0
    %v2749 = vmax.f32 %v2060, 0.0
    %v2750 = vmax.f32 %v2171, 0.0
    %v2751 = vmax.f32 %v2173, 0.0
    %v2752 = vmax.f32 %v2284, 0.0
    %v2753 = vmax.f32 %v2286, 0.0
    %v2754 = vmax.f32 %v2397, 0.0
    %v2755 = vmax.f32 %v2399, 0.0
    %v2756 = vmax.f32 %v2510, 0.0
    %v2757 = vmax.f32 %v2512, 0.0
    %v2758 = vmax.f32 %v1723, 0.0
    %v2759 = vmax.f32 %v1725, 0.0
    %v2760 = vmax.f32 %v1836, 0.0
    %v2761 = vmax.f32 %v1838, 0.0
    %v2762 = vmax.f32 %v1949, 0.0
    %v2763 = vmax.f32 %v1951, 0.0
    %v2764 = vmax.f32 %v2062, 0.0
    %v2765 = vmax.f32 %v2064, 0.0
    %v2766 = vmax.f32 %v2175, 0.0
    %v2767 = vmax.f32 %v2177, 0.0
    %v2768 = vmax.f32 %v2288, 0.0
    %v2769 = vmax.f32 %v2290, 0.0
    %v2770 = vmax.f32 %v2401, 0.0
    %v2771 = vmax.f32 %v2403, 0.0
    %v2772 = vmax.f32 %v2514, 0.0
    %v2773 = vmax.f32 %v2516, 0.0
    %v2774 = vpack.c.bf16 %v2534, %v2518
    %v2775 = vpack.c.bf16 %v2535, %v2519
    %v2776 = vpack.c.bf16 %v2536, %v2520
    %v2777 = vpack.c.bf16 %v2537, %v2521
    %v2778 = vpack.c.bf16 %v2538, %v2522
    %v2779 = vpack.c.bf16 %v2539, %v2523
    %v2780 = vpack.c.bf16 %v2540, %v2524
    %v2781 = vpack.c.bf16 %v2541, %v2525
    %v2782 = vpack.c.bf16 %v2542, %v2526
    %v2783 = vpack.c.bf16 %v2543, %v2527
    %v2784 = vpack.c.bf16 %v2544, %v2528
    %v2785 = vpack.c.bf16 %v2545, %v2529
    %v2786 = vpack.c.bf16 %v2546, %v2530
    %v2787 = vpack.c.bf16 %v2547, %v2531
    %v2788 = vpack.c.bf16 %v2548, %v2532
    %v2789 = vpack.c.bf16 %v2549, %v2533
    %v2790 = vpack.c.bf16 %v2566, %v2550
    %v2791 = vpack.c.bf16 %v2567, %v2551
    %v2792 = vpack.c.bf16 %v2568, %v2552
    %v2793 = vpack.c.bf16 %v2569, %v2553
    %v2794 = vpack.c.bf16 %v2570, %v2554
    %v2795 = vpack.c.bf16 %v2571, %v2555
    %v2796 = vpack.c.bf16 %v2572, %v2556
    %v2797 = vpack.c.bf16 %v2573, %v2557
    %v2798 = vpack.c.bf16 %v2574, %v2558
    %v2799 = vpack.c.bf16 %v2575, %v2559
    %v2800 = vpack.c.bf16 %v2576, %v2560
    %v2801 = vpack.c.bf16 %v2577, %v2561
    %v2802 = vpack.c.bf16 %v2578, %v2562
    %v2803 = vpack.c.bf16 %v2579, %v2563
    %v2804 = vpack.c.bf16 %v2580, %v2564
    %v2805 = vpack.c.bf16 %v2581, %v2565
    %v2806 = vpack.c.bf16 %v2598, %v2582
    %v2807 = vpack.c.bf16 %v2599, %v2583
    %v2808 = vpack.c.bf16 %v2600, %v2584
    %v2809 = vpack.c.bf16 %v2601, %v2585
    %v2810 = vpack.c.bf16 %v2602, %v2586
    %v2811 = vpack.c.bf16 %v2603, %v2587
    %v2812 = vpack.c.bf16 %v2604, %v2588
    %v2813 = vpack.c.bf16 %v2605, %v2589
    %v2814 = vpack.c.bf16 %v2606, %v2590
    %v2815 = vpack.c.bf16 %v2607, %v2591
    %v2816 = vpack.c.bf16 %v2608, %v2592
    %v2817 = vpack.c.bf16 %v2609, %v2593
    %v2818 = vpack.c.bf16 %v2610, %v2594
    %v2819 = vpack.c.bf16 %v2611, %v2595
    %v2820 = vpack.c.bf16 %v2612, %v2596
    %v2821 = vpack.c.bf16 %v2613, %v2597
    %v2822 = vpack.c.bf16 %v2630, %v2614
    %v2823 = vpack.c.bf16 %v2631, %v2615
    %v2824 = vpack.c.bf16 %v2632, %v2616
    %v2825 = vpack.c.bf16 %v2633, %v2617
    %v2826 = vpack.c.bf16 %v2634, %v2618
    %v2827 = vpack.c.bf16 %v2635, %v2619
    %v2828 = vpack.c.bf16 %v2636, %v2620
    %v2829 = vpack.c.bf16 %v2637, %v2621
    %v2830 = vpack.c.bf16 %v2638, %v2622
    %v2831 = vpack.c.bf16 %v2639, %v2623
    %v2832 = vpack.c.bf16 %v2640, %v2624
    %v2833 = vpack.c.bf16 %v2641, %v2625
    %v2834 = vpack.c.bf16 %v2642, %v2626
    %v2835 = vpack.c.bf16 %v2643, %v2627
    %v2836 = vpack.c.bf16 %v2644, %v2628
    %v2837 = vpack.c.bf16 %v2645, %v2629
    %v2838 = vpack.c.bf16 %v2662, %v2646
    %v2839 = vpack.c.bf16 %v2663, %v2647
    %v2840 = vpack.c.bf16 %v2664, %v2648
    %v2841 = vpack.c.bf16 %v2665, %v2649
    %v2842 = vpack.c.bf16 %v2666, %v2650
    %v2843 = vpack.c.bf16 %v2667, %v2651
    %v2844 = vpack.c.bf16 %v2668, %v2652
    %v2845 = vpack.c.bf16 %v2669, %v2653
    %v2846 = vpack.c.bf16 %v2670, %v2654
    %v2847 = vpack.c.bf16 %v2671, %v2655
    %v2848 = vpack.c.bf16 %v2672, %v2656
    %v2849 = vpack.c.bf16 %v2673, %v2657
    %v2850 = vpack.c.bf16 %v2674, %v2658
    %v2851 = vpack.c.bf16 %v2675, %v2659
    %v2852 = vpack.c.bf16 %v2676, %v2660
    %v2853 = vpack.c.bf16 %v2677, %v2661
    %v2854 = vpack.c.bf16 %v2694, %v2678
    %v2855 = vpack.c.bf16 %v2695, %v2679
    %v2856 = vpack.c.bf16 %v2696, %v2680
    %v2857 = vpack.c.bf16 %v2697, %v2681
    %v2858 = vpack.c.bf16 %v2698, %v2682
    %v2859 = vpack.c.bf16 %v2699, %v2683
    %v2860 = vpack.c.bf16 %v2700, %v2684
    %v2861 = vpack.c.bf16 %v2701, %v2685
    %v2862 = vpack.c.bf16 %v2702, %v2686
    %v2863 = vpack.c.bf16 %v2703, %v2687
    %v2864 = vpack.c.bf16 %v2704, %v2688
    %v2865 = vpack.c.bf16 %v2705, %v2689
    %v2866 = vpack.c.bf16 %v2706, %v2690
    %v2867 = vpack.c.bf16 %v2707, %v2691
    %v2868 = vpack.c.bf16 %v2708, %v2692
    %v2869 = vpack.c.bf16 %v2709, %v2693
    %v2870 = vpack.c.bf16 %v2726, %v2710
    %v2871 = vpack.c.bf16 %v2727, %v2711
    %v2872 = vpack.c.bf16 %v2728, %v2712
    %v2873 = vpack.c.bf16 %v2729, %v2713
    %v2874 = vpack.c.bf16 %v2730, %v2714
    %v2875 = vpack.c.bf16 %v2731, %v2715
    %v2876 = vpack.c.bf16 %v2732, %v2716
    %v2877 = vpack.c.bf16 %v2733, %v2717
    %v2878 = vpack.c.bf16 %v2734, %v2718
    %v2879 = vpack.c.bf16 %v2735, %v2719
    %v2880 = vpack.c.bf16 %v2736, %v2720
    %v2881 = vpack.c.bf16 %v2737, %v2721
    %v2882 = vpack.c.bf16 %v2738, %v2722
    %v2883 = vpack.c.bf16 %v2739, %v2723
    %v2884 = vpack.c.bf16 %v2740, %v2724
    %v2885 = vpack.c.bf16 %v2741, %v2725
    %v2886 = vpack.c.bf16 %v2758, %v2742
    %v2887 = vpack.c.bf16 %v2759, %v2743
    %v2888 = vpack.c.bf16 %v2760, %v2744
    %v2889 = vpack.c.bf16 %v2761, %v2745
    %v2890 = vpack.c.bf16 %v2762, %v2746
    %v2891 = vpack.c.bf16 %v2763, %v2747
    %v2892 = vpack.c.bf16 %v2764, %v2748
    %v2893 = vpack.c.bf16 %v2765, %v2749
    %v2894 = vpack.c.bf16 %v2766, %v2750
    %v2895 = vpack.c.bf16 %v2767, %v2751
    %v2896 = vpack.c.bf16 %v2768, %v2752
    %v2897 = vpack.c.bf16 %v2769, %v2753
    %v2898 = vpack.c.bf16 %v2770, %v2754
    %v2899 = vpack.c.bf16 %v2771, %v2755
    %v2900 = vpack.c.bf16 %v2772, %v2756
    %v2901 = vpack.c.bf16 %v2773, %v2757
    %v2902 = vld [vmem:[#allocation7] sm:$0xf]
    %v2903 = vld [vmem:[#allocation7 + $0x4] sm:$0xf]
    %v2904 = vld [vmem:[#allocation7 + $0x8] sm:$0xf]
    %v2905 = vld [vmem:[#allocation7 + $0xc] sm:$0xf]
    %v2906 = vld [vmem:[#allocation7 + $0x10] sm:$0xf]
    %v2907 = vld [vmem:[#allocation7 + $0x14] sm:$0xf]
    %v2908 = vld [vmem:[#allocation7 + $0x18] sm:$0xf]
    %v2909 = vld [vmem:[#allocation7 + $0x1c] sm:$0xf]
    %v2910 = vld [vmem:[#allocation7 + $0x20] sm:$0xf]
    %v2911 = vld [vmem:[#allocation7 + $0x24] sm:$0xf]
    %v2912 = vld [vmem:[#allocation7 + $0x28] sm:$0xf]
    %v2913 = vld [vmem:[#allocation7 + $0x2c] sm:$0xf]
    %v2914 = vld [vmem:[#allocation7 + $0x30] sm:$0xf]
    %v2915 = vld [vmem:[#allocation7 + $0x34] sm:$0xf]
    %v2916 = vld [vmem:[#allocation7 + $0x38] sm:$0xf]
    %v2917 = vld [vmem:[#allocation7 + $0x3c] sm:$0xf]
    %v2918 = vld [vmem:[#allocation7 + $0x40] sm:$0xf]
    %v2919 = vld [vmem:[#allocation7 + $0x44] sm:$0xf]
    %v2920 = vld [vmem:[#allocation7 + $0x48] sm:$0xf]
    %v2921 = vld [vmem:[#allocation7 + $0x4c] sm:$0xf]
    %v2922 = vld [vmem:[#allocation7 + $0x50] sm:$0xf]
    %v2923 = vld [vmem:[#allocation7 + $0x54] sm:$0xf]
    %v2924 = vld [vmem:[#allocation7 + $0x58] sm:$0xf]
    %v2925 = vld [vmem:[#allocation7 + $0x5c] sm:$0xf]
    %v2926 = vld [vmem:[#allocation7 + $0x60] sm:$0xf]
    %v2927 = vld [vmem:[#allocation7 + $0x64] sm:$0xf]
    %v2928 = vld [vmem:[#allocation7 + $0x68] sm:$0xf]
    %v2929 = vld [vmem:[#allocation7 + $0x6c] sm:$0xf]
    %v2930 = vld [vmem:[#allocation7 + $0x70] sm:$0xf]
    %v2931 = vld [vmem:[#allocation7 + $0x74] sm:$0xf]
    %v2932 = vld [vmem:[#allocation7 + $0x78] sm:$0xf]
    %v2933 = vld [vmem:[#allocation7 + $0x7c] sm:$0xf]
    %v2934 = vld [vmem:[#allocation7 + $0x80] sm:$0xf]
    %v2935 = vld [vmem:[#allocation7 + $0x84] sm:$0xf]
    %v2936 = vld [vmem:[#allocation7 + $0x88] sm:$0xf]
    %v2937 = vld [vmem:[#allocation7 + $0x8c] sm:$0xf]
    %v2938 = vld [vmem:[#allocation7 + $0x90] sm:$0xf]
    %v2939 = vld [vmem:[#allocation7 + $0x94] sm:$0xf]
    %v2940 = vld [vmem:[#allocation7 + $0x98] sm:$0xf]
    %v2941 = vld [vmem:[#allocation7 + $0x9c] sm:$0xf]
    %v2942 = vld [vmem:[#allocation7 + $0xa0] sm:$0xf]
    %v2943 = vld [vmem:[#allocation7 + $0xa4] sm:$0xf]
    %v2944 = vld [vmem:[#allocation7 + $0xa8] sm:$0xf]
    %v2945 = vld [vmem:[#allocation7 + $0xac] sm:$0xf]
    %v2946 = vld [vmem:[#allocation7 + $0xb0] sm:$0xf]
    %v2947 = vld [vmem:[#allocation7 + $0xb4] sm:$0xf]
    %v2948 = vld [vmem:[#allocation7 + $0xb8] sm:$0xf]
    %v2949 = vld [vmem:[#allocation7 + $0xbc] sm:$0xf]
    %v2950 = vld [vmem:[#allocation7 + $0xc0] sm:$0xf]
    %v2951 = vld [vmem:[#allocation7 + $0xc4] sm:$0xf]
    %v2952 = vld [vmem:[#allocation7 + $0xc8] sm:$0xf]
    %v2953 = vld [vmem:[#allocation7 + $0xcc] sm:$0xf]
    %v2954 = vld [vmem:[#allocation7 + $0xd0] sm:$0xf]
    %v2955 = vld [vmem:[#allocation7 + $0xd4] sm:$0xf]
    %v2956 = vld [vmem:[#allocation7 + $0xd8] sm:$0xf]
    %v2957 = vld [vmem:[#allocation7 + $0xdc] sm:$0xf]
    %v2958 = vld [vmem:[#allocation7 + $0xe0] sm:$0xf]
    %v2959 = vld [vmem:[#allocation7 + $0xe4] sm:$0xf]
    %v2960 = vld [vmem:[#allocation7 + $0xe8] sm:$0xf]
    %v2961 = vld [vmem:[#allocation7 + $0xec] sm:$0xf]
    %v2962 = vld [vmem:[#allocation7 + $0xf0] sm:$0xf]
    %v2963 = vld [vmem:[#allocation7 + $0xf4] sm:$0xf]
    %v2964 = vld [vmem:[#allocation7 + $0xf8] sm:$0xf]
    %v2965 = vld [vmem:[#allocation7 + $0xfc] sm:$0xf]
    %v2966 = vld [vmem:[#allocation7 + $0x100] sm:$0xf]
    %v2967 = vld [vmem:[#allocation7 + $0x104] sm:$0xf]
    %v2968 = vld [vmem:[#allocation7 + $0x108] sm:$0xf]
    %v2969 = vld [vmem:[#allocation7 + $0x10c] sm:$0xf]
    %v2970 = vld [vmem:[#allocation7 + $0x110] sm:$0xf]
    %v2971 = vld [vmem:[#allocation7 + $0x114] sm:$0xf]
    %v2972 = vld [vmem:[#allocation7 + $0x118] sm:$0xf]
    %v2973 = vld [vmem:[#allocation7 + $0x11c] sm:$0xf]
    %v2974 = vld [vmem:[#allocation7 + $0x120] sm:$0xf]
    %v2975 = vld [vmem:[#allocation7 + $0x124] sm:$0xf]
    %v2976 = vld [vmem:[#allocation7 + $0x128] sm:$0xf]
    %v2977 = vld [vmem:[#allocation7 + $0x12c] sm:$0xf]
    %v2978 = vld [vmem:[#allocation7 + $0x130] sm:$0xf]
    %v2979 = vld [vmem:[#allocation7 + $0x134] sm:$0xf]
    %v2980 = vld [vmem:[#allocation7 + $0x138] sm:$0xf]
    %v2981 = vld [vmem:[#allocation7 + $0x13c] sm:$0xf]
    %v2982 = vld [vmem:[#allocation7 + $0x140] sm:$0xf]
    %v2983 = vld [vmem:[#allocation7 + $0x144] sm:$0xf]
    %v2984 = vld [vmem:[#allocation7 + $0x148] sm:$0xf]
    %v2985 = vld [vmem:[#allocation7 + $0x14c] sm:$0xf]
    %v2986 = vld [vmem:[#allocation7 + $0x150] sm:$0xf]
    %v2987 = vld [vmem:[#allocation7 + $0x154] sm:$0xf]
    %v2988 = vld [vmem:[#allocation7 + $0x158] sm:$0xf]
    %v2989 = vld [vmem:[#allocation7 + $0x15c] sm:$0xf]
    %v2990 = vld [vmem:[#allocation7 + $0x160] sm:$0xf]
    %v2991 = vld [vmem:[#allocation7 + $0x164] sm:$0xf]
    %v2992 = vld [vmem:[#allocation7 + $0x168] sm:$0xf]
    %v2993 = vld [vmem:[#allocation7 + $0x16c] sm:$0xf]
    %v2994 = vld [vmem:[#allocation7 + $0x170] sm:$0xf]
    %v2995 = vld [vmem:[#allocation7 + $0x174] sm:$0xf]
    %v2996 = vld [vmem:[#allocation7 + $0x178] sm:$0xf]
    %v2997 = vld [vmem:[#allocation7 + $0x17c] sm:$0xf]
    %v2998 = vld [vmem:[#allocation7 + $0x180] sm:$0xf]
    %v2999 = vld [vmem:[#allocation7 + $0x184] sm:$0xf]
    %v3000 = vld [vmem:[#allocation7 + $0x188] sm:$0xf]
    %v3001 = vld [vmem:[#allocation7 + $0x18c] sm:$0xf]
    %v3002 = vld [vmem:[#allocation7 + $0x190] sm:$0xf]
    %v3003 = vld [vmem:[#allocation7 + $0x194] sm:$0xf]
    %v3004 = vld [vmem:[#allocation7 + $0x198] sm:$0xf]
    %v3005 = vld [vmem:[#allocation7 + $0x19c] sm:$0xf]
    %v3006 = vld [vmem:[#allocation7 + $0x1a0] sm:$0xf]
    %v3007 = vld [vmem:[#allocation7 + $0x1a4] sm:$0xf]
    %v3008 = vld [vmem:[#allocation7 + $0x1a8] sm:$0xf]
    %v3009 = vld [vmem:[#allocation7 + $0x1ac] sm:$0xf]
    %v3010 = vld [vmem:[#allocation7 + $0x1b0] sm:$0xf]
    %v3011 = vld [vmem:[#allocation7 + $0x1b4] sm:$0xf]
    %v3012 = vld [vmem:[#allocation7 + $0x1b8] sm:$0xf]
    %v3013 = vld [vmem:[#allocation7 + $0x1bc] sm:$0xf]
    %v3014 = vld [vmem:[#allocation7 + $0x1c0] sm:$0xf]
    %v3015 = vld [vmem:[#allocation7 + $0x1c4] sm:$0xf]
    %v3016 = vld [vmem:[#allocation7 + $0x1c8] sm:$0xf]
    %v3017 = vld [vmem:[#allocation7 + $0x1cc] sm:$0xf]
    %v3018 = vld [vmem:[#allocation7 + $0x1d0] sm:$0xf]
    %v3019 = vld [vmem:[#allocation7 + $0x1d4] sm:$0xf]
    %v3020 = vld [vmem:[#allocation7 + $0x1d8] sm:$0xf]
    %v3021 = vld [vmem:[#allocation7 + $0x1dc] sm:$0xf]
    %v3022 = vld [vmem:[#allocation7 + $0x1e0] sm:$0xf]
    %v3023 = vld [vmem:[#allocation7 + $0x1e4] sm:$0xf]
    %v3024 = vld [vmem:[#allocation7 + $0x1e8] sm:$0xf]
    %v3025 = vld [vmem:[#allocation7 + $0x1ec] sm:$0xf]
    %v3026 = vld [vmem:[#allocation7 + $0x1f0] sm:$0xf]
    %v3027 = vld [vmem:[#allocation7 + $0x1f4] sm:$0xf]
    %v3028 = vld [vmem:[#allocation7 + $0x1f8] sm:$0xf]
    %v3029 = vld [vmem:[#allocation7 + $0x1fc] sm:$0xf]
    %v3030 = vld [vmem:[#allocation7 + $0x200] sm:$0xf]
    %v3031 = vld [vmem:[#allocation7 + $0x204] sm:$0xf]
    %v3032 = vld [vmem:[#allocation7 + $0x208] sm:$0xf]
    %v3033 = vld [vmem:[#allocation7 + $0x20c] sm:$0xf]
    %v3034 = vld [vmem:[#allocation7 + $0x210] sm:$0xf]
    %v3035 = vld [vmem:[#allocation7 + $0x214] sm:$0xf]
    %v3036 = vld [vmem:[#allocation7 + $0x218] sm:$0xf]
    %v3037 = vld [vmem:[#allocation7 + $0x21c] sm:$0xf]
    %v3038 = vld [vmem:[#allocation7 + $0x220] sm:$0xf]
    %v3039 = vld [vmem:[#allocation7 + $0x224] sm:$0xf]
    %v3040 = vld [vmem:[#allocation7 + $0x228] sm:$0xf]
    %v3041 = vld [vmem:[#allocation7 + $0x22c] sm:$0xf]
    %v3042 = vld [vmem:[#allocation7 + $0x230] sm:$0xf]
    %v3043 = vld [vmem:[#allocation7 + $0x234] sm:$0xf]
    %v3044 = vld [vmem:[#allocation7 + $0x238] sm:$0xf]
    %v3045 = vld [vmem:[#allocation7 + $0x23c] sm:$0xf]
    %v3046 = vld [vmem:[#allocation7 + $0x240] sm:$0xf]
    %v3047 = vld [vmem:[#allocation7 + $0x244] sm:$0xf]
    %v3048 = vld [vmem:[#allocation7 + $0x248] sm:$0xf]
    %v3049 = vld [vmem:[#allocation7 + $0x24c] sm:$0xf]
    %v3050 = vld [vmem:[#allocation7 + $0x250] sm:$0xf]
    %v3051 = vld [vmem:[#allocation7 + $0x254] sm:$0xf]
    %v3052 = vld [vmem:[#allocation7 + $0x258] sm:$0xf]
    %v3053 = vld [vmem:[#allocation7 + $0x25c] sm:$0xf]
    %v3054 = vld [vmem:[#allocation7 + $0x260] sm:$0xf]
    %v3055 = vld [vmem:[#allocation7 + $0x264] sm:$0xf]
    %v3056 = vld [vmem:[#allocation7 + $0x268] sm:$0xf]
    %v3057 = vld [vmem:[#allocation7 + $0x26c] sm:$0xf]
    %v3058 = vld [vmem:[#allocation7 + $0x270] sm:$0xf]
    %v3059 = vld [vmem:[#allocation7 + $0x274] sm:$0xf]
    %v3060 = vld [vmem:[#allocation7 + $0x278] sm:$0xf]
    %v3061 = vld [vmem:[#allocation7 + $0x27c] sm:$0xf]
    %v3062 = vld [vmem:[#allocation7 + $0x280] sm:$0xf]
    %v3063 = vld [vmem:[#allocation7 + $0x284] sm:$0xf]
    %v3064 = vld [vmem:[#allocation7 + $0x288] sm:$0xf]
    %v3065 = vld [vmem:[#allocation7 + $0x28c] sm:$0xf]
    %v3066 = vld [vmem:[#allocation7 + $0x290] sm:$0xf]
    %v3067 = vld [vmem:[#allocation7 + $0x294] sm:$0xf]
    %v3068 = vld [vmem:[#allocation7 + $0x298] sm:$0xf]
    %v3069 = vld [vmem:[#allocation7 + $0x29c] sm:$0xf]
    %v3070 = vld [vmem:[#allocation7 + $0x2a0] sm:$0xf]
    %v3071 = vld [vmem:[#allocation7 + $0x2a4] sm:$0xf]
    %v3072 = vld [vmem:[#allocation7 + $0x2a8] sm:$0xf]
    %v3073 = vld [vmem:[#allocation7 + $0x2ac] sm:$0xf]
    %v3074 = vld [vmem:[#allocation7 + $0x2b0] sm:$0xf]
    %v3075 = vld [vmem:[#allocation7 + $0x2b4] sm:$0xf]
    %v3076 = vld [vmem:[#allocation7 + $0x2b8] sm:$0xf]
    %v3077 = vld [vmem:[#allocation7 + $0x2bc] sm:$0xf]
    %v3078 = vld [vmem:[#allocation7 + $0x2c0] sm:$0xf]
    %v3079 = vld [vmem:[#allocation7 + $0x2c4] sm:$0xf]
    %v3080 = vld [vmem:[#allocation7 + $0x2c8] sm:$0xf]
    %v3081 = vld [vmem:[#allocation7 + $0x2cc] sm:$0xf]
    %v3082 = vld [vmem:[#allocation7 + $0x2d0] sm:$0xf]
    %v3083 = vld [vmem:[#allocation7 + $0x2d4] sm:$0xf]
    %v3084 = vld [vmem:[#allocation7 + $0x2d8] sm:$0xf]
    %v3085 = vld [vmem:[#allocation7 + $0x2dc] sm:$0xf]
    %v3086 = vld [vmem:[#allocation7 + $0x2e0] sm:$0xf]
    %v3087 = vld [vmem:[#allocation7 + $0x2e4] sm:$0xf]
    %v3088 = vld [vmem:[#allocation7 + $0x2e8] sm:$0xf]
    %v3089 = vld [vmem:[#allocation7 + $0x2ec] sm:$0xf]
    %v3090 = vld [vmem:[#allocation7 + $0x2f0] sm:$0xf]
    %v3091 = vld [vmem:[#allocation7 + $0x2f4] sm:$0xf]
    %v3092 = vld [vmem:[#allocation7 + $0x2f8] sm:$0xf]
    %v3093 = vld [vmem:[#allocation7 + $0x2fc] sm:$0xf]
    %v3094 = vld [vmem:[#allocation7 + $0x300] sm:$0xf]
    %v3095 = vld [vmem:[#allocation7 + $0x304] sm:$0xf]
    %v3096 = vld [vmem:[#allocation7 + $0x308] sm:$0xf]
    %v3097 = vld [vmem:[#allocation7 + $0x30c] sm:$0xf]
    %v3098 = vld [vmem:[#allocation7 + $0x310] sm:$0xf]
    %v3099 = vld [vmem:[#allocation7 + $0x314] sm:$0xf]
    %v3100 = vld [vmem:[#allocation7 + $0x318] sm:$0xf]
    %v3101 = vld [vmem:[#allocation7 + $0x31c] sm:$0xf]
    %v3102 = vld [vmem:[#allocation7 + $0x320] sm:$0xf]
    %v3103 = vld [vmem:[#allocation7 + $0x324] sm:$0xf]
    %v3104 = vld [vmem:[#allocation7 + $0x328] sm:$0xf]
    %v3105 = vld [vmem:[#allocation7 + $0x32c] sm:$0xf]
    %v3106 = vld [vmem:[#allocation7 + $0x330] sm:$0xf]
    %v3107 = vld [vmem:[#allocation7 + $0x334] sm:$0xf]
    %v3108 = vld [vmem:[#allocation7 + $0x338] sm:$0xf]
    %v3109 = vld [vmem:[#allocation7 + $0x33c] sm:$0xf]
    %v3110 = vld [vmem:[#allocation7 + $0x340] sm:$0xf]
    %v3111 = vld [vmem:[#allocation7 + $0x344] sm:$0xf]
    %v3112 = vld [vmem:[#allocation7 + $0x348] sm:$0xf]
    %v3113 = vld [vmem:[#allocation7 + $0x34c] sm:$0xf]
    %v3114 = vld [vmem:[#allocation7 + $0x350] sm:$0xf]
    %v3115 = vld [vmem:[#allocation7 + $0x354] sm:$0xf]
    %v3116 = vld [vmem:[#allocation7 + $0x358] sm:$0xf]
    %v3117 = vld [vmem:[#allocation7 + $0x35c] sm:$0xf]
    %v3118 = vld [vmem:[#allocation7 + $0x360] sm:$0xf]
    %v3119 = vld [vmem:[#allocation7 + $0x364] sm:$0xf]
    %v3120 = vld [vmem:[#allocation7 + $0x368] sm:$0xf]
    %v3121 = vld [vmem:[#allocation7 + $0x36c] sm:$0xf]
    %v3122 = vld [vmem:[#allocation7 + $0x370] sm:$0xf]
    %v3123 = vld [vmem:[#allocation7 + $0x374] sm:$0xf]
    %v3124 = vld [vmem:[#allocation7 + $0x378] sm:$0xf]
    %v3125 = vld [vmem:[#allocation7 + $0x37c] sm:$0xf]
    %v3126 = vld [vmem:[#allocation7 + $0x380] sm:$0xf]
    %v3127 = vld [vmem:[#allocation7 + $0x384] sm:$0xf]
    %v3128 = vld [vmem:[#allocation7 + $0x388] sm:$0xf]
    %v3129 = vld [vmem:[#allocation7 + $0x38c] sm:$0xf]
    %v3130 = vld [vmem:[#allocation7 + $0x390] sm:$0xf]
    %v3131 = vld [vmem:[#allocation7 + $0x394] sm:$0xf]
    %v3132 = vld [vmem:[#allocation7 + $0x398] sm:$0xf]
    %v3133 = vld [vmem:[#allocation7 + $0x39c] sm:$0xf]
    %v3134 = vld [vmem:[#allocation7 + $0x3a0] sm:$0xf]
    %v3135 = vld [vmem:[#allocation7 + $0x3a4] sm:$0xf]
    %v3136 = vld [vmem:[#allocation7 + $0x3a8] sm:$0xf]
    %v3137 = vld [vmem:[#allocation7 + $0x3ac] sm:$0xf]
    %v3138 = vld [vmem:[#allocation7 + $0x3b0] sm:$0xf]
    %v3139 = vld [vmem:[#allocation7 + $0x3b4] sm:$0xf]
    %v3140 = vld [vmem:[#allocation7 + $0x3b8] sm:$0xf]
    %v3141 = vld [vmem:[#allocation7 + $0x3bc] sm:$0xf]
    %v3142 = vld [vmem:[#allocation7 + $0x3c0] sm:$0xf]
    %v3143 = vld [vmem:[#allocation7 + $0x3c4] sm:$0xf]
    %v3144 = vld [vmem:[#allocation7 + $0x3c8] sm:$0xf]
    %v3145 = vld [vmem:[#allocation7 + $0x3cc] sm:$0xf]
    %v3146 = vld [vmem:[#allocation7 + $0x3d0] sm:$0xf]
    %v3147 = vld [vmem:[#allocation7 + $0x3d4] sm:$0xf]
    %v3148 = vld [vmem:[#allocation7 + $0x3d8] sm:$0xf]
    %v3149 = vld [vmem:[#allocation7 + $0x3dc] sm:$0xf]
    %v3150 = vld [vmem:[#allocation7 + $0x3e0] sm:$0xf]
    %v3151 = vld [vmem:[#allocation7 + $0x3e4] sm:$0xf]
    %v3152 = vld [vmem:[#allocation7 + $0x3e8] sm:$0xf]
    %v3153 = vld [vmem:[#allocation7 + $0x3ec] sm:$0xf]
    %v3154 = vld [vmem:[#allocation7 + $0x3f0] sm:$0xf]
    %v3155 = vld [vmem:[#allocation7 + $0x3f4] sm:$0xf]
    %v3156 = vld [vmem:[#allocation7 + $0x3f8] sm:$0xf]
    %v3157 = vld [vmem:[#allocation7 + $0x3fc] sm:$0xf]
    %v3158 = vld [vmem:[%s10] sm:$0x1]
    %v3160 = vlaneseq
    %v3161 = vshrl.u32 %v3160, 7
    %v3162 = vsub.s32 0, %v3161
    %v3163 = vrot.slane %v3158, %v3162
    %v3421 = vunpack.c.l.b16 %v2902
    %v3422 = vunpack.c.l.b16 %v2903
    %v3423 = vunpack.c.l.b16 %v2904
    %v3424 = vunpack.c.l.b16 %v2905
    %v3425 = vunpack.c.l.b16 %v2906
    %v3426 = vunpack.c.l.b16 %v2907
    %v3427 = vunpack.c.l.b16 %v2908
    %v3428 = vunpack.c.l.b16 %v2909
    %v3429 = vunpack.c.l.b16 %v2910
    %v3430 = vunpack.c.l.b16 %v2911
    %v3431 = vunpack.c.l.b16 %v2912
    %v3432 = vunpack.c.l.b16 %v2913
    %v3433 = vunpack.c.l.b16 %v2914
    %v3434 = vunpack.c.l.b16 %v2915
    %v3435 = vunpack.c.l.b16 %v2916
    %v3436 = vunpack.c.l.b16 %v2917
    %v3437 = vunpack.c.l.b16 %v2918
    %v3438 = vunpack.c.l.b16 %v2919
    %v3439 = vunpack.c.l.b16 %v2920
    %v3440 = vunpack.c.l.b16 %v2921
    %v3441 = vunpack.c.l.b16 %v2922
    %v3442 = vunpack.c.l.b16 %v2923
    %v3443 = vunpack.c.l.b16 %v2924
    %v3444 = vunpack.c.l.b16 %v2925
    %v3445 = vunpack.c.l.b16 %v2926
    %v3446 = vunpack.c.l.b16 %v2927
    %v3447 = vunpack.c.l.b16 %v2928
    %v3448 = vunpack.c.l.b16 %v2929
    %v3449 = vunpack.c.l.b16 %v2930
    %v3450 = vunpack.c.l.b16 %v2931
    %v3451 = vunpack.c.l.b16 %v2932
    %v3452 = vunpack.c.l.b16 %v2933
    %v3453 = vunpack.c.l.b16 %v2934
    %v3454 = vunpack.c.l.b16 %v2935
    %v3455 = vunpack.c.l.b16 %v2936
    %v3456 = vunpack.c.l.b16 %v2937
    %v3457 = vunpack.c.l.b16 %v2938
    %v3458 = vunpack.c.l.b16 %v2939
    %v3459 = vunpack.c.l.b16 %v2940
    %v3460 = vunpack.c.l.b16 %v2941
    %v3461 = vunpack.c.l.b16 %v2942
    %v3462 = vunpack.c.l.b16 %v2943
    %v3463 = vunpack.c.l.b16 %v2944
    %v3464 = vunpack.c.l.b16 %v2945
    %v3465 = vunpack.c.l.b16 %v2946
    %v3466 = vunpack.c.l.b16 %v2947
    %v3467 = vunpack.c.l.b16 %v2948
    %v3468 = vunpack.c.l.b16 %v2949
    %v3469 = vunpack.c.l.b16 %v2950
    %v3470 = vunpack.c.l.b16 %v2951
    %v3471 = vunpack.c.l.b16 %v2952
    %v3472 = vunpack.c.l.b16 %v2953
    %v3473 = vunpack.c.l.b16 %v2954
    %v3474 = vunpack.c.l.b16 %v2955
    %v3475 = vunpack.c.l.b16 %v2956
    %v3476 = vunpack.c.l.b16 %v2957
    %v3477 = vunpack.c.l.b16 %v2958
    %v3478 = vunpack.c.l.b16 %v2959
    %v3479 = vunpack.c.l.b16 %v2960
    %v3480 = vunpack.c.l.b16 %v2961
    %v3481 = vunpack.c.l.b16 %v2962
    %v3482 = vunpack.c.l.b16 %v2963
    %v3483 = vunpack.c.l.b16 %v2964
    %v3484 = vunpack.c.l.b16 %v2965
    %v3485 = vunpack.c.l.b16 %v2966
    %v3486 = vunpack.c.l.b16 %v2967
    %v3487 = vunpack.c.l.b16 %v2968
    %v3488 = vunpack.c.l.b16 %v2969
    %v3489 = vunpack.c.l.b16 %v2970
    %v3490 = vunpack.c.l.b16 %v2971
    %v3491 = vunpack.c.l.b16 %v2972
    %v3492 = vunpack.c.l.b16 %v2973
    %v3493 = vunpack.c.l.b16 %v2974
    %v3494 = vunpack.c.l.b16 %v2975
    %v3495 = vunpack.c.l.b16 %v2976
    %v3496 = vunpack.c.l.b16 %v2977
    %v3497 = vunpack.c.l.b16 %v2978
    %v3498 = vunpack.c.l.b16 %v2979
    %v3499 = vunpack.c.l.b16 %v2980
    %v3500 = vunpack.c.l.b16 %v2981
    %v3501 = vunpack.c.l.b16 %v2982
    %v3502 = vunpack.c.l.b16 %v2983
    %v3503 = vunpack.c.l.b16 %v2984
    %v3504 = vunpack.c.l.b16 %v2985
    %v3505 = vunpack.c.l.b16 %v2986
    %v3506 = vunpack.c.l.b16 %v2987
    %v3507 = vunpack.c.l.b16 %v2988
    %v3508 = vunpack.c.l.b16 %v2989
    %v3509 = vunpack.c.l.b16 %v2990
    %v3510 = vunpack.c.l.b16 %v2991
    %v3511 = vunpack.c.l.b16 %v2992
    %v3512 = vunpack.c.l.b16 %v2993
    %v3513 = vunpack.c.l.b16 %v2994
    %v3514 = vunpack.c.l.b16 %v2995
    %v3515 = vunpack.c.l.b16 %v2996
    %v3516 = vunpack.c.l.b16 %v2997
    %v3517 = vunpack.c.l.b16 %v2998
    %v3518 = vunpack.c.l.b16 %v2999
    %v3519 = vunpack.c.l.b16 %v3000
    %v3520 = vunpack.c.l.b16 %v3001
    %v3521 = vunpack.c.l.b16 %v3002
    %v3522 = vunpack.c.l.b16 %v3003
    %v3523 = vunpack.c.l.b16 %v3004
    %v3524 = vunpack.c.l.b16 %v3005
    %v3525 = vunpack.c.l.b16 %v3006
    %v3526 = vunpack.c.l.b16 %v3007
    %v3527 = vunpack.c.l.b16 %v3008
    %v3528 = vunpack.c.l.b16 %v3009
    %v3529 = vunpack.c.l.b16 %v3010
    %v3530 = vunpack.c.l.b16 %v3011
    %v3531 = vunpack.c.l.b16 %v3012
    %v3532 = vunpack.c.l.b16 %v3013
    %v3533 = vunpack.c.l.b16 %v3014
    %v3534 = vunpack.c.l.b16 %v3015
    %v3535 = vunpack.c.l.b16 %v3016
    %v3536 = vunpack.c.l.b16 %v3017
    %v3537 = vunpack.c.l.b16 %v3018
    %v3538 = vunpack.c.l.b16 %v3019
    %v3539 = vunpack.c.l.b16 %v3020
    %v3540 = vunpack.c.l.b16 %v3021
    %v3541 = vunpack.c.l.b16 %v3022
    %v3542 = vunpack.c.l.b16 %v3023
    %v3543 = vunpack.c.l.b16 %v3024
    %v3544 = vunpack.c.l.b16 %v3025
    %v3545 = vunpack.c.l.b16 %v3026
    %v3546 = vunpack.c.l.b16 %v3027
    %v3547 = vunpack.c.l.b16 %v3028
    %v3548 = vunpack.c.l.b16 %v3029
    %v3549 = vunpack.c.l.b16 %v3030
    %v3550 = vunpack.c.l.b16 %v3031
    %v3551 = vunpack.c.l.b16 %v3032
    %v3552 = vunpack.c.l.b16 %v3033
    %v3553 = vunpack.c.l.b16 %v3034
    %v3554 = vunpack.c.l.b16 %v3035
    %v3555 = vunpack.c.l.b16 %v3036
    %v3556 = vunpack.c.l.b16 %v3037
    %v3557 = vunpack.c.l.b16 %v3038
    %v3558 = vunpack.c.l.b16 %v3039
    %v3559 = vunpack.c.l.b16 %v3040
    %v3560 = vunpack.c.l.b16 %v3041
    %v3561 = vunpack.c.l.b16 %v3042
    %v3562 = vunpack.c.l.b16 %v3043
    %v3563 = vunpack.c.l.b16 %v3044
    %v3564 = vunpack.c.l.b16 %v3045
    %v3565 = vunpack.c.l.b16 %v3046
    %v3566 = vunpack.c.l.b16 %v3047
    %v3567 = vunpack.c.l.b16 %v3048
    %v3568 = vunpack.c.l.b16 %v3049
    %v3569 = vunpack.c.l.b16 %v3050
    %v3570 = vunpack.c.l.b16 %v3051
    %v3571 = vunpack.c.l.b16 %v3052
    %v3572 = vunpack.c.l.b16 %v3053
    %v3573 = vunpack.c.l.b16 %v3054
    %v3574 = vunpack.c.l.b16 %v3055
    %v3575 = vunpack.c.l.b16 %v3056
    %v3576 = vunpack.c.l.b16 %v3057
    %v3577 = vunpack.c.l.b16 %v3058
    %v3578 = vunpack.c.l.b16 %v3059
    %v3579 = vunpack.c.l.b16 %v3060
    %v3580 = vunpack.c.l.b16 %v3061
    %v3581 = vunpack.c.l.b16 %v3062
    %v3582 = vunpack.c.l.b16 %v3063
    %v3583 = vunpack.c.l.b16 %v3064
    %v3584 = vunpack.c.l.b16 %v3065
    %v3585 = vunpack.c.l.b16 %v3066
    %v3586 = vunpack.c.l.b16 %v3067
    %v3587 = vunpack.c.l.b16 %v3068
    %v3588 = vunpack.c.l.b16 %v3069
    %v3589 = vunpack.c.l.b16 %v3070
    %v3590 = vunpack.c.l.b16 %v3071
    %v3591 = vunpack.c.l.b16 %v3072
    %v3592 = vunpack.c.l.b16 %v3073
    %v3593 = vunpack.c.l.b16 %v3074
    %v3594 = vunpack.c.l.b16 %v3075
    %v3595 = vunpack.c.l.b16 %v3076
    %v3596 = vunpack.c.l.b16 %v3077
    %v3597 = vunpack.c.l.b16 %v3078
    %v3598 = vunpack.c.l.b16 %v3079
    %v3599 = vunpack.c.l.b16 %v3080
    %v3600 = vunpack.c.l.b16 %v3081
    %v3601 = vunpack.c.l.b16 %v3082
    %v3602 = vunpack.c.l.b16 %v3083
    %v3603 = vunpack.c.l.b16 %v3084
    %v3604 = vunpack.c.l.b16 %v3085
    %v3605 = vunpack.c.l.b16 %v3086
    %v3606 = vunpack.c.l.b16 %v3087
    %v3607 = vunpack.c.l.b16 %v3088
    %v3608 = vunpack.c.l.b16 %v3089
    %v3609 = vunpack.c.l.b16 %v3090
    %v3610 = vunpack.c.l.b16 %v3091
    %v3611 = vunpack.c.l.b16 %v3092
    %v3612 = vunpack.c.l.b16 %v3093
    %v3613 = vunpack.c.l.b16 %v3094
    %v3614 = vunpack.c.l.b16 %v3095
    %v3615 = vunpack.c.l.b16 %v3096
    %v3616 = vunpack.c.l.b16 %v3097
    %v3617 = vunpack.c.l.b16 %v3098
    %v3618 = vunpack.c.l.b16 %v3099
    %v3619 = vunpack.c.l.b16 %v3100
    %v3620 = vunpack.c.l.b16 %v3101
    %v3621 = vunpack.c.l.b16 %v3102
    %v3622 = vunpack.c.l.b16 %v3103
    %v3623 = vunpack.c.l.b16 %v3104
    %v3624 = vunpack.c.l.b16 %v3105
    %v3625 = vunpack.c.l.b16 %v3106
    %v3626 = vunpack.c.l.b16 %v3107
    %v3627 = vunpack.c.l.b16 %v3108
    %v3628 = vunpack.c.l.b16 %v3109
    %v3629 = vunpack.c.l.b16 %v3110
    %v3630 = vunpack.c.l.b16 %v3111
    %v3631 = vunpack.c.l.b16 %v3112
    %v3632 = vunpack.c.l.b16 %v3113
    %v3633 = vunpack.c.l.b16 %v3114
    %v3634 = vunpack.c.l.b16 %v3115
    %v3635 = vunpack.c.l.b16 %v3116
    %v3636 = vunpack.c.l.b16 %v3117
    %v3637 = vunpack.c.l.b16 %v3118
    %v3638 = vunpack.c.l.b16 %v3119
    %v3639 = vunpack.c.l.b16 %v3120
    %v3640 = vunpack.c.l.b16 %v3121
    %v3641 = vunpack.c.l.b16 %v3122
    %v3642 = vunpack.c.l.b16 %v3123
    %v3643 = vunpack.c.l.b16 %v3124
    %v3644 = vunpack.c.l.b16 %v3125
    %v3645 = vunpack.c.l.b16 %v3126
    %v3646 = vunpack.c.l.b16 %v3127
    %v3647 = vunpack.c.l.b16 %v3128
    %v3648 = vunpack.c.l.b16 %v3129
    %v3649 = vunpack.c.l.b16 %v3130
    %v3650 = vunpack.c.l.b16 %v3131
    %v3651 = vunpack.c.l.b16 %v3132
    %v3652 = vunpack.c.l.b16 %v3133
    %v3653 = vunpack.c.l.b16 %v3134
    %v3654 = vunpack.c.l.b16 %v3135
    %v3655 = vunpack.c.l.b16 %v3136
    %v3656 = vunpack.c.l.b16 %v3137
    %v3657 = vunpack.c.l.b16 %v3138
    %v3658 = vunpack.c.l.b16 %v3139
    %v3659 = vunpack.c.l.b16 %v3140
    %v3660 = vunpack.c.l.b16 %v3141
    %v3661 = vunpack.c.l.b16 %v3142
    %v3662 = vunpack.c.l.b16 %v3143
    %v3663 = vunpack.c.l.b16 %v3144
    %v3664 = vunpack.c.l.b16 %v3145
    %v3665 = vunpack.c.l.b16 %v3146
    %v3666 = vunpack.c.l.b16 %v3147
    %v3667 = vunpack.c.l.b16 %v3148
    %v3668 = vunpack.c.l.b16 %v3149
    %v3669 = vunpack.c.l.b16 %v3150
    %v3670 = vunpack.c.l.b16 %v3151
    %v3671 = vunpack.c.l.b16 %v3152
    %v3672 = vunpack.c.l.b16 %v3153
    %v3673 = vunpack.c.l.b16 %v3154
    %v3674 = vunpack.c.l.b16 %v3155
    %v3675 = vunpack.c.l.b16 %v3156
    %v3676 = vunpack.c.l.b16 %v3157
    %v3677 = vpack.c.b16 %v3422, %v3421
    %v3678 = vpack.c.b16 %v3424, %v3423
    %v3679 = vpack.c.b16 %v3426, %v3425
    %v3680 = vpack.c.b16 %v3428, %v3427
    %v3681 = vpack.c.b16 %v3430, %v3429
    %v3682 = vpack.c.b16 %v3432, %v3431
    %v3683 = vpack.c.b16 %v3434, %v3433
    %v3684 = vpack.c.b16 %v3436, %v3435
    %v3685 = vpack.c.b16 %v3438, %v3437
    %v3686 = vpack.c.b16 %v3440, %v3439
    %v3687 = vpack.c.b16 %v3442, %v3441
    %v3688 = vpack.c.b16 %v3444, %v3443
    %v3689 = vpack.c.b16 %v3446, %v3445
    %v3690 = vpack.c.b16 %v3448, %v3447
    %v3691 = vpack.c.b16 %v3450, %v3449
    %v3692 = vpack.c.b16 %v3452, %v3451
    %v3693 = vpack.c.b16 %v3454, %v3453
    %v3694 = vpack.c.b16 %v3456, %v3455
    %v3695 = vpack.c.b16 %v3458, %v3457
    %v3696 = vpack.c.b16 %v3460, %v3459
    %v3697 = vpack.c.b16 %v3462, %v3461
    %v3698 = vpack.c.b16 %v3464, %v3463
    %v3699 = vpack.c.b16 %v3466, %v3465
    %v3700 = vpack.c.b16 %v3468, %v3467
    %v3701 = vpack.c.b16 %v3470, %v3469
    %v3702 = vpack.c.b16 %v3472, %v3471
    %v3703 = vpack.c.b16 %v3474, %v3473
    %v3704 = vpack.c.b16 %v3476, %v3475
    %v3705 = vpack.c.b16 %v3478, %v3477
    %v3706 = vpack.c.b16 %v3480, %v3479
    %v3707 = vpack.c.b16 %v3482, %v3481
    %v3708 = vpack.c.b16 %v3484, %v3483
    %v3709 = vpack.c.b16 %v3486, %v3485
    %v3710 = vpack.c.b16 %v3488, %v3487
    %v3711 = vpack.c.b16 %v3490, %v3489
    %v3712 = vpack.c.b16 %v3492, %v3491
    %v3713 = vpack.c.b16 %v3494, %v3493
    %v3714 = vpack.c.b16 %v3496, %v3495
    %v3715 = vpack.c.b16 %v3498, %v3497
    %v3716 = vpack.c.b16 %v3500, %v3499
    %v3717 = vpack.c.b16 %v3502, %v3501
    %v3718 = vpack.c.b16 %v3504, %v3503
    %v3719 = vpack.c.b16 %v3506, %v3505
    %v3720 = vpack.c.b16 %v3508, %v3507
    %v3721 = vpack.c.b16 %v3510, %v3509
    %v3722 = vpack.c.b16 %v3512, %v3511
    %v3723 = vpack.c.b16 %v3514, %v3513
    %v3724 = vpack.c.b16 %v3516, %v3515
    %v3725 = vpack.c.b16 %v3518, %v3517
    %v3726 = vpack.c.b16 %v3520, %v3519
    %v3727 = vpack.c.b16 %v3522, %v3521
    %v3728 = vpack.c.b16 %v3524, %v3523
    %v3729 = vpack.c.b16 %v3526, %v3525
    %v3730 = vpack.c.b16 %v3528, %v3527
    %v3731 = vpack.c.b16 %v3530, %v3529
    %v3732 = vpack.c.b16 %v3532, %v3531
    %v3733 = vpack.c.b16 %v3534, %v3533
    %v3734 = vpack.c.b16 %v3536, %v3535
    %v3735 = vpack.c.b16 %v3538, %v3537
    %v3736 = vpack.c.b16 %v3540, %v3539
    %v3737 = vpack.c.b16 %v3542, %v3541
    %v3738 = vpack.c.b16 %v3544, %v3543
    %v3739 = vpack.c.b16 %v3546, %v3545
    %v3740 = vpack.c.b16 %v3548, %v3547
    %v3741 = vpack.c.b16 %v3550, %v3549
    %v3742 = vpack.c.b16 %v3552, %v3551
    %v3743 = vpack.c.b16 %v3554, %v3553
    %v3744 = vpack.c.b16 %v3556, %v3555
    %v3745 = vpack.c.b16 %v3558, %v3557
    %v3746 = vpack.c.b16 %v3560, %v3559
    %v3747 = vpack.c.b16 %v3562, %v3561
    %v3748 = vpack.c.b16 %v3564, %v3563
    %v3749 = vpack.c.b16 %v3566, %v3565
    %v3750 = vpack.c.b16 %v3568, %v3567
    %v3751 = vpack.c.b16 %v3570, %v3569
    %v3752 = vpack.c.b16 %v3572, %v3571
    %v3753 = vpack.c.b16 %v3574, %v3573
    %v3754 = vpack.c.b16 %v3576, %v3575
    %v3755 = vpack.c.b16 %v3578, %v3577
    %v3756 = vpack.c.b16 %v3580, %v3579
    %v3757 = vpack.c.b16 %v3582, %v3581
    %v3758 = vpack.c.b16 %v3584, %v3583
    %v3759 = vpack.c.b16 %v3586, %v3585
    %v3760 = vpack.c.b16 %v3588, %v3587
    %v3761 = vpack.c.b16 %v3590, %v3589
    %v3762 = vpack.c.b16 %v3592, %v3591
    %v3763 = vpack.c.b16 %v3594, %v3593
    %v3764 = vpack.c.b16 %v3596, %v3595
    %v3765 = vpack.c.b16 %v3598, %v3597
    %v3766 = vpack.c.b16 %v3600, %v3599
    %v3767 = vpack.c.b16 %v3602, %v3601
    %v3768 = vpack.c.b16 %v3604, %v3603
    %v3769 = vpack.c.b16 %v3606, %v3605
    %v3770 = vpack.c.b16 %v3608, %v3607
    %v3771 = vpack.c.b16 %v3610, %v3609
    %v3772 = vpack.c.b16 %v3612, %v3611
    %v3773 = vpack.c.b16 %v3614, %v3613
    %v3774 = vpack.c.b16 %v3616, %v3615
    %v3775 = vpack.c.b16 %v3618, %v3617
    %v3776 = vpack.c.b16 %v3620, %v3619
    %v3777 = vpack.c.b16 %v3622, %v3621
    %v3778 = vpack.c.b16 %v3624, %v3623
    %v3779 = vpack.c.b16 %v3626, %v3625
    %v3780 = vpack.c.b16 %v3628, %v3627
    %v3781 = vpack.c.b16 %v3630, %v3629
    %v3782 = vpack.c.b16 %v3632, %v3631
    %v3783 = vpack.c.b16 %v3634, %v3633
    %v3784 = vpack.c.b16 %v3636, %v3635
    %v3785 = vpack.c.b16 %v3638, %v3637
    %v3786 = vpack.c.b16 %v3640, %v3639
    %v3787 = vpack.c.b16 %v3642, %v3641
    %v3788 = vpack.c.b16 %v3644, %v3643
    %v3789 = vpack.c.b16 %v3646, %v3645
    %v3790 = vpack.c.b16 %v3648, %v3647
    %v3791 = vpack.c.b16 %v3650, %v3649
    %v3792 = vpack.c.b16 %v3652, %v3651
    %v3793 = vpack.c.b16 %v3654, %v3653
    %v3794 = vpack.c.b16 %v3656, %v3655
    %v3795 = vpack.c.b16 %v3658, %v3657
    %v3796 = vpack.c.b16 %v3660, %v3659
    %v3797 = vpack.c.b16 %v3662, %v3661
    %v3798 = vpack.c.b16 %v3664, %v3663
    %v3799 = vpack.c.b16 %v3666, %v3665
    %v3800 = vpack.c.b16 %v3668, %v3667
    %v3801 = vpack.c.b16 %v3670, %v3669
    %v3802 = vpack.c.b16 %v3672, %v3671
    %v3803 = vpack.c.b16 %v3674, %v3673
    %v3804 = vpack.c.b16 %v3676, %v3675
    %3933 = vmatprep.subr.bf16.mxu0 0
    %3934 = vmatpush1.bf16.msra.mxu0 %v3677
    %3935 = vmatprep.subr.bf16.mxu0 0
    %3936 = vmatpush1.bf16.msra.mxu0 %v3678
    %3937 = vmatprep.subr.bf16.mxu0 0
    %3938 = vmatpush1.bf16.msra.mxu0 %v3679
    %3939 = vmatprep.subr.bf16.mxu0 0
    %3940 = vmatpush1.bf16.msra.mxu0 %v3680
    %3941 = vmatprep.subr.bf16.mxu0 0
    %3942 = vmatpush1.bf16.msra.mxu0 %v3681
    %3943 = vmatprep.subr.bf16.mxu0 0
    %3944 = vmatpush1.bf16.msra.mxu0 %v3682
    %3945 = vmatprep.subr.bf16.mxu0 0
    %3946 = vmatpush1.bf16.msra.mxu0 %v3683
    %3947 = vmatprep.subr.bf16.mxu0 0
    %3948 = vmatpush1.bf16.msra.mxu0 %v3684
    %3949 = vmatprep.subr.bf16.mxu0 0
    %3950 = vmatpush1.bf16.msra.mxu0 %v3685
    %3951 = vmatprep.subr.bf16.mxu0 0
    %3952 = vmatpush1.bf16.msra.mxu0 %v3686
    %3953 = vmatprep.subr.bf16.mxu0 0
    %3954 = vmatpush1.bf16.msra.mxu0 %v3687
    %3955 = vmatprep.subr.bf16.mxu0 0
    %3956 = vmatpush1.bf16.msra.mxu0 %v3688
    %3957 = vmatprep.subr.bf16.mxu0 0
    %3958 = vmatpush1.bf16.msra.mxu0 %v3689
    %3959 = vmatprep.subr.bf16.mxu0 0
    %3960 = vmatpush1.bf16.msra.mxu0 %v3690
    %3961 = vmatprep.subr.bf16.mxu0 0
    %3962 = vmatpush1.bf16.msra.mxu0 %v3691
    %3963 = vmatprep.subr.bf16.mxu0 0
    %3964 = vmatpush1.bf16.msra.mxu0 %v3692
    %3965 = vmatprep.mubr.bf16.mxu0 %v2775
    %3966 = vmatmul.mubr.bf16.gmra.mrb[0].mxu0 %v2774
    %v3967 = vpop.f32.mrb[0].mxu0
    %v3968 = vadd.f32 %v3163, %v3967
    %v3969 = vpop.f32.mrb[0].mxu0
    %v3970 = vpop.f32.mrb[0].mxu0
    %v3971 = vadd.f32 %v3163, %v3970
    %v3972 = vpop.f32.mrb[0].mxu0
    %3973 = vmatprep.mubr.bf16.mxu0 %v2791
    %3974 = vmatmul.mubr.bf16.gmra.mrb[0].mxu0 %v2790
    %v3975 = vpop.f32.mrb[0].mxu0
    %v3976 = vadd.f32 %v3163, %v3975
    %v3977 = vpop.f32.mrb[0].mxu0
    %v3978 = vpop.f32.mrb[0].mxu0
    %v3979 = vadd.f32 %v3163, %v3978
    %v3980 = vpop.f32.mrb[0].mxu0
    %3981 = vmatprep.mubr.bf16.mxu0 %v2807
    %3982 = vmatmul.mubr.bf16.gmra.mrb[0].mxu0 %v2806
    %v3983 = vpop.f32.mrb[0].mxu0
    %v3984 = vadd.f32 %v3163, %v3983
    %v3985 = vpop.f32.mrb[0].mxu0
    %v3986 = vpop.f32.mrb[0].mxu0
    %v3987 = vadd.f32 %v3163, %v3986
    %v3988 = vpop.f32.mrb[0].mxu0
    %3989 = vmatprep.mubr.bf16.mxu0 %v2823
    %3990 = vmatmul.mubr.bf16.gmra.mrb[0].mxu0 %v2822
    %v3991 = vpop.f32.mrb[0].mxu0
    %v3992 = vadd.f32 %v3163, %v3991
    %v3993 = vpop.f32.mrb[0].mxu0
    %v3994 = vpop.f32.mrb[0].mxu0
    %v3995 = vadd.f32 %v3163, %v3994
    %v3996 = vpop.f32.mrb[0].mxu0
    %3997 = vmatprep.mubr.bf16.mxu0 %v2839
    %3998 = vmatmul.mubr.bf16.gmra.mrb[0].mxu0 %v2838
    %v3999 = vpop.f32.mrb[0].mxu0
    %v4000 = vadd.f32 %v3163, %v3999
    %v4001 = vpop.f32.mrb[0].mxu0
    %v4002 = vpop.f32.mrb[0].mxu0
    %v4003 = vadd.f32 %v3163, %v4002
    %v4004 = vpop.f32.mrb[0].mxu0
    %4005 = vmatprep.mubr.bf16.mxu0 %v2855
    %4006 = vmatmul.mubr.bf16.gmra.mrb[0].mxu0 %v2854
    %v4007 = vpop.f32.mrb[0].mxu0
    %v4008 = vadd.f32 %v3163, %v4007
    %v4009 = vpop.f32.mrb[0].mxu0
    %v4010 = vpop.f32.mrb[0].mxu0
    %v4011 = vadd.f32 %v3163, %v4010
    %v4012 = vpop.f32.mrb[0].mxu0
    %4013 = vmatprep.mubr.bf16.mxu0 %v2871
    %4014 = vmatmul.mubr.bf16.gmra.mrb[0].mxu0 %v2870
    %v4015 = vpop.f32.mrb[0].mxu0
    %v4016 = vadd.f32 %v3163, %v4015
    %v4017 = vpop.f32.mrb[0].mxu0
    %v4018 = vpop.f32.mrb[0].mxu0
    %v4019 = vadd.f32 %v3163, %v4018
    %v4020 = vpop.f32.mrb[0].mxu0
    %4021 = vmatprep.mubr.bf16.mxu0 %v2887
    %4022 = vmatmul.mubr.bf16.gmra.mrb[0].mxu0 %v2886
    %v4023 = vpop.f32.mrb[0].mxu0
    %v4024 = vadd.f32 %v3163, %v4023
    %v4025 = vpop.f32.mrb[0].mxu0
    %v4026 = vpop.f32.mrb[0].mxu0
    %v4027 = vadd.f32 %v3163, %v4026
    %v4028 = vpop.f32.mrb[0].mxu0
    %4029 = vdwg.mxu0
    %4030 = vmatprep.subr.bf16.mxu0 0
    %4031 = vmatpush1.bf16.msra.mxu0 %v3693
    %4032 = vmatprep.subr.bf16.mxu0 0
    %4033 = vmatpush1.bf16.msra.mxu0 %v3694
    %4034 = vmatprep.subr.bf16.mxu0 0
    %4035 = vmatpush1.bf16.msra.mxu0 %v3695
    %4036 = vmatprep.subr.bf16.mxu0 0
    %4037 = vmatpush1.bf16.msra.mxu0 %v3696
    %4038 = vmatprep.subr.bf16.mxu0 0
    %4039 = vmatpush1.bf16.msra.mxu0 %v3697
    %4040 = vmatprep.subr.bf16.mxu0 0
    %4041 = vmatpush1.bf16.msra.mxu0 %v3698
    %4042 = vmatprep.subr.bf16.mxu0 0
    %4043 = vmatpush1.bf16.msra.mxu0 %v3699
    %4044 = vmatprep.subr.bf16.mxu0 0
    %4045 = vmatpush1.bf16.msra.mxu0 %v3700
    %4046 = vmatprep.subr.bf16.mxu0 0
    %4047 = vmatpush1.bf16.msra.mxu0 %v3701
    %4048 = vmatprep.subr.bf16.mxu0 0
    %4049 = vmatpush1.bf16.msra.mxu0 %v3702
    %4050 = vmatprep.subr.bf16.mxu0 0
    %4051 = vmatpush1.bf16.msra.mxu0 %v3703
    %4052 = vmatprep.subr.bf16.mxu0 0
    %4053 = vmatpush1.bf16.msra.mxu0 %v3704
    %4054 = vmatprep.subr.bf16.mxu0 0
    %4055 = vmatpush1.bf16.msra.mxu0 %v3705
    %4056 = vmatprep.subr.bf16.mxu0 0
    %4057 = vmatpush1.bf16.msra.mxu0 %v3706
    %4058 = vmatprep.subr.bf16.mxu0 0
    %4059 = vmatpush1.bf16.msra.mxu0 %v3707
    %4060 = vmatprep.subr.bf16.mxu0 0
    %4061 = vmatpush1.bf16.msra.mxu0 %v3708
    %4062 = vmatprep.mubr.bf16.mxu0 %v2777
    %4063 = vmatmul.mubr.bf16.gmra.mrb[0].mxu0 %v2776
    %v4064 = vpop.f32.mrb[0].mxu0
    %v4065 = vadd.f32 %v3968, %v4064
    %v4066 = vpop.f32.mrb[0].mxu0
    %v4067 = vpop.f32.mrb[0].mxu0
    %v4068 = vadd.f32 %v3971, %v4067
    %v4069 = vpop.f32.mrb[0].mxu0
    %4070 = vmatprep.mubr.bf16.mxu0 %v2793
    %4071 = vmatmul.mubr.bf16.gmra.mrb[0].mxu0 %v2792
    %v4072 = vpop.f32.mrb[0].mxu0
    %v4073 = vadd.f32 %v3976, %v4072
    %v4074 = vpop.f32.mrb[0].mxu0
    %v4075 = vpop.f32.mrb[0].mxu0
    %v4076 = vadd.f32 %v3979, %v4075
    %v4077 = vpop.f32.mrb[0].mxu0
    %4078 = vmatprep.mubr.bf16.mxu0 %v2809
    %4079 = vmatmul.mubr.bf16.gmra.mrb[0].mxu0 %v2808
    %v4080 = vpop.f32.mrb[0].mxu0
    %v4081 = vadd.f32 %v3984, %v4080
    %v4082 = vpop.f32.mrb[0].mxu0
    %v4083 = vpop.f32.mrb[0].mxu0
    %v4084 = vadd.f32 %v3987, %v4083
    %v4085 = vpop.f32.mrb[0].mxu0
    %4086 = vmatprep.mubr.bf16.mxu0 %v2825
    %4087 = vmatmul.mubr.bf16.gmra.mrb[0].mxu0 %v2824
    %v4088 = vpop.f32.mrb[0].mxu0
    %v4089 = vadd.f32 %v3992, %v4088
    %v4090 = vpop.f32.mrb[0].mxu0
    %v4091 = vpop.f32.mrb[0].mxu0
    %v4092 = vadd.f32 %v3995, %v4091
    %v4093 = vpop.f32.mrb[0].mxu0
    %4094 = vmatprep.mubr.bf16.mxu0 %v2841
    %4095 = vmatmul.mubr.bf16.gmra.mrb[0].mxu0 %v2840
    %v4096 = vpop.f32.mrb[0].mxu0
    %v4097 = vadd.f32 %v4000, %v4096
    %v4098 = vpop.f32.mrb[0].mxu0
    %v4099 = vpop.f32.mrb[0].mxu0
    %v4100 = vadd.f32 %v4003, %v4099
    %v4101 = vpop.f32.mrb[0].mxu0
    %4102 = vmatprep.mubr.bf16.mxu0 %v2857
    %4103 = vmatmul.mubr.bf16.gmra.mrb[0].mxu0 %v2856
    %v4104 = vpop.f32.mrb[0].mxu0
    %v4105 = vadd.f32 %v4008, %v4104
    %v4106 = vpop.f32.mrb[0].mxu0
    %v4107 = vpop.f32.mrb[0].mxu0
    %v4108 = vadd.f32 %v4011, %v4107
    %v4109 = vpop.f32.mrb[0].mxu0
    %4110 = vmatprep.mubr.bf16.mxu0 %v2873
    %4111 = vmatmul.mubr.bf16.gmra.mrb[0].mxu0 %v2872
    %v4112 = vpop.f32.mrb[0].mxu0
    %v4113 = vadd.f32 %v4016, %v4112
    %v4114 = vpop.f32.mrb[0].mxu0
    %v4115 = vpop.f32.mrb[0].mxu0
    %v4116 = vadd.f32 %v4019, %v4115
    %v4117 = vpop.f32.mrb[0].mxu0
    %4118 = vmatprep.mubr.bf16.mxu0 %v2889
    %4119 = vmatmul.mubr.bf16.gmra.mrb[0].mxu0 %v2888
    %v4120 = vpop.f32.mrb[0].mxu0
    %v4121 = vadd.f32 %v4024, %v4120
    %v4122 = vpop.f32.mrb[0].mxu0
    %v4123 = vpop.f32.mrb[0].mxu0
    %v4124 = vadd.f32 %v4027, %v4123
    %v4125 = vpop.f32.mrb[0].mxu0
    %4126 = vdwg.mxu0
    %4127 = vmatprep.subr.bf16.mxu0 0
    %4128 = vmatpush1.bf16.msra.mxu0 %v3709
    %4129 = vmatprep.subr.bf16.mxu0 0
    %4130 = vmatpush1.bf16.msra.mxu0 %v3710
    %4131 = vmatprep.subr.bf16.mxu0 0
    %4132 = vmatpush1.bf16.msra.mxu0 %v3711
    %4133 = vmatprep.subr.bf16.mxu0 0
    %4134 = vmatpush1.bf16.msra.mxu0 %v3712
    %4135 = vmatprep.subr.bf16.mxu0 0
    %4136 = vmatpush1.bf16.msra.mxu0 %v3713
    %4137 = vmatprep.subr.bf16.mxu0 0
    %4138 = vmatpush1.bf16.msra.mxu0 %v3714
    %4139 = vmatprep.subr.bf16.mxu0 0
    %4140 = vmatpush1.bf16.msra.mxu0 %v3715
    %4141 = vmatprep.subr.bf16.mxu0 0
    %4142 = vmatpush1.bf16.msra.mxu0 %v3716
    %4143 = vmatprep.subr.bf16.mxu0 0
    %4144 = vmatpush1.bf16.msra.mxu0 %v3717
    %4145 = vmatprep.subr.bf16.mxu0 0
    %4146 = vmatpush1.bf16.msra.mxu0 %v3718
    %4147 = vmatprep.subr.bf16.mxu0 0
    %4148 = vmatpush1.bf16.msra.mxu0 %v3719
    %4149 = vmatprep.subr.bf16.mxu0 0
    %4150 = vmatpush1.bf16.msra.mxu0 %v3720
    %4151 = vmatprep.subr.bf16.mxu0 0
    %4152 = vmatpush1.bf16.msra.mxu0 %v3721
    %4153 = vmatprep.subr.bf16.mxu0 0
    %4154 = vmatpush1.bf16.msra.mxu0 %v3722
    %4155 = vmatprep.subr.bf16.mxu0 0
    %4156 = vmatpush1.bf16.msra.mxu0 %v3723
    %4157 = vmatprep.subr.bf16.mxu0 0
    %4158 = vmatpush1.bf16.msra.mxu0 %v3724
    %4159 = vmatprep.mubr.bf16.mxu0 %v2779
    %4160 = vmatmul.mubr.bf16.gmra.mrb[0].mxu0 %v2778
    %v4161 = vpop.f32.mrb[0].mxu0
    %v4162 = vadd.f32 %v4065, %v4161
    %v4163 = vpop.f32.mrb[0].mxu0
    %v4164 = vpop.f32.mrb[0].mxu0
    %v4165 = vadd.f32 %v4068, %v4164
    %v4166 = vpop.f32.mrb[0].mxu0
    %4167 = vmatprep.mubr.bf16.mxu0 %v2795
    %4168 = vmatmul.mubr.bf16.gmra.mrb[0].mxu0 %v2794
    %v4169 = vpop.f32.mrb[0].mxu0
    %v4170 = vadd.f32 %v4073, %v4169
    %v4171 = vpop.f32.mrb[0].mxu0
    %v4172 = vpop.f32.mrb[0].mxu0
    %v4173 = vadd.f32 %v4076, %v4172
    %v4174 = vpop.f32.mrb[0].mxu0
    %4175 = vmatprep.mubr.bf16.mxu0 %v2811
    %4176 = vmatmul.mubr.bf16.gmra.mrb[0].mxu0 %v2810
    %v4177 = vpop.f32.mrb[0].mxu0
    %v4178 = vadd.f32 %v4081, %v4177
    %v4179 = vpop.f32.mrb[0].mxu0
    %v4180 = vpop.f32.mrb[0].mxu0
    %v4181 = vadd.f32 %v4084, %v4180
    %v4182 = vpop.f32.mrb[0].mxu0
    %4183 = vmatprep.mubr.bf16.mxu0 %v2827
    %4184 = vmatmul.mubr.bf16.gmra.mrb[0].mxu0 %v2826
    %v4185 = vpop.f32.mrb[0].mxu0
    %v4186 = vadd.f32 %v4089, %v4185
    %v4187 = vpop.f32.mrb[0].mxu0
    %v4188 = vpop.f32.mrb[0].mxu0
    %v4189 = vadd.f32 %v4092, %v4188
    %v4190 = vpop.f32.mrb[0].mxu0
    %4191 = vmatprep.mubr.bf16.mxu0 %v2843
    %4192 = vmatmul.mubr.bf16.gmra.mrb[0].mxu0 %v2842
    %v4193 = vpop.f32.mrb[0].mxu0
    %v4194 = vadd.f32 %v4097, %v4193
    %v4195 = vpop.f32.mrb[0].mxu0
    %v4196 = vpop.f32.mrb[0].mxu0
    %v4197 = vadd.f32 %v4100, %v4196
    %v4198 = vpop.f32.mrb[0].mxu0
    %4199 = vmatprep.mubr.bf16.mxu0 %v2859
    %4200 = vmatmul.mubr.bf16.gmra.mrb[0].mxu0 %v2858
    %v4201 = vpop.f32.mrb[0].mxu0
    %v4202 = vadd.f32 %v4105, %v4201
    %v4203 = vpop.f32.mrb[0].mxu0
    %v4204 = vpop.f32.mrb[0].mxu0
    %v4205 = vadd.f32 %v4108, %v4204
    %v4206 = vpop.f32.mrb[0].mxu0
    %4207 = vmatprep.mubr.bf16.mxu0 %v2875
    %4208 = vmatmul.mubr.bf16.gmra.mrb[0].mxu0 %v2874
    %v4209 = vpop.f32.mrb[0].mxu0
    %v4210 = vadd.f32 %v4113, %v4209
    %v4211 = vpop.f32.mrb[0].mxu0
    %v4212 = vpop.f32.mrb[0].mxu0
    %v4213 = vadd.f32 %v4116, %v4212
    %v4214 = vpop.f32.mrb[0].mxu0
    %4215 = vmatprep.mubr.bf16.mxu0 %v2891
    %4216 = vmatmul.mubr.bf16.gmra.mrb[0].mxu0 %v2890
    %v4217 = vpop.f32.mrb[0].mxu0
    %v4218 = vadd.f32 %v4121, %v4217
    %v4219 = vpop.f32.mrb[0].mxu0
    %v4220 = vpop.f32.mrb[0].mxu0
    %v4221 = vadd.f32 %v4124, %v4220
    %v4222 = vpop.f32.mrb[0].mxu0
    %4223 = vdwg.mxu0
    %4224 = vmatprep.subr.bf16.mxu0 0
    %4225 = vmatpush1.bf16.msra.mxu0 %v3725
    %4226 = vmatprep.subr.bf16.mxu0 0
    %4227 = vmatpush1.bf16.msra.mxu0 %v3726
    %4228 = vmatprep.subr.bf16.mxu0 0
    %4229 = vmatpush1.bf16.msra.mxu0 %v3727
    %4230 = vmatprep.subr.bf16.mxu0 0
    %4231 = vmatpush1.bf16.msra.mxu0 %v3728
    %4232 = vmatprep.subr.bf16.mxu0 0
    %4233 = vmatpush1.bf16.msra.mxu0 %v3729
    %4234 = vmatprep.subr.bf16.mxu0 0
    %4235 = vmatpush1.bf16.msra.mxu0 %v3730
    %4236 = vmatprep.subr.bf16.mxu0 0
    %4237 = vmatpush1.bf16.msra.mxu0 %v3731
    %4238 = vmatprep.subr.bf16.mxu0 0
    %4239 = vmatpush1.bf16.msra.mxu0 %v3732
    %4240 = vmatprep.subr.bf16.mxu0 0
    %4241 = vmatpush1.bf16.msra.mxu0 %v3733
    %4242 = vmatprep.subr.bf16.mxu0 0
    %4243 = vmatpush1.bf16.msra.mxu0 %v3734
    %4244 = vmatprep.subr.bf16.mxu0 0
    %4245 = vmatpush1.bf16.msra.mxu0 %v3735
    %4246 = vmatprep.subr.bf16.mxu0 0
    %4247 = vmatpush1.bf16.msra.mxu0 %v3736
    %4248 = vmatprep.subr.bf16.mxu0 0
    %4249 = vmatpush1.bf16.msra.mxu0 %v3737
    %4250 = vmatprep.subr.bf16.mxu0 0
    %4251 = vmatpush1.bf16.msra.mxu0 %v3738
    %4252 = vmatprep.subr.bf16.mxu0 0
    %4253 = vmatpush1.bf16.msra.mxu0 %v3739
    %4254 = vmatprep.subr.bf16.mxu0 0
    %4255 = vmatpush1.bf16.msra.mxu0 %v3740
    %4256 = vmatprep.mubr.bf16.mxu0 %v2781
    %4257 = vmatmul.mubr.bf16.gmra.mrb[0].mxu0 %v2780
    %v4258 = vpop.f32.mrb[0].mxu0
    %v4259 = vadd.f32 %v4162, %v4258
    %v4260 = vpop.f32.mrb[0].mxu0
    %v4261 = vpop.f32.mrb[0].mxu0
    %v4262 = vadd.f32 %v4165, %v4261
    %v4263 = vpop.f32.mrb[0].mxu0
    %4264 = vmatprep.mubr.bf16.mxu0 %v2797
    %4265 = vmatmul.mubr.bf16.gmra.mrb[0].mxu0 %v2796
    %v4266 = vpop.f32.mrb[0].mxu0
    %v4267 = vadd.f32 %v4170, %v4266
    %v4268 = vpop.f32.mrb[0].mxu0
    %v4269 = vpop.f32.mrb[0].mxu0
    %v4270 = vadd.f32 %v4173, %v4269
    %v4271 = vpop.f32.mrb[0].mxu0
    %4272 = vmatprep.mubr.bf16.mxu0 %v2813
    %4273 = vmatmul.mubr.bf16.gmra.mrb[0].mxu0 %v2812
    %v4274 = vpop.f32.mrb[0].mxu0
    %v4275 = vadd.f32 %v4178, %v4274
    %v4276 = vpop.f32.mrb[0].mxu0
    %v4277 = vpop.f32.mrb[0].mxu0
    %v4278 = vadd.f32 %v4181, %v4277
    %v4279 = vpop.f32.mrb[0].mxu0
    %4280 = vmatprep.mubr.bf16.mxu0 %v2829
    %4281 = vmatmul.mubr.bf16.gmra.mrb[0].mxu0 %v2828
    %v4282 = vpop.f32.mrb[0].mxu0
    %v4283 = vadd.f32 %v4186, %v4282
    %v4284 = vpop.f32.mrb[0].mxu0
    %v4285 = vpop.f32.mrb[0].mxu0
    %v4286 = vadd.f32 %v4189, %v4285
    %v4287 = vpop.f32.mrb[0].mxu0
    %4288 = vmatprep.mubr.bf16.mxu0 %v2845
    %4289 = vmatmul.mubr.bf16.gmra.mrb[0].mxu0 %v2844
    %v4290 = vpop.f32.mrb[0].mxu0
    %v4291 = vadd.f32 %v4194, %v4290
    %v4292 = vpop.f32.mrb[0].mxu0
    %v4293 = vpop.f32.mrb[0].mxu0
    %v4294 = vadd.f32 %v4197, %v4293
    %v4295 = vpop.f32.mrb[0].mxu0
    %4296 = vmatprep.mubr.bf16.mxu0 %v2861
    %4297 = vmatmul.mubr.bf16.gmra.mrb[0].mxu0 %v2860
    %v4298 = vpop.f32.mrb[0].mxu0
    %v4299 = vadd.f32 %v4202, %v4298
    %v4300 = vpop.f32.mrb[0].mxu0
    %v4301 = vpop.f32.mrb[0].mxu0
    %v4302 = vadd.f32 %v4205, %v4301
    %v4303 = vpop.f32.mrb[0].mxu0
    %4304 = vmatprep.mubr.bf16.mxu0 %v2877
    %4305 = vmatmul.mubr.bf16.gmra.mrb[0].mxu0 %v2876
    %v4306 = vpop.f32.mrb[0].mxu0
    %v4307 = vadd.f32 %v4210, %v4306
    %v4308 = vpop.f32.mrb[0].mxu0
    %v4309 = vpop.f32.mrb[0].mxu0
    %v4310 = vadd.f32 %v4213, %v4309
    %v4311 = vpop.f32.mrb[0].mxu0
    %4312 = vmatprep.mubr.bf16.mxu0 %v2893
    %4313 = vmatmul.mubr.bf16.gmra.mrb[0].mxu0 %v2892
    %v4314 = vpop.f32.mrb[0].mxu0
    %v4315 = vadd.f32 %v4218, %v4314
    %v4316 = vpop.f32.mrb[0].mxu0
    %v4317 = vpop.f32.mrb[0].mxu0
    %v4318 = vadd.f32 %v4221, %v4317
    %v4319 = vpop.f32.mrb[0].mxu0
    %4320 = vdwg.mxu0
    %4321 = vmatprep.subr.bf16.mxu0 0
    %4322 = vmatpush1.bf16.msra.mxu0 %v3741
    %4323 = vmatprep.subr.bf16.mxu0 0
    %4324 = vmatpush1.bf16.msra.mxu0 %v3742
    %4325 = vmatprep.subr.bf16.mxu0 0
    %4326 = vmatpush1.bf16.msra.mxu0 %v3743
    %4327 = vmatprep.subr.bf16.mxu0 0
    %4328 = vmatpush1.bf16.msra.mxu0 %v3744
    %4329 = vmatprep.subr.bf16.mxu0 0
    %4330 = vmatpush1.bf16.msra.mxu0 %v3745
    %4331 = vmatprep.subr.bf16.mxu0 0
    %4332 = vmatpush1.bf16.msra.mxu0 %v3746
    %4333 = vmatprep.subr.bf16.mxu0 0
    %4334 = vmatpush1.bf16.msra.mxu0 %v3747
    %4335 = vmatprep.subr.bf16.mxu0 0
    %4336 = vmatpush1.bf16.msra.mxu0 %v3748
    %4337 = vmatprep.subr.bf16.mxu0 0
    %4338 = vmatpush1.bf16.msra.mxu0 %v3749
    %4339 = vmatprep.subr.bf16.mxu0 0
    %4340 = vmatpush1.bf16.msra.mxu0 %v3750
    %4341 = vmatprep.subr.bf16.mxu0 0
    %4342 = vmatpush1.bf16.msra.mxu0 %v3751
    %4343 = vmatprep.subr.bf16.mxu0 0
    %4344 = vmatpush1.bf16.msra.mxu0 %v3752
    %4345 = vmatprep.subr.bf16.mxu0 0
    %4346 = vmatpush1.bf16.msra.mxu0 %v3753
    %4347 = vmatprep.subr.bf16.mxu0 0
    %4348 = vmatpush1.bf16.msra.mxu0 %v3754
    %4349 = vmatprep.subr.bf16.mxu0 0
    %4350 = vmatpush1.bf16.msra.mxu0 %v3755
    %4351 = vmatprep.subr.bf16.mxu0 0
    %4352 = vmatpush1.bf16.msra.mxu0 %v3756
    %4353 = vmatprep.mubr.bf16.mxu0 %v2783
    %4354 = vmatmul.mubr.bf16.gmra.mrb[0].mxu0 %v2782
    %v4355 = vpop.f32.mrb[0].mxu0
    %v4356 = vadd.f32 %v4259, %v4355
    %v4357 = vpop.f32.mrb[0].mxu0
    %v4358 = vpop.f32.mrb[0].mxu0
    %v4359 = vadd.f32 %v4262, %v4358
    %v4360 = vpop.f32.mrb[0].mxu0
    %4361 = vmatprep.mubr.bf16.mxu0 %v2799
    %4362 = vmatmul.mubr.bf16.gmra.mrb[0].mxu0 %v2798
    %v4363 = vpop.f32.mrb[0].mxu0
    %v4364 = vadd.f32 %v4267, %v4363
    %v4365 = vpop.f32.mrb[0].mxu0
    %v4366 = vpop.f32.mrb[0].mxu0
    %v4367 = vadd.f32 %v4270, %v4366
    %v4368 = vpop.f32.mrb[0].mxu0
    %4369 = vmatprep.mubr.bf16.mxu0 %v2815
    %4370 = vmatmul.mubr.bf16.gmra.mrb[0].mxu0 %v2814
    %v4371 = vpop.f32.mrb[0].mxu0
    %v4372 = vadd.f32 %v4275, %v4371
    %v4373 = vpop.f32.mrb[0].mxu0
    %v4374 = vpop.f32.mrb[0].mxu0
    %v4375 = vadd.f32 %v4278, %v4374
    %v4376 = vpop.f32.mrb[0].mxu0
    %4377 = vmatprep.mubr.bf16.mxu0 %v2831
    %4378 = vmatmul.mubr.bf16.gmra.mrb[0].mxu0 %v2830
    %v4379 = vpop.f32.mrb[0].mxu0
    %v4380 = vadd.f32 %v4283, %v4379
    %v4381 = vpop.f32.mrb[0].mxu0
    %v4382 = vpop.f32.mrb[0].mxu0
    %v4383 = vadd.f32 %v4286, %v4382
    %v4384 = vpop.f32.mrb[0].mxu0
    %4385 = vmatprep.mubr.bf16.mxu0 %v2847
    %4386 = vmatmul.mubr.bf16.gmra.mrb[0].mxu0 %v2846
    %v4387 = vpop.f32.mrb[0].mxu0
    %v4388 = vadd.f32 %v4291, %v4387
    %v4389 = vpop.f32.mrb[0].mxu0
    %v4390 = vpop.f32.mrb[0].mxu0
    %v4391 = vadd.f32 %v4294, %v4390
    %v4392 = vpop.f32.mrb[0].mxu0
    %4393 = vmatprep.mubr.bf16.mxu0 %v2863
    %4394 = vmatmul.mubr.bf16.gmra.mrb[0].mxu0 %v2862
    %v4395 = vpop.f32.mrb[0].mxu0
    %v4396 = vadd.f32 %v4299, %v4395
    %v4397 = vpop.f32.mrb[0].mxu0
    %v4398 = vpop.f32.mrb[0].mxu0
    %v4399 = vadd.f32 %v4302, %v4398
    %v4400 = vpop.f32.mrb[0].mxu0
    %4401 = vmatprep.mubr.bf16.mxu0 %v2879
    %4402 = vmatmul.mubr.bf16.gmra.mrb[0].mxu0 %v2878
    %v4403 = vpop.f32.mrb[0].mxu0
    %v4404 = vadd.f32 %v4307, %v4403
    %v4405 = vpop.f32.mrb[0].mxu0
    %v4406 = vpop.f32.mrb[0].mxu0
    %v4407 = vadd.f32 %v4310, %v4406
    %v4408 = vpop.f32.mrb[0].mxu0
    %4409 = vmatprep.mubr.bf16.mxu0 %v2895
    %4410 = vmatmul.mubr.bf16.gmra.mrb[0].mxu0 %v2894
    %v4411 = vpop.f32.mrb[0].mxu0
    %v4412 = vadd.f32 %v4315, %v4411
    %v4413 = vpop.f32.mrb[0].mxu0
    %v4414 = vpop.f32.mrb[0].mxu0
    %v4415 = vadd.f32 %v4318, %v4414
    %v4416 = vpop.f32.mrb[0].mxu0
    %4417 = vdwg.mxu0
    %4418 = vmatprep.subr.bf16.mxu0 0
    %4419 = vmatpush1.bf16.msra.mxu0 %v3757
    %4420 = vmatprep.subr.bf16.mxu0 0
    %4421 = vmatpush1.bf16.msra.mxu0 %v3758
    %4422 = vmatprep.subr.bf16.mxu0 0
    %4423 = vmatpush1.bf16.msra.mxu0 %v3759
    %4424 = vmatprep.subr.bf16.mxu0 0
    %4425 = vmatpush1.bf16.msra.mxu0 %v3760
    %4426 = vmatprep.subr.bf16.mxu0 0
    %4427 = vmatpush1.bf16.msra.mxu0 %v3761
    %4428 = vmatprep.subr.bf16.mxu0 0
    %4429 = vmatpush1.bf16.msra.mxu0 %v3762
    %4430 = vmatprep.subr.bf16.mxu0 0
    %4431 = vmatpush1.bf16.msra.mxu0 %v3763
    %4432 = vmatprep.subr.bf16.mxu0 0
    %4433 = vmatpush1.bf16.msra.mxu0 %v3764
    %4434 = vmatprep.subr.bf16.mxu0 0
    %4435 = vmatpush1.bf16.msra.mxu0 %v3765
    %4436 = vmatprep.subr.bf16.mxu0 0
    %4437 = vmatpush1.bf16.msra.mxu0 %v3766
    %4438 = vmatprep.subr.bf16.mxu0 0
    %4439 = vmatpush1.bf16.msra.mxu0 %v3767
    %4440 = vmatprep.subr.bf16.mxu0 0
    %4441 = vmatpush1.bf16.msra.mxu0 %v3768
    %4442 = vmatprep.subr.bf16.mxu0 0
    %4443 = vmatpush1.bf16.msra.mxu0 %v3769
    %4444 = vmatprep.subr.bf16.mxu0 0
    %4445 = vmatpush1.bf16.msra.mxu0 %v3770
    %4446 = vmatprep.subr.bf16.mxu0 0
    %4447 = vmatpush1.bf16.msra.mxu0 %v3771
    %4448 = vmatprep.subr.bf16.mxu0 0
    %4449 = vmatpush1.bf16.msra.mxu0 %v3772
    %4450 = vmatprep.mubr.bf16.mxu0 %v2785
    %4451 = vmatmul.mubr.bf16.gmra.mrb[0].mxu0 %v2784
    %v4452 = vpop.f32.mrb[0].mxu0
    %v4453 = vadd.f32 %v4356, %v4452
    %v4454 = vpop.f32.mrb[0].mxu0
    %v4455 = vpop.f32.mrb[0].mxu0
    %v4456 = vadd.f32 %v4359, %v4455
    %v4457 = vpop.f32.mrb[0].mxu0
    %4458 = vmatprep.mubr.bf16.mxu0 %v2801
    %4459 = vmatmul.mubr.bf16.gmra.mrb[0].mxu0 %v2800
    %v4460 = vpop.f32.mrb[0].mxu0
    %v4461 = vadd.f32 %v4364, %v4460
    %v4462 = vpop.f32.mrb[0].mxu0
    %v4463 = vpop.f32.mrb[0].mxu0
    %v4464 = vadd.f32 %v4367, %v4463
    %v4465 = vpop.f32.mrb[0].mxu0
    %4466 = vmatprep.mubr.bf16.mxu0 %v2817
    %4467 = vmatmul.mubr.bf16.gmra.mrb[0].mxu0 %v2816
    %v4468 = vpop.f32.mrb[0].mxu0
    %v4469 = vadd.f32 %v4372, %v4468
    %v4470 = vpop.f32.mrb[0].mxu0
    %v4471 = vpop.f32.mrb[0].mxu0
    %v4472 = vadd.f32 %v4375, %v4471
    %v4473 = vpop.f32.mrb[0].mxu0
    %4474 = vmatprep.mubr.bf16.mxu0 %v2833
    %4475 = vmatmul.mubr.bf16.gmra.mrb[0].mxu0 %v2832
    %v4476 = vpop.f32.mrb[0].mxu0
    %v4477 = vadd.f32 %v4380, %v4476
    %v4478 = vpop.f32.mrb[0].mxu0
    %v4479 = vpop.f32.mrb[0].mxu0
    %v4480 = vadd.f32 %v4383, %v4479
    %v4481 = vpop.f32.mrb[0].mxu0
    %4482 = vmatprep.mubr.bf16.mxu0 %v2849
    %4483 = vmatmul.mubr.bf16.gmra.mrb[0].mxu0 %v2848
    %v4484 = vpop.f32.mrb[0].mxu0
    %v4485 = vadd.f32 %v4388, %v4484
    %v4486 = vpop.f32.mrb[0].mxu0
    %v4487 = vpop.f32.mrb[0].mxu0
    %v4488 = vadd.f32 %v4391, %v4487
    %v4489 = vpop.f32.mrb[0].mxu0
    %4490 = vmatprep.mubr.bf16.mxu0 %v2865
    %4491 = vmatmul.mubr.bf16.gmra.mrb[0].mxu0 %v2864
    %v4492 = vpop.f32.mrb[0].mxu0
    %v4493 = vadd.f32 %v4396, %v4492
    %v4494 = vpop.f32.mrb[0].mxu0
    %v4495 = vpop.f32.mrb[0].mxu0
    %v4496 = vadd.f32 %v4399, %v4495
    %v4497 = vpop.f32.mrb[0].mxu0
    %4498 = vmatprep.mubr.bf16.mxu0 %v2881
    %4499 = vmatmul.mubr.bf16.gmra.mrb[0].mxu0 %v2880
    %v4500 = vpop.f32.mrb[0].mxu0
    %v4501 = vadd.f32 %v4404, %v4500
    %v4502 = vpop.f32.mrb[0].mxu0
    %v4503 = vpop.f32.mrb[0].mxu0
    %v4504 = vadd.f32 %v4407, %v4503
    %v4505 = vpop.f32.mrb[0].mxu0
    %4506 = vmatprep.mubr.bf16.mxu0 %v2897
    %4507 = vmatmul.mubr.bf16.gmra.mrb[0].mxu0 %v2896
    %v4508 = vpop.f32.mrb[0].mxu0
    %v4509 = vadd.f32 %v4412, %v4508
    %v4510 = vpop.f32.mrb[0].mxu0
    %v4511 = vpop.f32.mrb[0].mxu0
    %v4512 = vadd.f32 %v4415, %v4511
    %v4513 = vpop.f32.mrb[0].mxu0
    %4514 = vdwg.mxu0
    %4515 = vmatprep.subr.bf16.mxu0 0
    %4516 = vmatpush1.bf16.msra.mxu0 %v3773
    %4517 = vmatprep.subr.bf16.mxu0 0
    %4518 = vmatpush1.bf16.msra.mxu0 %v3774
    %4519 = vmatprep.subr.bf16.mxu0 0
    %4520 = vmatpush1.bf16.msra.mxu0 %v3775
    %4521 = vmatprep.subr.bf16.mxu0 0
    %4522 = vmatpush1.bf16.msra.mxu0 %v3776
    %4523 = vmatprep.subr.bf16.mxu0 0
    %4524 = vmatpush1.bf16.msra.mxu0 %v3777
    %4525 = vmatprep.subr.bf16.mxu0 0
    %4526 = vmatpush1.bf16.msra.mxu0 %v3778
    %4527 = vmatprep.subr.bf16.mxu0 0
    %4528 = vmatpush1.bf16.msra.mxu0 %v3779
    %4529 = vmatprep.subr.bf16.mxu0 0
    %4530 = vmatpush1.bf16.msra.mxu0 %v3780
    %4531 = vmatprep.subr.bf16.mxu0 0
    %4532 = vmatpush1.bf16.msra.mxu0 %v3781
    %4533 = vmatprep.subr.bf16.mxu0 0
    %4534 = vmatpush1.bf16.msra.mxu0 %v3782
    %4535 = vmatprep.subr.bf16.mxu0 0
    %4536 = vmatpush1.bf16.msra.mxu0 %v3783
    %4537 = vmatprep.subr.bf16.mxu0 0
    %4538 = vmatpush1.bf16.msra.mxu0 %v3784
    %4539 = vmatprep.subr.bf16.mxu0 0
    %4540 = vmatpush1.bf16.msra.mxu0 %v3785
    %4541 = vmatprep.subr.bf16.mxu0 0
    %4542 = vmatpush1.bf16.msra.mxu0 %v3786
    %4543 = vmatprep.subr.bf16.mxu0 0
    %4544 = vmatpush1.bf16.msra.mxu0 %v3787
    %4545 = vmatprep.subr.bf16.mxu0 0
    %4546 = vmatpush1.bf16.msra.mxu0 %v3788
    %4547 = vmatprep.mubr.bf16.mxu0 %v2787
    %4548 = vmatmul.mubr.bf16.gmra.mrb[0].mxu0 %v2786
    %v4549 = vpop.f32.mrb[0].mxu0
    %v4550 = vadd.f32 %v4453, %v4549
    %v4551 = vpop.f32.mrb[0].mxu0
    %v4552 = vpop.f32.mrb[0].mxu0
    %v4553 = vadd.f32 %v4456, %v4552
    %v4554 = vpop.f32.mrb[0].mxu0
    %4555 = vmatprep.mubr.bf16.mxu0 %v2803
    %4556 = vmatmul.mubr.bf16.gmra.mrb[0].mxu0 %v2802
    %v4557 = vpop.f32.mrb[0].mxu0
    %v4558 = vadd.f32 %v4461, %v4557
    %v4559 = vpop.f32.mrb[0].mxu0
    %v4560 = vpop.f32.mrb[0].mxu0
    %v4561 = vadd.f32 %v4464, %v4560
    %v4562 = vpop.f32.mrb[0].mxu0
    %4563 = vmatprep.mubr.bf16.mxu0 %v2819
    %4564 = vmatmul.mubr.bf16.gmra.mrb[0].mxu0 %v2818
    %v4565 = vpop.f32.mrb[0].mxu0
    %v4566 = vadd.f32 %v4469, %v4565
    %v4567 = vpop.f32.mrb[0].mxu0
    %v4568 = vpop.f32.mrb[0].mxu0
    %v4569 = vadd.f32 %v4472, %v4568
    %v4570 = vpop.f32.mrb[0].mxu0
    %4571 = vmatprep.mubr.bf16.mxu0 %v2835
    %4572 = vmatmul.mubr.bf16.gmra.mrb[0].mxu0 %v2834
    %v4573 = vpop.f32.mrb[0].mxu0
    %v4574 = vadd.f32 %v4477, %v4573
    %v4575 = vpop.f32.mrb[0].mxu0
    %v4576 = vpop.f32.mrb[0].mxu0
    %v4577 = vadd.f32 %v4480, %v4576
    %v4578 = vpop.f32.mrb[0].mxu0
    %4579 = vmatprep.mubr.bf16.mxu0 %v2851
    %4580 = vmatmul.mubr.bf16.gmra.mrb[0].mxu0 %v2850
    %v4581 = vpop.f32.mrb[0].mxu0
    %v4582 = vadd.f32 %v4485, %v4581
    %v4583 = vpop.f32.mrb[0].mxu0
    %v4584 = vpop.f32.mrb[0].mxu0
    %v4585 = vadd.f32 %v4488, %v4584
    %v4586 = vpop.f32.mrb[0].mxu0
    %4587 = vmatprep.mubr.bf16.mxu0 %v2867
    %4588 = vmatmul.mubr.bf16.gmra.mrb[0].mxu0 %v2866
    %v4589 = vpop.f32.mrb[0].mxu0
    %v4590 = vadd.f32 %v4493, %v4589
    %v4591 = vpop.f32.mrb[0].mxu0
    %v4592 = vpop.f32.mrb[0].mxu0
    %v4593 = vadd.f32 %v4496, %v4592
    %v4594 = vpop.f32.mrb[0].mxu0
    %4595 = vmatprep.mubr.bf16.mxu0 %v2883
    %4596 = vmatmul.mubr.bf16.gmra.mrb[0].mxu0 %v2882
    %v4597 = vpop.f32.mrb[0].mxu0
    %v4598 = vadd.f32 %v4501, %v4597
    %v4599 = vpop.f32.mrb[0].mxu0
    %v4600 = vpop.f32.mrb[0].mxu0
    %v4601 = vadd.f32 %v4504, %v4600
    %v4602 = vpop.f32.mrb[0].mxu0
    %4603 = vmatprep.mubr.bf16.mxu0 %v2899
    %4604 = vmatmul.mubr.bf16.gmra.mrb[0].mxu0 %v2898
    %v4605 = vpop.f32.mrb[0].mxu0
    %v4606 = vadd.f32 %v4509, %v4605
    %v4607 = vpop.f32.mrb[0].mxu0
    %v4608 = vpop.f32.mrb[0].mxu0
    %v4609 = vadd.f32 %v4512, %v4608
    %v4610 = vpop.f32.mrb[0].mxu0
    %4611 = vdwg.mxu0
    %4612 = vmatprep.subr.bf16.mxu0 0
    %4613 = vmatpush1.bf16.msra.mxu0 %v3789
    %4614 = vmatprep.subr.bf16.mxu0 0
    %4615 = vmatpush1.bf16.msra.mxu0 %v3790
    %4616 = vmatprep.subr.bf16.mxu0 0
    %4617 = vmatpush1.bf16.msra.mxu0 %v3791
    %4618 = vmatprep.subr.bf16.mxu0 0
    %4619 = vmatpush1.bf16.msra.mxu0 %v3792
    %4620 = vmatprep.subr.bf16.mxu0 0
    %4621 = vmatpush1.bf16.msra.mxu0 %v3793
    %4622 = vmatprep.subr.bf16.mxu0 0
    %4623 = vmatpush1.bf16.msra.mxu0 %v3794
    %4624 = vmatprep.subr.bf16.mxu0 0
    %4625 = vmatpush1.bf16.msra.mxu0 %v3795
    %4626 = vmatprep.subr.bf16.mxu0 0
    %4627 = vmatpush1.bf16.msra.mxu0 %v3796
    %4628 = vmatprep.subr.bf16.mxu0 0
    %4629 = vmatpush1.bf16.msra.mxu0 %v3797
    %4630 = vmatprep.subr.bf16.mxu0 0
    %4631 = vmatpush1.bf16.msra.mxu0 %v3798
    %4632 = vmatprep.subr.bf16.mxu0 0
    %4633 = vmatpush1.bf16.msra.mxu0 %v3799
    %4634 = vmatprep.subr.bf16.mxu0 0
    %4635 = vmatpush1.bf16.msra.mxu0 %v3800
    %4636 = vmatprep.subr.bf16.mxu0 0
    %4637 = vmatpush1.bf16.msra.mxu0 %v3801
    %4638 = vmatprep.subr.bf16.mxu0 0
    %4639 = vmatpush1.bf16.msra.mxu0 %v3802
    %4640 = vmatprep.subr.bf16.mxu0 0
    %4641 = vmatpush1.bf16.msra.mxu0 %v3803
    %4642 = vmatprep.subr.bf16.mxu0 0
    %4643 = vmatpush1.bf16.msra.mxu0 %v3804
    %4644 = vmatprep.mubr.bf16.mxu0 %v2789
    %4645 = vmatmul.mubr.bf16.gmra.mrb[0].mxu0 %v2788
    %v4646 = vpop.f32.mrb[0].mxu0
    %v4647 = vadd.f32 %v4550, %v4646
    %v4648 = vpop.f32.mrb[0].mxu0
    %v4649 = vpop.f32.mrb[0].mxu0
    %v4650 = vadd.f32 %v4553, %v4649
    %v4651 = vpop.f32.mrb[0].mxu0
    %4652 = vmatprep.mubr.bf16.mxu0 %v2805
    %4653 = vmatmul.mubr.bf16.gmra.mrb[0].mxu0 %v2804
    %v4654 = vpop.f32.mrb[0].mxu0
    %v4655 = vadd.f32 %v4558, %v4654
    %v4656 = vpop.f32.mrb[0].mxu0
    %v4657 = vpop.f32.mrb[0].mxu0
    %v4658 = vadd.f32 %v4561, %v4657
    %v4659 = vpop.f32.mrb[0].mxu0
    %4660 = vmatprep.mubr.bf16.mxu0 %v2821
    %4661 = vmatmul.mubr.bf16.gmra.mrb[0].mxu0 %v2820
    %v4662 = vpop.f32.mrb[0].mxu0
    %v4663 = vadd.f32 %v4566, %v4662
    %v4664 = vpop.f32.mrb[0].mxu0
    %v4665 = vpop.f32.mrb[0].mxu0
    %v4666 = vadd.f32 %v4569, %v4665
    %v4667 = vpop.f32.mrb[0].mxu0
    %4668 = vmatprep.mubr.bf16.mxu0 %v2837
    %4669 = vmatmul.mubr.bf16.gmra.mrb[0].mxu0 %v2836
    %v4670 = vpop.f32.mrb[0].mxu0
    %v4671 = vadd.f32 %v4574, %v4670
    %v4672 = vpop.f32.mrb[0].mxu0
    %v4673 = vpop.f32.mrb[0].mxu0
    %v4674 = vadd.f32 %v4577, %v4673
    %v4675 = vpop.f32.mrb[0].mxu0
    %4676 = vmatprep.mubr.bf16.mxu0 %v2853
    %4677 = vmatmul.mubr.bf16.gmra.mrb[0].mxu0 %v2852
    %v4678 = vpop.f32.mrb[0].mxu0
    %v4679 = vadd.f32 %v4582, %v4678
    %v4680 = vpop.f32.mrb[0].mxu0
    %v4681 = vpop.f32.mrb[0].mxu0
    %v4682 = vadd.f32 %v4585, %v4681
    %v4683 = vpop.f32.mrb[0].mxu0
    %4684 = vmatprep.mubr.bf16.mxu0 %v2869
    %4685 = vmatmul.mubr.bf16.gmra.mrb[0].mxu0 %v2868
    %v4686 = vpop.f32.mrb[0].mxu0
    %v4687 = vadd.f32 %v4590, %v4686
    %v4688 = vpop.f32.mrb[0].mxu0
    %v4689 = vpop.f32.mrb[0].mxu0
    %v4690 = vadd.f32 %v4593, %v4689
    %v4691 = vpop.f32.mrb[0].mxu0
    %4692 = vmatprep.mubr.bf16.mxu0 %v2885
    %4693 = vmatmul.mubr.bf16.gmra.mrb[0].mxu0 %v2884
    %v4694 = vpop.f32.mrb[0].mxu0
    %v4695 = vadd.f32 %v4598, %v4694
    %v4696 = vpop.f32.mrb[0].mxu0
    %v4697 = vpop.f32.mrb[0].mxu0
    %v4698 = vadd.f32 %v4601, %v4697
    %v4699 = vpop.f32.mrb[0].mxu0
    %4700 = vmatprep.mubr.bf16.mxu0 %v2901
    %4701 = vmatmul.mubr.bf16.gmra.mrb[0].mxu0 %v2900
    %v4702 = vpop.f32.mrb[0].mxu0
    %v4703 = vadd.f32 %v4606, %v4702
    %v4704 = vpop.f32.mrb[0].mxu0
    %v4705 = vpop.f32.mrb[0].mxu0
    %v4706 = vadd.f32 %v4609, %v4705
    %v4707 = vpop.f32.mrb[0].mxu0
    %4708 = vdwg.mxu0
    %v4709 = vadd.f32 %v738, %v4647
    %v4710 = vadd.f32 %v739, %v4650
    %v4711 = vadd.f32 %v740, %v4655
    %v4712 = vadd.f32 %v741, %v4658
    %v4713 = vadd.f32 %v742, %v4663
    %v4714 = vadd.f32 %v743, %v4666
    %v4715 = vadd.f32 %v744, %v4671
    %v4716 = vadd.f32 %v745, %v4674
    %v4717 = vadd.f32 %v746, %v4679
    %v4718 = vadd.f32 %v747, %v4682
    %v4719 = vadd.f32 %v748, %v4687
    %v4720 = vadd.f32 %v749, %v4690
    %v4721 = vadd.f32 %v750, %v4695
    %v4722 = vadd.f32 %v751, %v4698
    %v4723 = vadd.f32 %v752, %v4703
    %v4724 = vadd.f32 %v753, %v4706
    %v4725 = vld [vmem:[%s11] sm:$0x1]
    %v4726 = vld [vmem:[%s12] sm:$0x1]
    %4727 = vadd.xlane.f32.xlu0 %v4709
    %v4728 = vpop.xlane.xlu0 %4727
    %4729 = vadd.xlane.f32.xlu0 %v4710
    %v4730 = vpop.xlane.xlu0 %4729
    %4731 = vadd.xlane.f32.xlu0 %v4711
    %v4732 = vpop.xlane.xlu0 %4731
    %4733 = vadd.xlane.f32.xlu0 %v4712
    %v4734 = vpop.xlane.xlu0 %4733
    %4735 = vadd.xlane.f32.xlu0 %v4713
    %v4736 = vpop.xlane.xlu0 %4735
    %4737 = vadd.xlane.f32.xlu0 %v4714
    %v4738 = vpop.xlane.xlu0 %4737
    %4739 = vadd.xlane.f32.xlu0 %v4715
    %v4740 = vpop.xlane.xlu0 %4739
    %4741 = vadd.xlane.f32.xlu0 %v4716
    %v4742 = vpop.xlane.xlu0 %4741
    %4743 = vadd.xlane.f32.xlu0 %v4717
    %v4744 = vpop.xlane.xlu0 %4743
    %4745 = vadd.xlane.f32.xlu0 %v4718
    %v4746 = vpop.xlane.xlu0 %4745
    %4747 = vadd.xlane.f32.xlu0 %v4719
    %v4748 = vpop.xlane.xlu0 %4747
    %4749 = vadd.xlane.f32.xlu0 %v4720
    %v4750 = vpop.xlane.xlu0 %4749
    %4751 = vadd.xlane.f32.xlu0 %v4721
    %v4752 = vpop.xlane.xlu0 %4751
    %4753 = vadd.xlane.f32.xlu0 %v4722
    %v4754 = vpop.xlane.xlu0 %4753
    %4755 = vadd.xlane.f32.xlu0 %v4723
    %v4756 = vpop.xlane.xlu0 %4755
    %4757 = vadd.xlane.f32.xlu0 %v4724
    %v4758 = vpop.xlane.xlu0 %4757
    %v4759 = vmul.f32 %v4728, %v565
    %v4760 = vmul.f32 %v4730, %v565
    %v4761 = vmul.f32 %v4732, %v565
    %v4762 = vmul.f32 %v4734, %v565
    %v4763 = vmul.f32 %v4736, %v565
    %v4764 = vmul.f32 %v4738, %v565
    %v4765 = vmul.f32 %v4740, %v565
    %v4766 = vmul.f32 %v4742, %v565
    %v4767 = vmul.f32 %v4744, %v565
    %v4768 = vmul.f32 %v4746, %v565
    %v4769 = vmul.f32 %v4748, %v565
    %v4770 = vmul.f32 %v4750, %v565
    %v4771 = vmul.f32 %v4752, %v565
    %v4772 = vmul.f32 %v4754, %v565
    %v4773 = vmul.f32 %v4756, %v565
    %v4774 = vmul.f32 %v4758, %v565
    %v4775 = vsub.f32 %v4709, %v4759
    %v4776 = vsub.f32 %v4710, %v4760
    %v4777 = vsub.f32 %v4711, %v4761
    %v4778 = vsub.f32 %v4712, %v4762
    %v4779 = vsub.f32 %v4713, %v4763
    %v4780 = vsub.f32 %v4714, %v4764
    %v4781 = vsub.f32 %v4715, %v4765
    %v4782 = vsub.f32 %v4716, %v4766
    %v4783 = vsub.f32 %v4717, %v4767
    %v4784 = vsub.f32 %v4718, %v4768
    %v4785 = vsub.f32 %v4719, %v4769
    %v4786 = vsub.f32 %v4720, %v4770
    %v4787 = vsub.f32 %v4721, %v4771
    %v4788 = vsub.f32 %v4722, %v4772
    %v4789 = vsub.f32 %v4723, %v4773
    %v4790 = vsub.f32 %v4724, %v4774
    %v4791 = vmul.f32 %v4775, %v4775
    %v4792 = vmul.f32 %v4776, %v4776
    %v4793 = vmul.f32 %v4777, %v4777
    %v4794 = vmul.f32 %v4778, %v4778
    %v4795 = vmul.f32 %v4779, %v4779
    %v4796 = vmul.f32 %v4780, %v4780
    %v4797 = vmul.f32 %v4781, %v4781
    %v4798 = vmul.f32 %v4782, %v4782
    %v4799 = vmul.f32 %v4783, %v4783
    %v4800 = vmul.f32 %v4784, %v4784
    %v4801 = vmul.f32 %v4785, %v4785
    %v4802 = vmul.f32 %v4786, %v4786
    %v4803 = vmul.f32 %v4787, %v4787
    %v4804 = vmul.f32 %v4788, %v4788
    %v4805 = vmul.f32 %v4789, %v4789
    %v4806 = vmul.f32 %v4790, %v4790
    %4807 = vadd.xlane.f32.xlu0 %v4791
    %v4808 = vpop.xlane.xlu0 %4807
    %4809 = vadd.xlane.f32.xlu0 %v4792
    %v4810 = vpop.xlane.xlu0 %4809
    %4811 = vadd.xlane.f32.xlu0 %v4793
    %v4812 = vpop.xlane.xlu0 %4811
    %4813 = vadd.xlane.f32.xlu0 %v4794
    %v4814 = vpop.xlane.xlu0 %4813
    %4815 = vadd.xlane.f32.xlu0 %v4795
    %v4816 = vpop.xlane.xlu0 %4815
    %4817 = vadd.xlane.f32.xlu0 %v4796
    %v4818 = vpop.xlane.xlu0 %4817
    %4819 = vadd.xlane.f32.xlu0 %v4797
    %v4820 = vpop.xlane.xlu0 %4819
    %4821 = vadd.xlane.f32.xlu0 %v4798
    %v4822 = vpop.xlane.xlu0 %4821
    %4823 = vadd.xlane.f32.xlu0 %v4799
    %v4824 = vpop.xlane.xlu0 %4823
    %4825 = vadd.xlane.f32.xlu0 %v4800
    %v4826 = vpop.xlane.xlu0 %4825
    %4827 = vadd.xlane.f32.xlu0 %v4801
    %v4828 = vpop.xlane.xlu0 %4827
    %4829 = vadd.xlane.f32.xlu0 %v4802
    %v4830 = vpop.xlane.xlu0 %4829
    %4831 = vadd.xlane.f32.xlu0 %v4803
    %v4832 = vpop.xlane.xlu0 %4831
    %4833 = vadd.xlane.f32.xlu0 %v4804
    %v4834 = vpop.xlane.xlu0 %4833
    %4835 = vadd.xlane.f32.xlu0 %v4805
    %v4836 = vpop.xlane.xlu0 %4835
    %4837 = vadd.xlane.f32.xlu0 %v4806
    %v4838 = vpop.xlane.xlu0 %4837
    %v4839 = vmul.f32 %v4808, %v565
    %v4840 = vmul.f32 %v4810, %v565
    %v4841 = vmul.f32 %v4812, %v565
    %v4842 = vmul.f32 %v4814, %v565
    %v4843 = vmul.f32 %v4816, %v565
    %v4844 = vmul.f32 %v4818, %v565
    %v4845 = vmul.f32 %v4820, %v565
    %v4846 = vmul.f32 %v4822, %v565
    %v4847 = vmul.f32 %v4824, %v565
    %v4848 = vmul.f32 %v4826, %v565
    %v4849 = vmul.f32 %v4828, %v565
    %v4850 = vmul.f32 %v4830, %v565
    %v4851 = vmul.f32 %v4832, %v565
    %v4852 = vmul.f32 %v4834, %v565
    %v4853 = vmul.f32 %v4836, %v565
    %v4854 = vmul.f32 %v4838, %v565
    %v4855 = vadd.f32 %v4839, 1e-05
    %v4856 = vadd.f32 %v4840, 1e-05
    %v4857 = vadd.f32 %v4841, 1e-05
    %v4858 = vadd.f32 %v4842, 1e-05
    %v4859 = vadd.f32 %v4843, 1e-05
    %v4860 = vadd.f32 %v4844, 1e-05
    %v4861 = vadd.f32 %v4845, 1e-05
    %v4862 = vadd.f32 %v4846, 1e-05
    %v4863 = vadd.f32 %v4847, 1e-05
    %v4864 = vadd.f32 %v4848, 1e-05
    %v4865 = vadd.f32 %v4849, 1e-05
    %v4866 = vadd.f32 %v4850, 1e-05
    %v4867 = vadd.f32 %v4851, 1e-05
    %v4868 = vadd.f32 %v4852, 1e-05
    %v4869 = vadd.f32 %v4853, 1e-05
    %v4870 = vadd.f32 %v4854, 1e-05
    %v4871 = vrsqrt.pop %v4855
    %v4872 = vrsqrt.pop %v4856
    %v4873 = vrsqrt.pop %v4857
    %v4874 = vrsqrt.pop %v4858
    %v4875 = vrsqrt.pop %v4859
    %v4876 = vrsqrt.pop %v4860
    %v4877 = vrsqrt.pop %v4861
    %v4878 = vrsqrt.pop %v4862
    %v4879 = vrsqrt.pop %v4863
    %v4880 = vrsqrt.pop %v4864
    %v4881 = vrsqrt.pop %v4865
    %v4882 = vrsqrt.pop %v4866
    %v4883 = vrsqrt.pop %v4867
    %v4884 = vrsqrt.pop %v4868
    %v4885 = vrsqrt.pop %v4869
    %v4886 = vrsqrt.pop %v4870
    %v4887 = vmul.f32 %v4775, %v4871
    %v4888 = vmul.f32 %v4776, %v4872
    %v4889 = vmul.f32 %v4777, %v4873
    %v4890 = vmul.f32 %v4778, %v4874
    %v4891 = vmul.f32 %v4779, %v4875
    %v4892 = vmul.f32 %v4780, %v4876
    %v4893 = vmul.f32 %v4781, %v4877
    %v4894 = vmul.f32 %v4782, %v4878
    %v4895 = vmul.f32 %v4783, %v4879
    %v4896 = vmul.f32 %v4784, %v4880
    %v4897 = vmul.f32 %v4785, %v4881
    %v4898 = vmul.f32 %v4786, %v4882
    %v4899 = vmul.f32 %v4787, %v4883
    %v4900 = vmul.f32 %v4788, %v4884
    %v4901 = vmul.f32 %v4789, %v4885
    %v4902 = vmul.f32 %v4790, %v4886
    %v4904 = vlaneseq
    %v4905 = vshrl.u32 %v4904, 7
    %v4906 = vsub.s32 0, %v4905
    %v4907 = vrot.slane %v4725, %v4906
    %v4909 = vmul.f32 %v4887, %v4907
    %v4910 = vmul.f32 %v4888, %v4907
    %v4911 = vmul.f32 %v4889, %v4907
    %v4912 = vmul.f32 %v4890, %v4907
    %v4913 = vmul.f32 %v4891, %v4907
    %v4914 = vmul.f32 %v4892, %v4907
    %v4915 = vmul.f32 %v4893, %v4907
    %v4916 = vmul.f32 %v4894, %v4907
    %v4917 = vmul.f32 %v4895, %v4907
    %v4918 = vmul.f32 %v4896, %v4907
    %v4919 = vmul.f32 %v4897, %v4907
    %v4920 = vmul.f32 %v4898, %v4907
    %v4921 = vmul.f32 %v4899, %v4907
    %v4922 = vmul.f32 %v4900, %v4907
    %v4923 = vmul.f32 %v4901, %v4907
    %v4924 = vmul.f32 %v4902, %v4907
    %v4926 = vlaneseq
    %v4927 = vshrl.u32 %v4926, 7
    %v4928 = vsub.s32 0, %v4927
    %v4929 = vrot.slane %v4726, %v4928
    %v4931 = vadd.f32 %v4909, %v4929
    %v4932 = vadd.f32 %v4910, %v4929
    %v4933 = vadd.f32 %v4911, %v4929
    %v4934 = vadd.f32 %v4912, %v4929
    %v4935 = vadd.f32 %v4913, %v4929
    %v4936 = vadd.f32 %v4914, %v4929
    %v4937 = vadd.f32 %v4915, %v4929
    %v4938 = vadd.f32 %v4916, %v4929
    %v4939 = vadd.f32 %v4917, %v4929
    %v4940 = vadd.f32 %v4918, %v4929
    %v4941 = vadd.f32 %v4919, %v4929
    %v4942 = vadd.f32 %v4920, %v4929
    %v4943 = vadd.f32 %v4921, %v4929
    %v4944 = vadd.f32 %v4922, %v4929
    %v4945 = vadd.f32 %v4923, %v4929
    %v4946 = vadd.f32 %v4924, %v4929
    %v4947 = vld [vmem:[#allocation8] sm:$0xff]
    %v4948 = vld [vmem:[#allocation8 + $0x8] sm:$0xff]
    %v4949 = vld [vmem:[#allocation8 + $0x10] sm:$0xff]
    %v4950 = vld [vmem:[#allocation8 + $0x18] sm:$0xff]
    %v4951 = vld [vmem:[#allocation8 + $0x20] sm:$0xff]
    %v4952 = vld [vmem:[#allocation8 + $0x28] sm:$0xff]
    %v4953 = vld [vmem:[#allocation8 + $0x30] sm:$0xff]
    %v4954 = vld [vmem:[#allocation8 + $0x38] sm:$0xff]
    %v4955 = vld [vmem:[#allocation8 + $0x40] sm:$0xff]
    %v4956 = vld [vmem:[#allocation8 + $0x48] sm:$0xff]
    %v4957 = vld [vmem:[#allocation8 + $0x50] sm:$0xff]
    %v4958 = vld [vmem:[#allocation8 + $0x58] sm:$0xff]
    %v4959 = vld [vmem:[#allocation8 + $0x60] sm:$0xff]
    %v4960 = vld [vmem:[#allocation8 + $0x68] sm:$0xff]
    %v4961 = vld [vmem:[#allocation8 + $0x70] sm:$0xff]
    %v4962 = vld [vmem:[#allocation8 + $0x78] sm:$0xff]
    %v4963 = vld [vmem:[%s14] sm:$0x1]
    %v4965 = vlaneseq
    %v4966 = vshrl.u32 %v4965, 7
    %v4967 = vsub.s32 0, %v4966
    %v4968 = vrot.slane %v4963, %v4967
    %4970 = vmatprep.subr.mxu0 0.0
    %4971 = vmatpush1.msra.mxu0 %v4947
    %4972 = vmatprep.subr.mxu0 0.0
    %4973 = vmatpush1.msra.mxu0 %v4948
    %4974 = vmatprep.subr.mxu0 0.0
    %4975 = vmatpush1.msra.mxu0 %v4949
    %4976 = vmatprep.subr.mxu0 0.0
    %4977 = vmatpush1.msra.mxu0 %v4950
    %4978 = vmatprep.subr.mxu0 0.0
    %4979 = vmatpush1.msra.mxu0 %v4951
    %4980 = vmatprep.subr.mxu0 0.0
    %4981 = vmatpush1.msra.mxu0 %v4952
    %4982 = vmatprep.subr.mxu0 0.0
    %4983 = vmatpush1.msra.mxu0 %v4953
    %4984 = vmatprep.subr.mxu0 0.0
    %4985 = vmatpush1.msra.mxu0 %v4954
    %4986 = vmatprep.subr.mxu0 0.0
    %4987 = vmatpush1.msra.mxu0 %v4955
    %4988 = vmatprep.subr.mxu0 0.0
    %4989 = vmatpush1.msra.mxu0 %v4956
    %4990 = vmatprep.subr.mxu0 0.0
    %4991 = vmatpush1.msra.mxu0 %v4957
    %4992 = vmatprep.subr.mxu0 0.0
    %4993 = vmatpush1.msra.mxu0 %v4958
    %4994 = vmatprep.subr.mxu0 0.0
    %4995 = vmatpush1.msra.mxu0 %v4959
    %4996 = vmatprep.subr.mxu0 0.0
    %4997 = vmatpush1.msra.mxu0 %v4960
    %4998 = vmatprep.subr.mxu0 0.0
    %4999 = vmatpush1.msra.mxu0 %v4961
    %5000 = vmatprep.subr.mxu0 0.0
    %5001 = vmatpush1.msra.mxu0 %v4962
    %5002 = vmatprep.subr.mxu0 0.0
    %5003 = vmatpush1.msra.mxu0 0.0
    %5004 = vmatprep.subr.mxu0 0.0
    %5005 = vmatpush1.msra.mxu0 0.0
    %5006 = vmatprep.subr.mxu0 0.0
    %5007 = vmatpush1.msra.mxu0 0.0
    %5008 = vmatprep.subr.mxu0 0.0
    %5009 = vmatpush1.msra.mxu0 0.0
    %5010 = vmatprep.subr.mxu0 0.0
    %5011 = vmatpush1.msra.mxu0 0.0
    %5012 = vmatprep.subr.mxu0 0.0
    %5013 = vmatpush1.msra.mxu0 0.0
    %5014 = vmatprep.subr.mxu0 0.0
    %5015 = vmatpush1.msra.mxu0 0.0
    %5016 = vmatprep.subr.mxu0 0.0
    %5017 = vmatpush1.msra.mxu0 0.0
    %5018 = vmatprep.subr.mxu0 0.0
    %5019 = vmatpush1.msra.mxu0 0.0
    %5020 = vmatprep.subr.mxu0 0.0
    %5021 = vmatpush1.msra.mxu0 0.0
    %5022 = vmatprep.subr.mxu0 0.0
    %5023 = vmatpush1.msra.mxu0 0.0
    %5024 = vmatprep.subr.mxu0 0.0
    %5025 = vmatpush1.msra.mxu0 0.0
    %5026 = vmatprep.subr.mxu0 0.0
    %5027 = vmatpush1.msra.mxu0 0.0
    %5028 = vmatprep.subr.mxu0 0.0
    %5029 = vmatpush1.msra.mxu0 0.0
    %5030 = vmatprep.subr.mxu0 0.0
    %5031 = vmatpush1.msra.mxu0 0.0
    %5032 = vmatprep.subr.mxu0 0.0
    %5033 = vmatpush1.msra.mxu0 0.0
    %5034 = vmatprep.mubr.f32.mxu0 0.0
    %5035 = vmatmul.mubr.f32.gmra.mrb[0].mxu0 %v4931
    %v5036 = vpop.f32.mrb[0].mxu0
    %v5037 = vadd.f32 %v4968, %v5036
    %v5038 = vpop.f32.mrb[0].mxu0
    %5039 = vmatprep.mubr.f32.mxu0 0.0
    %5040 = vmatmul.mubr.f32.gmra.mrb[0].mxu0 %v4932
    %v5041 = vpop.f32.mrb[0].mxu0
    %v5042 = vadd.f32 %v4968, %v5041
    %v5043 = vpop.f32.mrb[0].mxu0
    %5044 = vmatprep.mubr.f32.mxu0 0.0
    %5045 = vmatmul.mubr.f32.gmra.mrb[0].mxu0 %v4933
    %v5046 = vpop.f32.mrb[0].mxu0
    %v5047 = vadd.f32 %v4968, %v5046
    %v5048 = vpop.f32.mrb[0].mxu0
    %5049 = vmatprep.mubr.f32.mxu0 0.0
    %5050 = vmatmul.mubr.f32.gmra.mrb[0].mxu0 %v4934
    %v5051 = vpop.f32.mrb[0].mxu0
    %v5052 = vadd.f32 %v4968, %v5051
    %v5053 = vpop.f32.mrb[0].mxu0
    %5054 = vmatprep.mubr.f32.mxu0 0.0
    %5055 = vmatmul.mubr.f32.gmra.mrb[0].mxu0 %v4935
    %v5056 = vpop.f32.mrb[0].mxu0
    %v5057 = vadd.f32 %v4968, %v5056
    %v5058 = vpop.f32.mrb[0].mxu0
    %5059 = vmatprep.mubr.f32.mxu0 0.0
    %5060 = vmatmul.mubr.f32.gmra.mrb[0].mxu0 %v4936
    %v5061 = vpop.f32.mrb[0].mxu0
    %v5062 = vadd.f32 %v4968, %v5061
    %v5063 = vpop.f32.mrb[0].mxu0
    %5064 = vmatprep.mubr.f32.mxu0 0.0
    %5065 = vmatmul.mubr.f32.gmra.mrb[0].mxu0 %v4937
    %v5066 = vpop.f32.mrb[0].mxu0
    %v5067 = vadd.f32 %v4968, %v5066
    %v5068 = vpop.f32.mrb[0].mxu0
    %5069 = vmatprep.mubr.f32.mxu0 0.0
    %5070 = vmatmul.mubr.f32.gmra.mrb[0].mxu0 %v4938
    %v5071 = vpop.f32.mrb[0].mxu0
    %v5072 = vadd.f32 %v4968, %v5071
    %v5073 = vpop.f32.mrb[0].mxu0
    %5074 = vmatprep.mubr.f32.mxu0 0.0
    %5075 = vmatmul.mubr.f32.gmra.mrb[0].mxu0 %v4939
    %v5076 = vpop.f32.mrb[0].mxu0
    %v5077 = vadd.f32 %v4968, %v5076
    %v5078 = vpop.f32.mrb[0].mxu0
    %5079 = vmatprep.mubr.f32.mxu0 0.0
    %5080 = vmatmul.mubr.f32.gmra.mrb[0].mxu0 %v4940
    %v5081 = vpop.f32.mrb[0].mxu0
    %v5082 = vadd.f32 %v4968, %v5081
    %v5083 = vpop.f32.mrb[0].mxu0
    %5084 = vmatprep.mubr.f32.mxu0 0.0
    %5085 = vmatmul.mubr.f32.gmra.mrb[0].mxu0 %v4941
    %v5086 = vpop.f32.mrb[0].mxu0
    %v5087 = vadd.f32 %v4968, %v5086
    %v5088 = vpop.f32.mrb[0].mxu0
    %5089 = vmatprep.mubr.f32.mxu0 0.0
    %5090 = vmatmul.mubr.f32.gmra.mrb[0].mxu0 %v4942
    %v5091 = vpop.f32.mrb[0].mxu0
    %v5092 = vadd.f32 %v4968, %v5091
    %v5093 = vpop.f32.mrb[0].mxu0
    %5094 = vmatprep.mubr.f32.mxu0 0.0
    %5095 = vmatmul.mubr.f32.gmra.mrb[0].mxu0 %v4943
    %v5096 = vpop.f32.mrb[0].mxu0
    %v5097 = vadd.f32 %v4968, %v5096
    %v5098 = vpop.f32.mrb[0].mxu0
    %5099 = vmatprep.mubr.f32.mxu0 0.0
    %5100 = vmatmul.mubr.f32.gmra.mrb[0].mxu0 %v4944
    %v5101 = vpop.f32.mrb[0].mxu0
    %v5102 = vadd.f32 %v4968, %v5101
    %v5103 = vpop.f32.mrb[0].mxu0
    %5104 = vmatprep.mubr.f32.mxu0 0.0
    %5105 = vmatmul.mubr.f32.gmra.mrb[0].mxu0 %v4945
    %v5106 = vpop.f32.mrb[0].mxu0
    %v5107 = vadd.f32 %v4968, %v5106
    %v5108 = vpop.f32.mrb[0].mxu0
    %5109 = vmatprep.mubr.f32.mxu0 0.0
    %5110 = vmatmul.mubr.f32.gmra.mrb[0].mxu0 %v4946
    %v5111 = vpop.f32.mrb[0].mxu0
    %v5112 = vadd.f32 %v4968, %v5111
    %v5113 = vpop.f32.mrb[0].mxu0
    %5114 = vdwg.mxu0
    %v5115 = vmax.f32 %v5037, 0.0
    %v5116 = vmax.f32 %v5042, 0.0
    %v5117 = vmax.f32 %v5047, 0.0
    %v5118 = vmax.f32 %v5052, 0.0
    %v5119 = vmax.f32 %v5057, 0.0
    %v5120 = vmax.f32 %v5062, 0.0
    %v5121 = vmax.f32 %v5067, 0.0
    %v5122 = vmax.f32 %v5072, 0.0
    %v5123 = vmax.f32 %v5077, 0.0
    %v5124 = vmax.f32 %v5082, 0.0
    %v5125 = vmax.f32 %v5087, 0.0
    %v5126 = vmax.f32 %v5092, 0.0
    %v5127 = vmax.f32 %v5097, 0.0
    %v5128 = vmax.f32 %v5102, 0.0
    %v5129 = vmax.f32 %v5107, 0.0
    %v5130 = vmax.f32 %v5112, 0.0
    %v5131 = vld [vmem:[#allocation10] sm:$0xff]
    %v5132 = vld [vmem:[#allocation10 + $0x8] sm:$0xff]
    %v5133 = vld [vmem:[#allocation10 + $0x10] sm:$0xff]
    %v5134 = vld [vmem:[#allocation10 + $0x18] sm:$0xff]
    %v5135 = vld [vmem:[#allocation10 + $0x20] sm:$0xff]
    %v5136 = vld [vmem:[#allocation10 + $0x28] sm:$0xff]
    %v5137 = vld [vmem:[#allocation10 + $0x30] sm:$0xff]
    %v5138 = vld [vmem:[#allocation10 + $0x38] sm:$0xff]
    %v5139 = vld [vmem:[#allocation10 + $0x40] sm:$0xff]
    %v5140 = vld [vmem:[#allocation10 + $0x48] sm:$0xff]
    %v5141 = vld [vmem:[#allocation10 + $0x50] sm:$0xff]
    %v5142 = vld [vmem:[#allocation10 + $0x58] sm:$0xff]
    %v5143 = vld [vmem:[#allocation10 + $0x60] sm:$0xff]
    %v5144 = vld [vmem:[#allocation10 + $0x68] sm:$0xff]
    %v5145 = vld [vmem:[#allocation10 + $0x70] sm:$0xff]
    %v5146 = vld [vmem:[#allocation10 + $0x78] sm:$0xff]
    %v5147 = vld [vmem:[%s16] sm:$0x1]
    %v5149 = vlaneseq
    %v5150 = vshrl.u32 %v5149, 7
    %v5151 = vsub.s32 0, %v5150
    %v5152 = vrot.slane %v5147, %v5151
    %5154 = vmatprep.subr.mxu0 0.0
    %5155 = vmatpush1.msra.mxu0 %v5131
    %5156 = vmatprep.subr.mxu0 0.0
    %5157 = vmatpush1.msra.mxu0 %v5132
    %5158 = vmatprep.subr.mxu0 0.0
    %5159 = vmatpush1.msra.mxu0 %v5133
    %5160 = vmatprep.subr.mxu0 0.0
    %5161 = vmatpush1.msra.mxu0 %v5134
    %5162 = vmatprep.subr.mxu0 0.0
    %5163 = vmatpush1.msra.mxu0 %v5135
    %5164 = vmatprep.subr.mxu0 0.0
    %5165 = vmatpush1.msra.mxu0 %v5136
    %5166 = vmatprep.subr.mxu0 0.0
    %5167 = vmatpush1.msra.mxu0 %v5137
    %5168 = vmatprep.subr.mxu0 0.0
    %5169 = vmatpush1.msra.mxu0 %v5138
    %5170 = vmatprep.subr.mxu0 0.0
    %5171 = vmatpush1.msra.mxu0 %v5139
    %5172 = vmatprep.subr.mxu0 0.0
    %5173 = vmatpush1.msra.mxu0 %v5140
    %5174 = vmatprep.subr.mxu0 0.0
    %5175 = vmatpush1.msra.mxu0 %v5141
    %5176 = vmatprep.subr.mxu0 0.0
    %5177 = vmatpush1.msra.mxu0 %v5142
    %5178 = vmatprep.subr.mxu0 0.0
    %5179 = vmatpush1.msra.mxu0 %v5143
    %5180 = vmatprep.subr.mxu0 0.0
    %5181 = vmatpush1.msra.mxu0 %v5144
    %5182 = vmatprep.subr.mxu0 0.0
    %5183 = vmatpush1.msra.mxu0 %v5145
    %5184 = vmatprep.subr.mxu0 0.0
    %5185 = vmatpush1.msra.mxu0 %v5146
    %5186 = vmatprep.subr.mxu0 0.0
    %5187 = vmatpush1.msra.mxu0 0.0
    %5188 = vmatprep.subr.mxu0 0.0
    %5189 = vmatpush1.msra.mxu0 0.0
    %5190 = vmatprep.subr.mxu0 0.0
    %5191 = vmatpush1.msra.mxu0 0.0
    %5192 = vmatprep.subr.mxu0 0.0
    %5193 = vmatpush1.msra.mxu0 0.0
    %5194 = vmatprep.subr.mxu0 0.0
    %5195 = vmatpush1.msra.mxu0 0.0
    %5196 = vmatprep.subr.mxu0 0.0
    %5197 = vmatpush1.msra.mxu0 0.0
    %5198 = vmatprep.subr.mxu0 0.0
    %5199 = vmatpush1.msra.mxu0 0.0
    %5200 = vmatprep.subr.mxu0 0.0
    %5201 = vmatpush1.msra.mxu0 0.0
    %5202 = vmatprep.subr.mxu0 0.0
    %5203 = vmatpush1.msra.mxu0 0.0
    %5204 = vmatprep.subr.mxu0 0.0
    %5205 = vmatpush1.msra.mxu0 0.0
    %5206 = vmatprep.subr.mxu0 0.0
    %5207 = vmatpush1.msra.mxu0 0.0
    %5208 = vmatprep.subr.mxu0 0.0
    %5209 = vmatpush1.msra.mxu0 0.0
    %5210 = vmatprep.subr.mxu0 0.0
    %5211 = vmatpush1.msra.mxu0 0.0
    %5212 = vmatprep.subr.mxu0 0.0
    %5213 = vmatpush1.msra.mxu0 0.0
    %5214 = vmatprep.subr.mxu0 0.0
    %5215 = vmatpush1.msra.mxu0 0.0
    %5216 = vmatprep.subr.mxu0 0.0
    %5217 = vmatpush1.msra.mxu0 0.0
    %5218 = vmatprep.mubr.f32.mxu0 0.0
    %5219 = vmatmul.mubr.f32.gmra.mrb[0].mxu0 %v5115
    %v5220 = vpop.f32.mrb[0].mxu0
    %v5221 = vadd.f32 %v5152, %v5220
    %v5222 = vpop.f32.mrb[0].mxu0
    %5223 = vmatprep.mubr.f32.mxu0 0.0
    %5224 = vmatmul.mubr.f32.gmra.mrb[0].mxu0 %v5116
    %v5225 = vpop.f32.mrb[0].mxu0
    %v5226 = vadd.f32 %v5152, %v5225
    %v5227 = vpop.f32.mrb[0].mxu0
    %5228 = vmatprep.mubr.f32.mxu0 0.0
    %5229 = vmatmul.mubr.f32.gmra.mrb[0].mxu0 %v5117
    %v5230 = vpop.f32.mrb[0].mxu0
    %v5231 = vadd.f32 %v5152, %v5230
    %v5232 = vpop.f32.mrb[0].mxu0
    %5233 = vmatprep.mubr.f32.mxu0 0.0
    %5234 = vmatmul.mubr.f32.gmra.mrb[0].mxu0 %v5118
    %v5235 = vpop.f32.mrb[0].mxu0
    %v5236 = vadd.f32 %v5152, %v5235
    %v5237 = vpop.f32.mrb[0].mxu0
    %5238 = vmatprep.mubr.f32.mxu0 0.0
    %5239 = vmatmul.mubr.f32.gmra.mrb[0].mxu0 %v5119
    %v5240 = vpop.f32.mrb[0].mxu0
    %v5241 = vadd.f32 %v5152, %v5240
    %v5242 = vpop.f32.mrb[0].mxu0
    %5243 = vmatprep.mubr.f32.mxu0 0.0
    %5244 = vmatmul.mubr.f32.gmra.mrb[0].mxu0 %v5120
    %v5245 = vpop.f32.mrb[0].mxu0
    %v5246 = vadd.f32 %v5152, %v5245
    %v5247 = vpop.f32.mrb[0].mxu0
    %5248 = vmatprep.mubr.f32.mxu0 0.0
    %5249 = vmatmul.mubr.f32.gmra.mrb[0].mxu0 %v5121
    %v5250 = vpop.f32.mrb[0].mxu0
    %v5251 = vadd.f32 %v5152, %v5250
    %v5252 = vpop.f32.mrb[0].mxu0
    %5253 = vmatprep.mubr.f32.mxu0 0.0
    %5254 = vmatmul.mubr.f32.gmra.mrb[0].mxu0 %v5122
    %v5255 = vpop.f32.mrb[0].mxu0
    %v5256 = vadd.f32 %v5152, %v5255
    %v5257 = vpop.f32.mrb[0].mxu0
    %5258 = vmatprep.mubr.f32.mxu0 0.0
    %5259 = vmatmul.mubr.f32.gmra.mrb[0].mxu0 %v5123
    %v5260 = vpop.f32.mrb[0].mxu0
    %v5261 = vadd.f32 %v5152, %v5260
    %v5262 = vpop.f32.mrb[0].mxu0
    %5263 = vmatprep.mubr.f32.mxu0 0.0
    %5264 = vmatmul.mubr.f32.gmra.mrb[0].mxu0 %v5124
    %v5265 = vpop.f32.mrb[0].mxu0
    %v5266 = vadd.f32 %v5152, %v5265
    %v5267 = vpop.f32.mrb[0].mxu0
    %5268 = vmatprep.mubr.f32.mxu0 0.0
    %5269 = vmatmul.mubr.f32.gmra.mrb[0].mxu0 %v5125
    %v5270 = vpop.f32.mrb[0].mxu0
    %v5271 = vadd.f32 %v5152, %v5270
    %v5272 = vpop.f32.mrb[0].mxu0
    %5273 = vmatprep.mubr.f32.mxu0 0.0
    %5274 = vmatmul.mubr.f32.gmra.mrb[0].mxu0 %v5126
    %v5275 = vpop.f32.mrb[0].mxu0
    %v5276 = vadd.f32 %v5152, %v5275
    %v5277 = vpop.f32.mrb[0].mxu0
    %5278 = vmatprep.mubr.f32.mxu0 0.0
    %5279 = vmatmul.mubr.f32.gmra.mrb[0].mxu0 %v5127
    %v5280 = vpop.f32.mrb[0].mxu0
    %v5281 = vadd.f32 %v5152, %v5280
    %v5282 = vpop.f32.mrb[0].mxu0
    %5283 = vmatprep.mubr.f32.mxu0 0.0
    %5284 = vmatmul.mubr.f32.gmra.mrb[0].mxu0 %v5128
    %v5285 = vpop.f32.mrb[0].mxu0
    %v5286 = vadd.f32 %v5152, %v5285
    %v5287 = vpop.f32.mrb[0].mxu0
    %5288 = vmatprep.mubr.f32.mxu0 0.0
    %5289 = vmatmul.mubr.f32.gmra.mrb[0].mxu0 %v5129
    %v5290 = vpop.f32.mrb[0].mxu0
    %v5291 = vadd.f32 %v5152, %v5290
    %v5292 = vpop.f32.mrb[0].mxu0
    %5293 = vmatprep.mubr.f32.mxu0 0.0
    %5294 = vmatmul.mubr.f32.gmra.mrb[0].mxu0 %v5130
    %v5295 = vpop.f32.mrb[0].mxu0
    %v5296 = vadd.f32 %v5152, %v5295
    %v5297 = vpop.f32.mrb[0].mxu0
    %5298 = vdwg.mxu0
    %5299 = vst [vmem:[#allocation11] sm:$0xff] %v5221
    %5300 = vst [vmem:[#allocation11 + $0x8] sm:$0xff] %v5226
    %5301 = vst [vmem:[#allocation11 + $0x10] sm:$0xff] %v5231
    %5302 = vst [vmem:[#allocation11 + $0x18] sm:$0xff] %v5236
    %5303 = vst [vmem:[#allocation11 + $0x20] sm:$0xff] %v5241
    %5304 = vst [vmem:[#allocation11 + $0x28] sm:$0xff] %v5246
    %5305 = vst [vmem:[#allocation11 + $0x30] sm:$0xff] %v5251
    %5306 = vst [vmem:[#allocation11 + $0x38] sm:$0xff] %v5256
    %5307 = vst [vmem:[#allocation11 + $0x40] sm:$0xff] %v5261
    %5308 = vst [vmem:[#allocation11 + $0x48] sm:$0xff] %v5266
    %5309 = vst [vmem:[#allocation11 + $0x50] sm:$0xff] %v5271
    %5310 = vst [vmem:[#allocation11 + $0x58] sm:$0xff] %v5276
    %5311 = vst [vmem:[#allocation11 + $0x60] sm:$0xff] %v5281
    %5312 = vst [vmem:[#allocation11 + $0x68] sm:$0xff] %v5286
    %5313 = vst [vmem:[#allocation11 + $0x70] sm:$0xff] %v5291
    %5314 = vst [vmem:[#allocation11 + $0x78] sm:$0xff] %v5296
    // Predicated region
    $region90: #{tpu_custom_call.1} parent=1 // pred_check
      _
    $region91: #{tpu_custom_call.1} parent=1 // pred_check_branch
      %5316 = sbr.rel (0) target = $region93
    $region92: #{tpu_custom_call.1} parent=1 // pred_region
      %s5318 = ssub.s32 2048, 2048
      %5319 = vsyncadd [#allocation4], %s5318
      %s5320 = sshll.u32 [#allocation11], 4
      %s5321 = int_to_ptr.vmem [resolvable:$true] %s5320
      %5326 = dma.vmem_to_hbm [thread:$0]  %s5321, 2048, %s17, [#allocation4], 128, 128, 8
    $region93: #{tpu_custom_call.1} parent=1 // pred_fallthru
      _
    // Predicated region
    $region94: #{tpu_custom_call.1} parent=1 // pred_check
      _
    $region95: #{tpu_custom_call.1} parent=1 // pred_check_branch
      %5328 = sbr.rel (0) target = $region97
    $region96: #{tpu_custom_call.1} parent=1 // pred_region
      %5329 = dma.done [#allocation4], 2048
    $region97: #{tpu_custom_call.1} parent=1 // pred_fallthru
      _
    %5330 = vsyncpa [#allocation3], 1
    %5331 = vsyncpa [#allocation6], 1
    %5332 = vsyncpa [#allocation9], 1
    %5333 = vsyncpa [#allocation4], 1

</llo_original>
